<compile_context>
chip_gen: v7x
topology: tpu7x:2x2x1
jax: 0.10.0
libtpu: 0.0.40
codegen_flags: <defaults>
</compile_context>

<pallas_src>
import functools
import math

import jax
import jax.numpy as jnp
from jax.experimental import pallas as pl
from jax.experimental.pallas import tpu as pltpu


# ---------------------------------------------------------------------------
# Fused decoder kernel: all layers, both directions, whole sequence, one call.
# ---------------------------------------------------------------------------
def _decoder_kernel(x_ref, *refs, num_layers, num_directions, out_size, seq_len):
    out_ref = refs[-1]
    w_refs = refs[:-1]

    T = seq_len
    H = out_size
    D = num_directions
    G = D * 4 * H  # fused gate width (both directions)

    x = x_ref[...].astype(jnp.float32)          # (T, B, H_in), time-major
    B = x.shape[1]

    # Layer inputs are kept per-direction (cur_f / cur_b) so layers never do a
    # lane-offset concatenate; rows are time-major: row t*B + b <-> (t, b).
    cur_f = x.reshape(T * B, x.shape[-1])
    cur_b = None

    widx = 0
    for layer in range(num_layers):
        # ---- Hoisted input projection (both directions fused along N). -----
        if layer == 0 or D == 1:
            w_ih = w_refs[widx][...]                         # (in, G) bf16
            widx += 1
            gx = jnp.dot(cur_f.astype(jnp.bfloat16), w_ih,
                         preferred_element_type=jnp.float32)
        else:
            # K-split of W_ih: consumes fwd/bwd activations separately, so the
            # previous layer never concatenates its two directions.
            w_top = w_refs[widx][...]                        # (H, G) bf16
            w_bot = w_refs[widx + 1][...]                    # (H, G) bf16
            widx += 2
            gx = (jnp.dot(cur_f.astype(jnp.bfloat16), w_top,
                          preferred_element_type=jnp.float32)
                  + jnp.dot(cur_b.astype(jnp.bfloat16), w_bot,
                            preferred_element_type=jnp.float32))
        w_hh = w_refs[widx][...]                             # (D*H, G) bf16
        bias = w_refs[widx + 1][...]                         # (1, G) f32
        widx += 2
        gx = gx + bias                                       # (T*B, G) f32

        h_f = jnp.zeros((B, H), jnp.float32)
        c_f = jnp.zeros((B, H), jnp.float32)
        h_b = jnp.zeros((B, H), jnp.float32)
        c_b = jnp.zeros((B, H), jnp.float32)
        hs_f = [None] * T
        hs_b = [None] * T

        # ---- Single fused recurrence: fwd consumes s, bwd consumes T-1-s. --
        # Fully unrolled static loop (T is small & static); h/c live as SSA.
        for s in range(T):
            h_cat = jnp.concatenate([h_f, h_b], axis=1) if D == 2 else h_f
            hh = jnp.dot(h_cat.astype(jnp.bfloat16), w_hh,
                         preferred_element_type=jnp.float32)  # (B, G)

            # Forward direction: consumes timestep s.  PyTorch gate order
            # [i, f, g, o]; 4H = 128 lanes -> full-vreg sigmoid/tanh + slices.
            g_f = gx[s * B:(s + 1) * B, 0:4 * H] + hh[:, 0:4 * H]
            sig = jax.nn.sigmoid(g_f)
            th = jnp.tanh(g_f)
            c_f = sig[:, H:2 * H] * c_f + sig[:, 0:H] * th[:, 2 * H:3 * H]
            h_f = sig[:, 3 * H:4 * H] * jnp.tanh(c_f)
            hs_f[s] = h_f

            if D == 2:
                r = T - 1 - s   # backward direction: consumes timestep r
                g_b = gx[r * B:(r + 1) * B, 4 * H:8 * H] + hh[:, 4 * H:8 * H]
                sig = jax.nn.sigmoid(g_b)
                th = jnp.tanh(g_b)
                c_b = sig[:, H:2 * H] * c_b + sig[:, 0:H] * th[:, 2 * H:3 * H]
                h_b = sig[:, 3 * H:4 * H] * jnp.tanh(c_b)
                hs_b[r] = h_b

        out_f = jnp.stack(hs_f, axis=0)                      # (T, B, H)
        out_b = jnp.stack(hs_b, axis=0) if D == 2 else None  # (T, B, H)

        if layer + 1 < num_layers:
            # Next layer reads the directions separately (K-split matmul);
            # no lane-offset concatenate between layers.
            cur_f = out_f.reshape(T * B, H)
            cur_b = out_b.reshape(T * B, H) if D == 2 else None
        else:
            y = jnp.concatenate([out_f, out_b], axis=-1) if D == 2 else out_f
            # Single full-slab store of the last layer's output.
            out_ref[...] = y.astype(out_ref.dtype)


def decoder_forward_pallas(x_bth, fused_flat, *, num_layers, num_directions,
                           out_size):
    """Run the fused decoder.

    x_bth      : (B, T, hidden_size) float32, batch_first like PyTorch.
    fused_flat : flat list of kernel weight arrays (see DecoderPallas).
    returns (B, T, num_directions * output_size) float32.
    """
    B, T, H_in = x_bth.shape
    D, H = num_directions, out_size
    G = D * 4 * H

    # Time-major so each timestep's gx rows are contiguous (cheap row slices
    # inside the serial loop).  Cost is one small XLA transpose each way.
    x_tbh = jnp.transpose(x_bth, (1, 0, 2)).astype(jnp.float32)

    kernel = functools.partial(
        _decoder_kernel,
        num_layers=num_layers,
        num_directions=D,
        out_size=H,
        seq_len=T,
    )

    # Advisory cost estimate so XLA schedules surrounding ops sensibly.
    flops = 0
    in_size = H_in
    for _layer in range(num_layers):
        flops += 2 * (T * B) * in_size * G          # hoisted input projection
        flops += 2 * T * B * (D * H) * G            # recurrent matmuls
        in_size = D * H
    transcendentals = num_layers * D * T * B * 9 * H
    bytes_accessed = int(
        B * T * H_in * 4
        + sum(int(w.size) * w.dtype.itemsize for w in fused_flat)
        + T * B * D * H * 4
    )

    n_in = 1 + len(fused_flat)
    out_tbh = pl.pallas_call(
        kernel,
        out_shape=jax.ShapeDtypeStruct((T, B, D * H), jnp.float32),
        in_specs=[pl.BlockSpec(memory_space=pltpu.MemorySpace.VMEM)] * n_in,
        out_specs=pl.BlockSpec(memory_space=pltpu.MemorySpace.VMEM),
        cost_estimate=pl.CostEstimate(
            flops=int(flops),
            transcendentals=int(transcendentals),
            bytes_accessed=bytes_accessed,
        ),
    )(x_tbh, *fused_flat)

    return jnp.transpose(out_tbh, (1, 0, 2))


# ---------------------------------------------------------------------------
# Deterministic parameter init (mimics the module __init__).
# ---------------------------------------------------------------------------
def _orthogonal(key, shape, gain):
    """PyTorch-style orthogonal_ for a 2-D tensor."""
    rows, cols = shape
    flat_shape = (rows, cols) if rows >= cols else (cols, rows)
    a = jax.random.normal(key, flat_shape, dtype=jnp.float32)
    q, r = jnp.linalg.qr(a)
    q = q * jnp.sign(jnp.diagonal(r))[None, :]
    if rows < cols:
        q = q.T
    return gain * q[:rows, :cols]


def _uniform(key, shape, bound):
    return jax.random.uniform(key, shape, jnp.float32, -bound, bound)


class DecoderPallas:
    """JAX/Pallas equivalent of the PyTorch Decoder module (inference)."""

    def __init__(self, hidden_size, output_size, num_layers, bidirectional,
                 key=jax.random.PRNGKey(0)):
        self.hidden_size = hidden_size
        self.output_size = output_size
        self.num_layers = num_layers
        self.num_directions = 2 if bidirectional else 1

        H = output_size
        D = self.num_directions
        bound = 1.0 / math.sqrt(H)

        # Raw f32 params per (layer, direction): (w_ih_t (in,4H), w_hh_t (H,4H),
        # bias (1,4H) = b_ih + b_hh).  Used by the pure-JAX reference.
        self.params = []
        for layer in range(num_layers):
            in_size = hidden_size if layer == 0 else H * D
            layer_params = []
            for d in range(D):
                key, k1, k2, k3, k4 = jax.random.split(key, 5)
                if layer == 0 and d == 0:
                    # nn.init.orthogonal_(weight_ih_l0 / weight_hh_l0, sqrt(2))
                    w_ih = _orthogonal(k1, (4 * H, in_size), math.sqrt(2.0))
                    w_hh = _orthogonal(k2, (4 * H, H), math.sqrt(2.0))
                else:
                    w_ih = _uniform(k1, (4 * H, in_size), bound)
                    w_hh = _uniform(k2, (4 * H, H), bound)
                b_ih = _uniform(k3, (4 * H,), bound)
                b_hh = _uniform(k4, (4 * H,), bound)
                layer_params.append(
                    (w_ih.T, w_hh.T, (b_ih + b_hh).reshape(1, -1)))
            self.params.append(layer_params)

        # Fused kernel params: bf16 matmul operands, f32 bias.
        # Per layer: [W_ih (or W_ih_top, W_ih_bot K-split), W_hh_blockdiag, bias]
        self.fused_flat = []
        for layer in range(num_layers):
            lp = self.params[layer]
            w_ih_cat = jnp.concatenate([p[0] for p in lp], axis=1)  # (in, D*4H)
            if layer == 0 or D == 1:
                self.fused_flat.append(w_ih_cat.astype(jnp.bfloat16))
            else:
                self.fused_flat.append(w_ih_cat[:H, :].astype(jnp.bfloat16))
                self.fused_flat.append(w_ih_cat[H:, :].astype(jnp.bfloat16))
            if D == 1:
                w_hh_big = lp[0][1]                                 # (H, 4H)
            else:
                z = jnp.zeros((H, 4 * H), jnp.float32)
                w_hh_big = jnp.concatenate(
                    [jnp.concatenate([lp[0][1], z], axis=1),
                     jnp.concatenate([z, lp[1][1]], axis=1)],
                    axis=0)                                         # (2H, 8H)
            self.fused_flat.append(w_hh_big.astype(jnp.bfloat16))
            self.fused_flat.append(
                jnp.concatenate([p[2] for p in lp], axis=1))        # (1, D*4H)

    @functools.partial(jax.jit, static_argnums=0)
    def __call__(self, x):
        # x: (B, T, hidden_size), batch_first like PyTorch.
        return decoder_forward_pallas(
            x, self.fused_flat,
            num_layers=self.num_layers,
            num_directions=self.num_directions,
            out_size=self.output_size)


# ---------------------------------------------------------------------------
# Pure-JAX f32 reference (PyTorch LSTM semantics) for a sanity check.
# ---------------------------------------------------------------------------
def _ref_decoder(dec, x_bth):
    B, T, _ = x_bth.shape
    h_seq = jnp.transpose(x_bth, (1, 0, 2)).astype(jnp.float32)  # (T, B, in)
    H = dec.output_size
    for layer in range(dec.num_layers):
        in_size = h_seq.shape[-1]
        inp2d = h_seq.reshape(T * B, in_size)
        outs = []
        for d in range(dec.num_directions):
            w_ih_t, w_hh_t, bias = dec.params[layer][d]
            gx = inp2d @ w_ih_t + bias
            h = jnp.zeros((B, H), jnp.float32)
            c = jnp.zeros((B, H), jnp.float32)
            hs = [None] * T
            time_order = range(T) if d == 0 else range(T - 1, -1, -1)
            for t in time_order:
                gates = gx[t * B:(t + 1) * B, :] + h @ w_hh_t
                i = jax.nn.sigmoid(gates[:, 0 * H:1 * H])
                f = jax.nn.sigmoid(gates[:, 1 * H:2 * H])
                g = jnp.tanh(gates[:, 2 * H:3 * H])
                o = jax.nn.sigmoid(gates[:, 3 * H:4 * H])
                c = f * c + i * g
                h = o * jnp.tanh(c)
                hs[t] = h
            outs.append(jnp.stack(hs, axis=0))
        h_seq = outs[0] if dec.num_directions == 1 else jnp.concatenate(outs, axis=-1)
    return jnp.transpose(h_seq, (1, 0, 2))


if __name__ == "__main__":
    # Small shapes consistent with the module's forward:
    # x: (batch=8, seq=8, hidden_size=32); output_size=32; 2 layers; bidirectional.
    B, T, HIDDEN, OUTPUT, LAYERS, BIDIR = 8, 8, 32, 32, 2, True

    key = jax.random.PRNGKey(0)
    kx, kp = jax.random.split(key)
    x = jax.random.normal(kx, (B, T, HIDDEN), dtype=jnp.float32)

    decoder = DecoderPallas(HIDDEN, OUTPUT, LAYERS, BIDIR, key=kp)

    out = jax.block_until_ready(decoder(x))
    assert out.shape == (B, T, (2 if BIDIR else 1) * OUTPUT), out.shape

    ref = jax.block_until_ready(_ref_decoder(decoder, x))
    max_err = float(jnp.max(jnp.abs(out - ref)))
    # Kernel uses bf16 matmul operands with f32 accumulation (review item), so
    # small deviations vs the pure-f32 reference are expected over T steps.
    assert max_err < 5e-2, max_err

    print("KERNEL_OK")
</pallas_src>

<mosaic_0001>
module attributes {stable_mosaic.version = 11 : i64} {
  func.func @_decoder_kernel(%arg0: memref<8x8x32xf32, #tpu.memory_space<vmem>>, %arg1: memref<32x256xbf16, #tpu.memory_space<vmem>>, %arg2: memref<64x256xbf16, #tpu.memory_space<vmem>>, %arg3: memref<1x256xf32, #tpu.memory_space<vmem>>, %arg4: memref<32x256xbf16, #tpu.memory_space<vmem>>, %arg5: memref<32x256xbf16, #tpu.memory_space<vmem>>, %arg6: memref<64x256xbf16, #tpu.memory_space<vmem>>, %arg7: memref<1x256xf32, #tpu.memory_space<vmem>>, %arg8: memref<8x8x64xf32, #tpu.memory_space<vmem>>) attributes {dimension_semantics = [], scalar_prefetch = 0 : i64, scratch_operands = 0 : i64, tpu.core_type = #tpu.core_type<tc>} {
    %c0 = arith.constant 0 : index
    %c0_0 = arith.constant 0 : index
    %c0_1 = arith.constant 0 : index
    %0 = vector.load %arg0[%c0, %c0_0, %c0_1] : memref<8x8x32xf32, #tpu.memory_space<vmem>>, vector<8x8x32xf32>
    %1 = vector.shape_cast %0 : vector<8x8x32xf32> to vector<64x32xf32>
    %c0_2 = arith.constant 0 : index
    %c0_3 = arith.constant 0 : index
    %2 = vector.load %arg1[%c0_2, %c0_3] : memref<32x256xbf16, #tpu.memory_space<vmem>>, vector<32x256xbf16>
    %3 = arith.truncf %1 : vector<64x32xf32> to vector<64x32xbf16>
    %cst = arith.constant dense<0.000000e+00> : vector<64x256xf32>
    %4 = tpu.matmul %3, %2, %cst {dimension_numbers = #tpu.dot_dimension_numbers<[1], [0], [0], [1], [0, 0, 1, 1], [], []>} : vector<64x32xbf16>, vector<32x256xbf16>, vector<64x256xf32> -> vector<64x256xf32>
    %c0_4 = arith.constant 0 : index
    %c0_5 = arith.constant 0 : index
    %5 = vector.load %arg2[%c0_4, %c0_5] : memref<64x256xbf16, #tpu.memory_space<vmem>>, vector<64x256xbf16>
    %c0_6 = arith.constant 0 : index
    %c0_7 = arith.constant 0 : index
    %6 = vector.load %arg3[%c0_6, %c0_7] : memref<1x256xf32, #tpu.memory_space<vmem>>, vector<1x256xf32>
    %7 = vector.broadcast %6 : vector<1x256xf32> to vector<64x256xf32>
    %8 = arith.addf %4, %7 : vector<64x256xf32>
    %cst_8 = arith.constant 0.000000e+00 : f32
    %9 = vector.broadcast %cst_8 : f32 to vector<8x32xf32>
    %cst_9 = arith.constant 0.000000e+00 : f32
    %10 = vector.broadcast %cst_9 : f32 to vector<8x32xf32>
    %cst_10 = arith.constant 0.000000e+00 : f32
    %11 = vector.broadcast %cst_10 : f32 to vector<8x32xf32>
    %cst_11 = arith.constant 0.000000e+00 : f32
    %12 = vector.broadcast %cst_11 : f32 to vector<8x32xf32>
    %13 = tpu.concatenate %9, %11 in 1 : vector<8x32xf32>, vector<8x32xf32> -> vector<8x64xf32>
    %14 = arith.truncf %13 : vector<8x64xf32> to vector<8x64xbf16>
    %cst_12 = arith.constant dense<0.000000e+00> : vector<8x256xf32>
    %15 = tpu.matmul %14, %5, %cst_12 {dimension_numbers = #tpu.dot_dimension_numbers<[1], [0], [0], [1], [0, 0, 1, 1], [], []>} : vector<8x64xbf16>, vector<64x256xbf16>, vector<8x256xf32> -> vector<8x256xf32>
    %16 = vector.extract_strided_slice %8 {offsets = [0, 0], sizes = [8, 128], strides = [1, 1]} : vector<64x256xf32> to vector<8x128xf32>
    %17 = vector.extract_strided_slice %15 {offsets = [0, 0], sizes = [8, 128], strides = [1, 1]} : vector<8x256xf32> to vector<8x128xf32>
    %18 = arith.addf %16, %17 : vector<8x128xf32>
    %19 = arith.negf %18 : vector<8x128xf32>
    %20 = math.exp %19 : vector<8x128xf32>
    %cst_13 = arith.constant 1.000000e+00 : f32
    %21 = vector.broadcast %cst_13 : f32 to vector<8x128xf32>
    %22 = arith.addf %21, %20 : vector<8x128xf32>
    %23 = arith.divf %21, %22 : vector<8x128xf32>
    %24 = math.tanh %18 : vector<8x128xf32>
    %25 = vector.extract_strided_slice %23 {offsets = [0, 32], sizes = [8, 32], strides = [1, 1]} : vector<8x128xf32> to vector<8x32xf32>
    %26 = arith.mulf %25, %10 : vector<8x32xf32>
    %27 = vector.extract_strided_slice %23 {offsets = [0, 0], sizes = [8, 32], strides = [1, 1]} : vector<8x128xf32> to vector<8x32xf32>
    %28 = vector.extract_strided_slice %24 {offsets = [0, 64], sizes = [8, 32], strides = [1, 1]} : vector<8x128xf32> to vector<8x32xf32>
    %29 = arith.mulf %27, %28 : vector<8x32xf32>
    %30 = arith.addf %26, %29 : vector<8x32xf32>
    %31 = vector.extract_strided_slice %23 {offsets = [0, 96], sizes = [8, 32], strides = [1, 1]} : vector<8x128xf32> to vector<8x32xf32>
    %32 = math.tanh %30 : vector<8x32xf32>
    %33 = arith.mulf %31, %32 : vector<8x32xf32>
    %34 = vector.extract_strided_slice %8 {offsets = [56, 128], sizes = [8, 128], strides = [1, 1]} : vector<64x256xf32> to vector<8x128xf32>
    %35 = vector.extract_strided_slice %15 {offsets = [0, 128], sizes = [8, 128], strides = [1, 1]} : vector<8x256xf32> to vector<8x128xf32>
    %36 = arith.addf %34, %35 : vector<8x128xf32>
    %37 = arith.negf %36 : vector<8x128xf32>
    %38 = math.exp %37 : vector<8x128xf32>
    %cst_14 = arith.constant 1.000000e+00 : f32
    %39 = vector.broadcast %cst_14 : f32 to vector<8x128xf32>
    %40 = arith.addf %39, %38 : vector<8x128xf32>
    %41 = arith.divf %39, %40 : vector<8x128xf32>
    %42 = math.tanh %36 : vector<8x128xf32>
    %43 = vector.extract_strided_slice %41 {offsets = [0, 32], sizes = [8, 32], strides = [1, 1]} : vector<8x128xf32> to vector<8x32xf32>
    %44 = arith.mulf %43, %12 : vector<8x32xf32>
    %45 = vector.extract_strided_slice %41 {offsets = [0, 0], sizes = [8, 32], strides = [1, 1]} : vector<8x128xf32> to vector<8x32xf32>
    %46 = vector.extract_strided_slice %42 {offsets = [0, 64], sizes = [8, 32], strides = [1, 1]} : vector<8x128xf32> to vector<8x32xf32>
    %47 = arith.mulf %45, %46 : vector<8x32xf32>
    %48 = arith.addf %44, %47 : vector<8x32xf32>
    %49 = vector.extract_strided_slice %41 {offsets = [0, 96], sizes = [8, 32], strides = [1, 1]} : vector<8x128xf32> to vector<8x32xf32>
    %50 = math.tanh %48 : vector<8x32xf32>
    %51 = arith.mulf %49, %50 : vector<8x32xf32>
    %52 = tpu.concatenate %33, %51 in 1 : vector<8x32xf32>, vector<8x32xf32> -> vector<8x64xf32>
    %53 = arith.truncf %52 : vector<8x64xf32> to vector<8x64xbf16>
    %cst_15 = arith.constant dense<0.000000e+00> : vector<8x256xf32>
    %54 = tpu.matmul %53, %5, %cst_15 {dimension_numbers = #tpu.dot_dimension_numbers<[1], [0], [0], [1], [0, 0, 1, 1], [], []>} : vector<8x64xbf16>, vector<64x256xbf16>, vector<8x256xf32> -> vector<8x256xf32>
    %55 = vector.extract_strided_slice %8 {offsets = [8, 0], sizes = [8, 128], strides = [1, 1]} : vector<64x256xf32> to vector<8x128xf32>
    %56 = vector.extract_strided_slice %54 {offsets = [0, 0], sizes = [8, 128], strides = [1, 1]} : vector<8x256xf32> to vector<8x128xf32>
    %57 = arith.addf %55, %56 : vector<8x128xf32>
    %58 = arith.negf %57 : vector<8x128xf32>
    %59 = math.exp %58 : vector<8x128xf32>
    %cst_16 = arith.constant 1.000000e+00 : f32
    %60 = vector.broadcast %cst_16 : f32 to vector<8x128xf32>
    %61 = arith.addf %60, %59 : vector<8x128xf32>
    %62 = arith.divf %60, %61 : vector<8x128xf32>
    %63 = math.tanh %57 : vector<8x128xf32>
    %64 = vector.extract_strided_slice %62 {offsets = [0, 32], sizes = [8, 32], strides = [1, 1]} : vector<8x128xf32> to vector<8x32xf32>
    %65 = arith.mulf %64, %30 : vector<8x32xf32>
    %66 = vector.extract_strided_slice %62 {offsets = [0, 0], sizes = [8, 32], strides = [1, 1]} : vector<8x128xf32> to vector<8x32xf32>
    %67 = vector.extract_strided_slice %63 {offsets = [0, 64], sizes = [8, 32], strides = [1, 1]} : vector<8x128xf32> to vector<8x32xf32>
    %68 = arith.mulf %66, %67 : vector<8x32xf32>
    %69 = arith.addf %65, %68 : vector<8x32xf32>
    %70 = vector.extract_strided_slice %62 {offsets = [0, 96], sizes = [8, 32], strides = [1, 1]} : vector<8x128xf32> to vector<8x32xf32>
    %71 = math.tanh %69 : vector<8x32xf32>
    %72 = arith.mulf %70, %71 : vector<8x32xf32>
    %73 = vector.extract_strided_slice %8 {offsets = [48, 128], sizes = [8, 128], strides = [1, 1]} : vector<64x256xf32> to vector<8x128xf32>
    %74 = vector.extract_strided_slice %54 {offsets = [0, 128], sizes = [8, 128], strides = [1, 1]} : vector<8x256xf32> to vector<8x128xf32>
    %75 = arith.addf %73, %74 : vector<8x128xf32>
    %76 = arith.negf %75 : vector<8x128xf32>
    %77 = math.exp %76 : vector<8x128xf32>
    %cst_17 = arith.constant 1.000000e+00 : f32
    %78 = vector.broadcast %cst_17 : f32 to vector<8x128xf32>
    %79 = arith.addf %78, %77 : vector<8x128xf32>
    %80 = arith.divf %78, %79 : vector<8x128xf32>
    %81 = math.tanh %75 : vector<8x128xf32>
    %82 = vector.extract_strided_slice %80 {offsets = [0, 32], sizes = [8, 32], strides = [1, 1]} : vector<8x128xf32> to vector<8x32xf32>
    %83 = arith.mulf %82, %48 : vector<8x32xf32>
    %84 = vector.extract_strided_slice %80 {offsets = [0, 0], sizes = [8, 32], strides = [1, 1]} : vector<8x128xf32> to vector<8x32xf32>
    %85 = vector.extract_strided_slice %81 {offsets = [0, 64], sizes = [8, 32], strides = [1, 1]} : vector<8x128xf32> to vector<8x32xf32>
    %86 = arith.mulf %84, %85 : vector<8x32xf32>
    %87 = arith.addf %83, %86 : vector<8x32xf32>
    %88 = vector.extract_strided_slice %80 {offsets = [0, 96], sizes = [8, 32], strides = [1, 1]} : vector<8x128xf32> to vector<8x32xf32>
    %89 = math.tanh %87 : vector<8x32xf32>
    %90 = arith.mulf %88, %89 : vector<8x32xf32>
    %91 = tpu.concatenate %72, %90 in 1 : vector<8x32xf32>, vector<8x32xf32> -> vector<8x64xf32>
    %92 = arith.truncf %91 : vector<8x64xf32> to vector<8x64xbf16>
    %cst_18 = arith.constant dense<0.000000e+00> : vector<8x256xf32>
    %93 = tpu.matmul %92, %5, %cst_18 {dimension_numbers = #tpu.dot_dimension_numbers<[1], [0], [0], [1], [0, 0, 1, 1], [], []>} : vector<8x64xbf16>, vector<64x256xbf16>, vector<8x256xf32> -> vector<8x256xf32>
    %94 = vector.extract_strided_slice %8 {offsets = [16, 0], sizes = [8, 128], strides = [1, 1]} : vector<64x256xf32> to vector<8x128xf32>
    %95 = vector.extract_strided_slice %93 {offsets = [0, 0], sizes = [8, 128], strides = [1, 1]} : vector<8x256xf32> to vector<8x128xf32>
    %96 = arith.addf %94, %95 : vector<8x128xf32>
    %97 = arith.negf %96 : vector<8x128xf32>
    %98 = math.exp %97 : vector<8x128xf32>
    %cst_19 = arith.constant 1.000000e+00 : f32
    %99 = vector.broadcast %cst_19 : f32 to vector<8x128xf32>
    %100 = arith.addf %99, %98 : vector<8x128xf32>
    %101 = arith.divf %99, %100 : vector<8x128xf32>
    %102 = math.tanh %96 : vector<8x128xf32>
    %103 = vector.extract_strided_slice %101 {offsets = [0, 32], sizes = [8, 32], strides = [1, 1]} : vector<8x128xf32> to vector<8x32xf32>
    %104 = arith.mulf %103, %69 : vector<8x32xf32>
    %105 = vector.extract_strided_slice %101 {offsets = [0, 0], sizes = [8, 32], strides = [1, 1]} : vector<8x128xf32> to vector<8x32xf32>
    %106 = vector.extract_strided_slice %102 {offsets = [0, 64], sizes = [8, 32], strides = [1, 1]} : vector<8x128xf32> to vector<8x32xf32>
    %107 = arith.mulf %105, %106 : vector<8x32xf32>
    %108 = arith.addf %104, %107 : vector<8x32xf32>
    %109 = vector.extract_strided_slice %101 {offsets = [0, 96], sizes = [8, 32], strides = [1, 1]} : vector<8x128xf32> to vector<8x32xf32>
    %110 = math.tanh %108 : vector<8x32xf32>
    %111 = arith.mulf %109, %110 : vector<8x32xf32>
    %112 = vector.extract_strided_slice %8 {offsets = [40, 128], sizes = [8, 128], strides = [1, 1]} : vector<64x256xf32> to vector<8x128xf32>
    %113 = vector.extract_strided_slice %93 {offsets = [0, 128], sizes = [8, 128], strides = [1, 1]} : vector<8x256xf32> to vector<8x128xf32>
    %114 = arith.addf %112, %113 : vector<8x128xf32>
    %115 = arith.negf %114 : vector<8x128xf32>
    %116 = math.exp %115 : vector<8x128xf32>
    %cst_20 = arith.constant 1.000000e+00 : f32
    %117 = vector.broadcast %cst_20 : f32 to vector<8x128xf32>
    %118 = arith.addf %117, %116 : vector<8x128xf32>
    %119 = arith.divf %117, %118 : vector<8x128xf32>
    %120 = math.tanh %114 : vector<8x128xf32>
    %121 = vector.extract_strided_slice %119 {offsets = [0, 32], sizes = [8, 32], strides = [1, 1]} : vector<8x128xf32> to vector<8x32xf32>
    %122 = arith.mulf %121, %87 : vector<8x32xf32>
    %123 = vector.extract_strided_slice %119 {offsets = [0, 0], sizes = [8, 32], strides = [1, 1]} : vector<8x128xf32> to vector<8x32xf32>
    %124 = vector.extract_strided_slice %120 {offsets = [0, 64], sizes = [8, 32], strides = [1, 1]} : vector<8x128xf32> to vector<8x32xf32>
    %125 = arith.mulf %123, %124 : vector<8x32xf32>
    %126 = arith.addf %122, %125 : vector<8x32xf32>
    %127 = vector.extract_strided_slice %119 {offsets = [0, 96], sizes = [8, 32], strides = [1, 1]} : vector<8x128xf32> to vector<8x32xf32>
    %128 = math.tanh %126 : vector<8x32xf32>
    %129 = arith.mulf %127, %128 : vector<8x32xf32>
    %130 = tpu.concatenate %111, %129 in 1 : vector<8x32xf32>, vector<8x32xf32> -> vector<8x64xf32>
    %131 = arith.truncf %130 : vector<8x64xf32> to vector<8x64xbf16>
    %cst_21 = arith.constant dense<0.000000e+00> : vector<8x256xf32>
    %132 = tpu.matmul %131, %5, %cst_21 {dimension_numbers = #tpu.dot_dimension_numbers<[1], [0], [0], [1], [0, 0, 1, 1], [], []>} : vector<8x64xbf16>, vector<64x256xbf16>, vector<8x256xf32> -> vector<8x256xf32>
    %133 = vector.extract_strided_slice %8 {offsets = [24, 0], sizes = [8, 128], strides = [1, 1]} : vector<64x256xf32> to vector<8x128xf32>
    %134 = vector.extract_strided_slice %132 {offsets = [0, 0], sizes = [8, 128], strides = [1, 1]} : vector<8x256xf32> to vector<8x128xf32>
    %135 = arith.addf %133, %134 : vector<8x128xf32>
    %136 = arith.negf %135 : vector<8x128xf32>
    %137 = math.exp %136 : vector<8x128xf32>
    %cst_22 = arith.constant 1.000000e+00 : f32
    %138 = vector.broadcast %cst_22 : f32 to vector<8x128xf32>
    %139 = arith.addf %138, %137 : vector<8x128xf32>
    %140 = arith.divf %138, %139 : vector<8x128xf32>
    %141 = math.tanh %135 : vector<8x128xf32>
    %142 = vector.extract_strided_slice %140 {offsets = [0, 32], sizes = [8, 32], strides = [1, 1]} : vector<8x128xf32> to vector<8x32xf32>
    %143 = arith.mulf %142, %108 : vector<8x32xf32>
    %144 = vector.extract_strided_slice %140 {offsets = [0, 0], sizes = [8, 32], strides = [1, 1]} : vector<8x128xf32> to vector<8x32xf32>
    %145 = vector.extract_strided_slice %141 {offsets = [0, 64], sizes = [8, 32], strides = [1, 1]} : vector<8x128xf32> to vector<8x32xf32>
    %146 = arith.mulf %144, %145 : vector<8x32xf32>
    %147 = arith.addf %143, %146 : vector<8x32xf32>
    %148 = vector.extract_strided_slice %140 {offsets = [0, 96], sizes = [8, 32], strides = [1, 1]} : vector<8x128xf32> to vector<8x32xf32>
    %149 = math.tanh %147 : vector<8x32xf32>
    %150 = arith.mulf %148, %149 : vector<8x32xf32>
    %151 = vector.extract_strided_slice %8 {offsets = [32, 128], sizes = [8, 128], strides = [1, 1]} : vector<64x256xf32> to vector<8x128xf32>
    %152 = vector.extract_strided_slice %132 {offsets = [0, 128], sizes = [8, 128], strides = [1, 1]} : vector<8x256xf32> to vector<8x128xf32>
    %153 = arith.addf %151, %152 : vector<8x128xf32>
    %154 = arith.negf %153 : vector<8x128xf32>
    %155 = math.exp %154 : vector<8x128xf32>
    %cst_23 = arith.constant 1.000000e+00 : f32
    %156 = vector.broadcast %cst_23 : f32 to vector<8x128xf32>
    %157 = arith.addf %156, %155 : vector<8x128xf32>
    %158 = arith.divf %156, %157 : vector<8x128xf32>
    %159 = math.tanh %153 : vector<8x128xf32>
    %160 = vector.extract_strided_slice %158 {offsets = [0, 32], sizes = [8, 32], strides = [1, 1]} : vector<8x128xf32> to vector<8x32xf32>
    %161 = arith.mulf %160, %126 : vector<8x32xf32>
    %162 = vector.extract_strided_slice %158 {offsets = [0, 0], sizes = [8, 32], strides = [1, 1]} : vector<8x128xf32> to vector<8x32xf32>
    %163 = vector.extract_strided_slice %159 {offsets = [0, 64], sizes = [8, 32], strides = [1, 1]} : vector<8x128xf32> to vector<8x32xf32>
    %164 = arith.mulf %162, %163 : vector<8x32xf32>
    %165 = arith.addf %161, %164 : vector<8x32xf32>
    %166 = vector.extract_strided_slice %158 {offsets = [0, 96], sizes = [8, 32], strides = [1, 1]} : vector<8x128xf32> to vector<8x32xf32>
    %167 = math.tanh %165 : vector<8x32xf32>
    %168 = arith.mulf %166, %167 : vector<8x32xf32>
    %169 = tpu.concatenate %150, %168 in 1 : vector<8x32xf32>, vector<8x32xf32> -> vector<8x64xf32>
    %170 = arith.truncf %169 : vector<8x64xf32> to vector<8x64xbf16>
    %cst_24 = arith.constant dense<0.000000e+00> : vector<8x256xf32>
    %171 = tpu.matmul %170, %5, %cst_24 {dimension_numbers = #tpu.dot_dimension_numbers<[1], [0], [0], [1], [0, 0, 1, 1], [], []>} : vector<8x64xbf16>, vector<64x256xbf16>, vector<8x256xf32> -> vector<8x256xf32>
    %172 = vector.extract_strided_slice %8 {offsets = [32, 0], sizes = [8, 128], strides = [1, 1]} : vector<64x256xf32> to vector<8x128xf32>
    %173 = vector.extract_strided_slice %171 {offsets = [0, 0], sizes = [8, 128], strides = [1, 1]} : vector<8x256xf32> to vector<8x128xf32>
    %174 = arith.addf %172, %173 : vector<8x128xf32>
    %175 = arith.negf %174 : vector<8x128xf32>
    %176 = math.exp %175 : vector<8x128xf32>
    %cst_25 = arith.constant 1.000000e+00 : f32
    %177 = vector.broadcast %cst_25 : f32 to vector<8x128xf32>
    %178 = arith.addf %177, %176 : vector<8x128xf32>
    %179 = arith.divf %177, %178 : vector<8x128xf32>
    %180 = math.tanh %174 : vector<8x128xf32>
    %181 = vector.extract_strided_slice %179 {offsets = [0, 32], sizes = [8, 32], strides = [1, 1]} : vector<8x128xf32> to vector<8x32xf32>
    %182 = arith.mulf %181, %147 : vector<8x32xf32>
    %183 = vector.extract_strided_slice %179 {offsets = [0, 0], sizes = [8, 32], strides = [1, 1]} : vector<8x128xf32> to vector<8x32xf32>
    %184 = vector.extract_strided_slice %180 {offsets = [0, 64], sizes = [8, 32], strides = [1, 1]} : vector<8x128xf32> to vector<8x32xf32>
    %185 = arith.mulf %183, %184 : vector<8x32xf32>
    %186 = arith.addf %182, %185 : vector<8x32xf32>
    %187 = vector.extract_strided_slice %179 {offsets = [0, 96], sizes = [8, 32], strides = [1, 1]} : vector<8x128xf32> to vector<8x32xf32>
    %188 = math.tanh %186 : vector<8x32xf32>
    %189 = arith.mulf %187, %188 : vector<8x32xf32>
    %190 = vector.extract_strided_slice %8 {offsets = [24, 128], sizes = [8, 128], strides = [1, 1]} : vector<64x256xf32> to vector<8x128xf32>
    %191 = vector.extract_strided_slice %171 {offsets = [0, 128], sizes = [8, 128], strides = [1, 1]} : vector<8x256xf32> to vector<8x128xf32>
    %192 = arith.addf %190, %191 : vector<8x128xf32>
    %193 = arith.negf %192 : vector<8x128xf32>
    %194 = math.exp %193 : vector<8x128xf32>
    %cst_26 = arith.constant 1.000000e+00 : f32
    %195 = vector.broadcast %cst_26 : f32 to vector<8x128xf32>
    %196 = arith.addf %195, %194 : vector<8x128xf32>
    %197 = arith.divf %195, %196 : vector<8x128xf32>
    %198 = math.tanh %192 : vector<8x128xf32>
    %199 = vector.extract_strided_slice %197 {offsets = [0, 32], sizes = [8, 32], strides = [1, 1]} : vector<8x128xf32> to vector<8x32xf32>
    %200 = arith.mulf %199, %165 : vector<8x32xf32>
    %201 = vector.extract_strided_slice %197 {offsets = [0, 0], sizes = [8, 32], strides = [1, 1]} : vector<8x128xf32> to vector<8x32xf32>
    %202 = vector.extract_strided_slice %198 {offsets = [0, 64], sizes = [8, 32], strides = [1, 1]} : vector<8x128xf32> to vector<8x32xf32>
    %203 = arith.mulf %201, %202 : vector<8x32xf32>
    %204 = arith.addf %200, %203 : vector<8x32xf32>
    %205 = vector.extract_strided_slice %197 {offsets = [0, 96], sizes = [8, 32], strides = [1, 1]} : vector<8x128xf32> to vector<8x32xf32>
    %206 = math.tanh %204 : vector<8x32xf32>
    %207 = arith.mulf %205, %206 : vector<8x32xf32>
    %208 = tpu.concatenate %189, %207 in 1 : vector<8x32xf32>, vector<8x32xf32> -> vector<8x64xf32>
    %209 = arith.truncf %208 : vector<8x64xf32> to vector<8x64xbf16>
    %cst_27 = arith.constant dense<0.000000e+00> : vector<8x256xf32>
    %210 = tpu.matmul %209, %5, %cst_27 {dimension_numbers = #tpu.dot_dimension_numbers<[1], [0], [0], [1], [0, 0, 1, 1], [], []>} : vector<8x64xbf16>, vector<64x256xbf16>, vector<8x256xf32> -> vector<8x256xf32>
    %211 = vector.extract_strided_slice %8 {offsets = [40, 0], sizes = [8, 128], strides = [1, 1]} : vector<64x256xf32> to vector<8x128xf32>
    %212 = vector.extract_strided_slice %210 {offsets = [0, 0], sizes = [8, 128], strides = [1, 1]} : vector<8x256xf32> to vector<8x128xf32>
    %213 = arith.addf %211, %212 : vector<8x128xf32>
    %214 = arith.negf %213 : vector<8x128xf32>
    %215 = math.exp %214 : vector<8x128xf32>
    %cst_28 = arith.constant 1.000000e+00 : f32
    %216 = vector.broadcast %cst_28 : f32 to vector<8x128xf32>
    %217 = arith.addf %216, %215 : vector<8x128xf32>
    %218 = arith.divf %216, %217 : vector<8x128xf32>
    %219 = math.tanh %213 : vector<8x128xf32>
    %220 = vector.extract_strided_slice %218 {offsets = [0, 32], sizes = [8, 32], strides = [1, 1]} : vector<8x128xf32> to vector<8x32xf32>
    %221 = arith.mulf %220, %186 : vector<8x32xf32>
    %222 = vector.extract_strided_slice %218 {offsets = [0, 0], sizes = [8, 32], strides = [1, 1]} : vector<8x128xf32> to vector<8x32xf32>
    %223 = vector.extract_strided_slice %219 {offsets = [0, 64], sizes = [8, 32], strides = [1, 1]} : vector<8x128xf32> to vector<8x32xf32>
    %224 = arith.mulf %222, %223 : vector<8x32xf32>
    %225 = arith.addf %221, %224 : vector<8x32xf32>
    %226 = vector.extract_strided_slice %218 {offsets = [0, 96], sizes = [8, 32], strides = [1, 1]} : vector<8x128xf32> to vector<8x32xf32>
    %227 = math.tanh %225 : vector<8x32xf32>
    %228 = arith.mulf %226, %227 : vector<8x32xf32>
    %229 = vector.extract_strided_slice %8 {offsets = [16, 128], sizes = [8, 128], strides = [1, 1]} : vector<64x256xf32> to vector<8x128xf32>
    %230 = vector.extract_strided_slice %210 {offsets = [0, 128], sizes = [8, 128], strides = [1, 1]} : vector<8x256xf32> to vector<8x128xf32>
    %231 = arith.addf %229, %230 : vector<8x128xf32>
    %232 = arith.negf %231 : vector<8x128xf32>
    %233 = math.exp %232 : vector<8x128xf32>
    %cst_29 = arith.constant 1.000000e+00 : f32
    %234 = vector.broadcast %cst_29 : f32 to vector<8x128xf32>
    %235 = arith.addf %234, %233 : vector<8x128xf32>
    %236 = arith.divf %234, %235 : vector<8x128xf32>
    %237 = math.tanh %231 : vector<8x128xf32>
    %238 = vector.extract_strided_slice %236 {offsets = [0, 32], sizes = [8, 32], strides = [1, 1]} : vector<8x128xf32> to vector<8x32xf32>
    %239 = arith.mulf %238, %204 : vector<8x32xf32>
    %240 = vector.extract_strided_slice %236 {offsets = [0, 0], sizes = [8, 32], strides = [1, 1]} : vector<8x128xf32> to vector<8x32xf32>
    %241 = vector.extract_strided_slice %237 {offsets = [0, 64], sizes = [8, 32], strides = [1, 1]} : vector<8x128xf32> to vector<8x32xf32>
    %242 = arith.mulf %240, %241 : vector<8x32xf32>
    %243 = arith.addf %239, %242 : vector<8x32xf32>
    %244 = vector.extract_strided_slice %236 {offsets = [0, 96], sizes = [8, 32], strides = [1, 1]} : vector<8x128xf32> to vector<8x32xf32>
    %245 = math.tanh %243 : vector<8x32xf32>
    %246 = arith.mulf %244, %245 : vector<8x32xf32>
    %247 = tpu.concatenate %228, %246 in 1 : vector<8x32xf32>, vector<8x32xf32> -> vector<8x64xf32>
    %248 = arith.truncf %247 : vector<8x64xf32> to vector<8x64xbf16>
    %cst_30 = arith.constant dense<0.000000e+00> : vector<8x256xf32>
    %249 = tpu.matmul %248, %5, %cst_30 {dimension_numbers = #tpu.dot_dimension_numbers<[1], [0], [0], [1], [0, 0, 1, 1], [], []>} : vector<8x64xbf16>, vector<64x256xbf16>, vector<8x256xf32> -> vector<8x256xf32>
    %250 = vector.extract_strided_slice %8 {offsets = [48, 0], sizes = [8, 128], strides = [1, 1]} : vector<64x256xf32> to vector<8x128xf32>
    %251 = vector.extract_strided_slice %249 {offsets = [0, 0], sizes = [8, 128], strides = [1, 1]} : vector<8x256xf32> to vector<8x128xf32>
    %252 = arith.addf %250, %251 : vector<8x128xf32>
    %253 = arith.negf %252 : vector<8x128xf32>
    %254 = math.exp %253 : vector<8x128xf32>
    %cst_31 = arith.constant 1.000000e+00 : f32
    %255 = vector.broadcast %cst_31 : f32 to vector<8x128xf32>
    %256 = arith.addf %255, %254 : vector<8x128xf32>
    %257 = arith.divf %255, %256 : vector<8x128xf32>
    %258 = math.tanh %252 : vector<8x128xf32>
    %259 = vector.extract_strided_slice %257 {offsets = [0, 32], sizes = [8, 32], strides = [1, 1]} : vector<8x128xf32> to vector<8x32xf32>
    %260 = arith.mulf %259, %225 : vector<8x32xf32>
    %261 = vector.extract_strided_slice %257 {offsets = [0, 0], sizes = [8, 32], strides = [1, 1]} : vector<8x128xf32> to vector<8x32xf32>
    %262 = vector.extract_strided_slice %258 {offsets = [0, 64], sizes = [8, 32], strides = [1, 1]} : vector<8x128xf32> to vector<8x32xf32>
    %263 = arith.mulf %261, %262 : vector<8x32xf32>
    %264 = arith.addf %260, %263 : vector<8x32xf32>
    %265 = vector.extract_strided_slice %257 {offsets = [0, 96], sizes = [8, 32], strides = [1, 1]} : vector<8x128xf32> to vector<8x32xf32>
    %266 = math.tanh %264 : vector<8x32xf32>
    %267 = arith.mulf %265, %266 : vector<8x32xf32>
    %268 = vector.extract_strided_slice %8 {offsets = [8, 128], sizes = [8, 128], strides = [1, 1]} : vector<64x256xf32> to vector<8x128xf32>
    %269 = vector.extract_strided_slice %249 {offsets = [0, 128], sizes = [8, 128], strides = [1, 1]} : vector<8x256xf32> to vector<8x128xf32>
    %270 = arith.addf %268, %269 : vector<8x128xf32>
    %271 = arith.negf %270 : vector<8x128xf32>
    %272 = math.exp %271 : vector<8x128xf32>
    %cst_32 = arith.constant 1.000000e+00 : f32
    %273 = vector.broadcast %cst_32 : f32 to vector<8x128xf32>
    %274 = arith.addf %273, %272 : vector<8x128xf32>
    %275 = arith.divf %273, %274 : vector<8x128xf32>
    %276 = math.tanh %270 : vector<8x128xf32>
    %277 = vector.extract_strided_slice %275 {offsets = [0, 32], sizes = [8, 32], strides = [1, 1]} : vector<8x128xf32> to vector<8x32xf32>
    %278 = arith.mulf %277, %243 : vector<8x32xf32>
    %279 = vector.extract_strided_slice %275 {offsets = [0, 0], sizes = [8, 32], strides = [1, 1]} : vector<8x128xf32> to vector<8x32xf32>
    %280 = vector.extract_strided_slice %276 {offsets = [0, 64], sizes = [8, 32], strides = [1, 1]} : vector<8x128xf32> to vector<8x32xf32>
    %281 = arith.mulf %279, %280 : vector<8x32xf32>
    %282 = arith.addf %278, %281 : vector<8x32xf32>
    %283 = vector.extract_strided_slice %275 {offsets = [0, 96], sizes = [8, 32], strides = [1, 1]} : vector<8x128xf32> to vector<8x32xf32>
    %284 = math.tanh %282 : vector<8x32xf32>
    %285 = arith.mulf %283, %284 : vector<8x32xf32>
    %286 = tpu.concatenate %267, %285 in 1 : vector<8x32xf32>, vector<8x32xf32> -> vector<8x64xf32>
    %287 = arith.truncf %286 : vector<8x64xf32> to vector<8x64xbf16>
    %cst_33 = arith.constant dense<0.000000e+00> : vector<8x256xf32>
    %288 = tpu.matmul %287, %5, %cst_33 {dimension_numbers = #tpu.dot_dimension_numbers<[1], [0], [0], [1], [0, 0, 1, 1], [], []>} : vector<8x64xbf16>, vector<64x256xbf16>, vector<8x256xf32> -> vector<8x256xf32>
    %289 = vector.extract_strided_slice %8 {offsets = [56, 0], sizes = [8, 128], strides = [1, 1]} : vector<64x256xf32> to vector<8x128xf32>
    %290 = vector.extract_strided_slice %288 {offsets = [0, 0], sizes = [8, 128], strides = [1, 1]} : vector<8x256xf32> to vector<8x128xf32>
    %291 = arith.addf %289, %290 : vector<8x128xf32>
    %292 = arith.negf %291 : vector<8x128xf32>
    %293 = math.exp %292 : vector<8x128xf32>
    %cst_34 = arith.constant 1.000000e+00 : f32
    %294 = vector.broadcast %cst_34 : f32 to vector<8x128xf32>
    %295 = arith.addf %294, %293 : vector<8x128xf32>
    %296 = arith.divf %294, %295 : vector<8x128xf32>
    %297 = math.tanh %291 : vector<8x128xf32>
    %298 = vector.extract_strided_slice %296 {offsets = [0, 32], sizes = [8, 32], strides = [1, 1]} : vector<8x128xf32> to vector<8x32xf32>
    %299 = arith.mulf %298, %264 : vector<8x32xf32>
    %300 = vector.extract_strided_slice %296 {offsets = [0, 0], sizes = [8, 32], strides = [1, 1]} : vector<8x128xf32> to vector<8x32xf32>
    %301 = vector.extract_strided_slice %297 {offsets = [0, 64], sizes = [8, 32], strides = [1, 1]} : vector<8x128xf32> to vector<8x32xf32>
    %302 = arith.mulf %300, %301 : vector<8x32xf32>
    %303 = arith.addf %299, %302 : vector<8x32xf32>
    %304 = vector.extract_strided_slice %296 {offsets = [0, 96], sizes = [8, 32], strides = [1, 1]} : vector<8x128xf32> to vector<8x32xf32>
    %305 = math.tanh %303 : vector<8x32xf32>
    %306 = arith.mulf %304, %305 : vector<8x32xf32>
    %307 = vector.extract_strided_slice %8 {offsets = [0, 128], sizes = [8, 128], strides = [1, 1]} : vector<64x256xf32> to vector<8x128xf32>
    %308 = vector.extract_strided_slice %288 {offsets = [0, 128], sizes = [8, 128], strides = [1, 1]} : vector<8x256xf32> to vector<8x128xf32>
    %309 = arith.addf %307, %308 : vector<8x128xf32>
    %310 = arith.negf %309 : vector<8x128xf32>
    %311 = math.exp %310 : vector<8x128xf32>
    %cst_35 = arith.constant 1.000000e+00 : f32
    %312 = vector.broadcast %cst_35 : f32 to vector<8x128xf32>
    %313 = arith.addf %312, %311 : vector<8x128xf32>
    %314 = arith.divf %312, %313 : vector<8x128xf32>
    %315 = math.tanh %309 : vector<8x128xf32>
    %316 = vector.extract_strided_slice %314 {offsets = [0, 32], sizes = [8, 32], strides = [1, 1]} : vector<8x128xf32> to vector<8x32xf32>
    %317 = arith.mulf %316, %282 : vector<8x32xf32>
    %318 = vector.extract_strided_slice %314 {offsets = [0, 0], sizes = [8, 32], strides = [1, 1]} : vector<8x128xf32> to vector<8x32xf32>
    %319 = vector.extract_strided_slice %315 {offsets = [0, 64], sizes = [8, 32], strides = [1, 1]} : vector<8x128xf32> to vector<8x32xf32>
    %320 = arith.mulf %318, %319 : vector<8x32xf32>
    %321 = arith.addf %317, %320 : vector<8x32xf32>
    %322 = vector.extract_strided_slice %314 {offsets = [0, 96], sizes = [8, 32], strides = [1, 1]} : vector<8x128xf32> to vector<8x32xf32>
    %323 = math.tanh %321 : vector<8x32xf32>
    %324 = arith.mulf %322, %323 : vector<8x32xf32>
    %325 = vector.shape_cast %33 : vector<8x32xf32> to vector<1x8x32xf32>
    %326 = vector.shape_cast %72 : vector<8x32xf32> to vector<1x8x32xf32>
    %327 = vector.shape_cast %111 : vector<8x32xf32> to vector<1x8x32xf32>
    %328 = vector.shape_cast %150 : vector<8x32xf32> to vector<1x8x32xf32>
    %329 = vector.shape_cast %189 : vector<8x32xf32> to vector<1x8x32xf32>
    %330 = vector.shape_cast %228 : vector<8x32xf32> to vector<1x8x32xf32>
    %331 = vector.shape_cast %267 : vector<8x32xf32> to vector<1x8x32xf32>
    %332 = vector.shape_cast %306 : vector<8x32xf32> to vector<1x8x32xf32>
    %333 = tpu.concatenate %325, %326, %327, %328, %329, %330, %331, %332 in 0 : vector<1x8x32xf32>, vector<1x8x32xf32>, vector<1x8x32xf32>, vector<1x8x32xf32>, vector<1x8x32xf32>, vector<1x8x32xf32>, vector<1x8x32xf32>, vector<1x8x32xf32> -> vector<8x8x32xf32>
    %334 = vector.shape_cast %324 : vector<8x32xf32> to vector<1x8x32xf32>
    %335 = vector.shape_cast %285 : vector<8x32xf32> to vector<1x8x32xf32>
    %336 = vector.shape_cast %246 : vector<8x32xf32> to vector<1x8x32xf32>
    %337 = vector.shape_cast %207 : vector<8x32xf32> to vector<1x8x32xf32>
    %338 = vector.shape_cast %168 : vector<8x32xf32> to vector<1x8x32xf32>
    %339 = vector.shape_cast %129 : vector<8x32xf32> to vector<1x8x32xf32>
    %340 = vector.shape_cast %90 : vector<8x32xf32> to vector<1x8x32xf32>
    %341 = vector.shape_cast %51 : vector<8x32xf32> to vector<1x8x32xf32>
    %342 = tpu.concatenate %334, %335, %336, %337, %338, %339, %340, %341 in 0 : vector<1x8x32xf32>, vector<1x8x32xf32>, vector<1x8x32xf32>, vector<1x8x32xf32>, vector<1x8x32xf32>, vector<1x8x32xf32>, vector<1x8x32xf32>, vector<1x8x32xf32> -> vector<8x8x32xf32>
    %343 = vector.shape_cast %333 : vector<8x8x32xf32> to vector<64x32xf32>
    %344 = vector.shape_cast %342 : vector<8x8x32xf32> to vector<64x32xf32>
    %c0_36 = arith.constant 0 : index
    %c0_37 = arith.constant 0 : index
    %345 = vector.load %arg4[%c0_36, %c0_37] : memref<32x256xbf16, #tpu.memory_space<vmem>>, vector<32x256xbf16>
    %c0_38 = arith.constant 0 : index
    %c0_39 = arith.constant 0 : index
    %346 = vector.load %arg5[%c0_38, %c0_39] : memref<32x256xbf16, #tpu.memory_space<vmem>>, vector<32x256xbf16>
    %347 = arith.truncf %343 : vector<64x32xf32> to vector<64x32xbf16>
    %cst_40 = arith.constant dense<0.000000e+00> : vector<64x256xf32>
    %348 = tpu.matmul %347, %345, %cst_40 {dimension_numbers = #tpu.dot_dimension_numbers<[1], [0], [0], [1], [0, 0, 1, 1], [], []>} : vector<64x32xbf16>, vector<32x256xbf16>, vector<64x256xf32> -> vector<64x256xf32>
    %349 = arith.truncf %344 : vector<64x32xf32> to vector<64x32xbf16>
    %cst_41 = arith.constant dense<0.000000e+00> : vector<64x256xf32>
    %350 = tpu.matmul %349, %346, %cst_41 {dimension_numbers = #tpu.dot_dimension_numbers<[1], [0], [0], [1], [0, 0, 1, 1], [], []>} : vector<64x32xbf16>, vector<32x256xbf16>, vector<64x256xf32> -> vector<64x256xf32>
    %351 = arith.addf %348, %350 : vector<64x256xf32>
    %c0_42 = arith.constant 0 : index
    %c0_43 = arith.constant 0 : index
    %352 = vector.load %arg6[%c0_42, %c0_43] : memref<64x256xbf16, #tpu.memory_space<vmem>>, vector<64x256xbf16>
    %c0_44 = arith.constant 0 : index
    %c0_45 = arith.constant 0 : index
    %353 = vector.load %arg7[%c0_44, %c0_45] : memref<1x256xf32, #tpu.memory_space<vmem>>, vector<1x256xf32>
    %354 = vector.broadcast %353 : vector<1x256xf32> to vector<64x256xf32>
    %355 = arith.addf %351, %354 : vector<64x256xf32>
    %cst_46 = arith.constant 0.000000e+00 : f32
    %356 = vector.broadcast %cst_46 : f32 to vector<8x32xf32>
    %cst_47 = arith.constant 0.000000e+00 : f32
    %357 = vector.broadcast %cst_47 : f32 to vector<8x32xf32>
    %cst_48 = arith.constant 0.000000e+00 : f32
    %358 = vector.broadcast %cst_48 : f32 to vector<8x32xf32>
    %cst_49 = arith.constant 0.000000e+00 : f32
    %359 = vector.broadcast %cst_49 : f32 to vector<8x32xf32>
    %360 = tpu.concatenate %356, %358 in 1 : vector<8x32xf32>, vector<8x32xf32> -> vector<8x64xf32>
    %361 = arith.truncf %360 : vector<8x64xf32> to vector<8x64xbf16>
    %cst_50 = arith.constant dense<0.000000e+00> : vector<8x256xf32>
    %362 = tpu.matmul %361, %352, %cst_50 {dimension_numbers = #tpu.dot_dimension_numbers<[1], [0], [0], [1], [0, 0, 1, 1], [], []>} : vector<8x64xbf16>, vector<64x256xbf16>, vector<8x256xf32> -> vector<8x256xf32>
    %363 = vector.extract_strided_slice %355 {offsets = [0, 0], sizes = [8, 128], strides = [1, 1]} : vector<64x256xf32> to vector<8x128xf32>
    %364 = vector.extract_strided_slice %362 {offsets = [0, 0], sizes = [8, 128], strides = [1, 1]} : vector<8x256xf32> to vector<8x128xf32>
    %365 = arith.addf %363, %364 : vector<8x128xf32>
    %366 = arith.negf %365 : vector<8x128xf32>
    %367 = math.exp %366 : vector<8x128xf32>
    %cst_51 = arith.constant 1.000000e+00 : f32
    %368 = vector.broadcast %cst_51 : f32 to vector<8x128xf32>
    %369 = arith.addf %368, %367 : vector<8x128xf32>
    %370 = arith.divf %368, %369 : vector<8x128xf32>
    %371 = math.tanh %365 : vector<8x128xf32>
    %372 = vector.extract_strided_slice %370 {offsets = [0, 32], sizes = [8, 32], strides = [1, 1]} : vector<8x128xf32> to vector<8x32xf32>
    %373 = arith.mulf %372, %357 : vector<8x32xf32>
    %374 = vector.extract_strided_slice %370 {offsets = [0, 0], sizes = [8, 32], strides = [1, 1]} : vector<8x128xf32> to vector<8x32xf32>
    %375 = vector.extract_strided_slice %371 {offsets = [0, 64], sizes = [8, 32], strides = [1, 1]} : vector<8x128xf32> to vector<8x32xf32>
    %376 = arith.mulf %374, %375 : vector<8x32xf32>
    %377 = arith.addf %373, %376 : vector<8x32xf32>
    %378 = vector.extract_strided_slice %370 {offsets = [0, 96], sizes = [8, 32], strides = [1, 1]} : vector<8x128xf32> to vector<8x32xf32>
    %379 = math.tanh %377 : vector<8x32xf32>
    %380 = arith.mulf %378, %379 : vector<8x32xf32>
    %381 = vector.extract_strided_slice %355 {offsets = [56, 128], sizes = [8, 128], strides = [1, 1]} : vector<64x256xf32> to vector<8x128xf32>
    %382 = vector.extract_strided_slice %362 {offsets = [0, 128], sizes = [8, 128], strides = [1, 1]} : vector<8x256xf32> to vector<8x128xf32>
    %383 = arith.addf %381, %382 : vector<8x128xf32>
    %384 = arith.negf %383 : vector<8x128xf32>
    %385 = math.exp %384 : vector<8x128xf32>
    %cst_52 = arith.constant 1.000000e+00 : f32
    %386 = vector.broadcast %cst_52 : f32 to vector<8x128xf32>
    %387 = arith.addf %386, %385 : vector<8x128xf32>
    %388 = arith.divf %386, %387 : vector<8x128xf32>
    %389 = math.tanh %383 : vector<8x128xf32>
    %390 = vector.extract_strided_slice %388 {offsets = [0, 32], sizes = [8, 32], strides = [1, 1]} : vector<8x128xf32> to vector<8x32xf32>
    %391 = arith.mulf %390, %359 : vector<8x32xf32>
    %392 = vector.extract_strided_slice %388 {offsets = [0, 0], sizes = [8, 32], strides = [1, 1]} : vector<8x128xf32> to vector<8x32xf32>
    %393 = vector.extract_strided_slice %389 {offsets = [0, 64], sizes = [8, 32], strides = [1, 1]} : vector<8x128xf32> to vector<8x32xf32>
    %394 = arith.mulf %392, %393 : vector<8x32xf32>
    %395 = arith.addf %391, %394 : vector<8x32xf32>
    %396 = vector.extract_strided_slice %388 {offsets = [0, 96], sizes = [8, 32], strides = [1, 1]} : vector<8x128xf32> to vector<8x32xf32>
    %397 = math.tanh %395 : vector<8x32xf32>
    %398 = arith.mulf %396, %397 : vector<8x32xf32>
    %399 = tpu.concatenate %380, %398 in 1 : vector<8x32xf32>, vector<8x32xf32> -> vector<8x64xf32>
    %400 = arith.truncf %399 : vector<8x64xf32> to vector<8x64xbf16>
    %cst_53 = arith.constant dense<0.000000e+00> : vector<8x256xf32>
    %401 = tpu.matmul %400, %352, %cst_53 {dimension_numbers = #tpu.dot_dimension_numbers<[1], [0], [0], [1], [0, 0, 1, 1], [], []>} : vector<8x64xbf16>, vector<64x256xbf16>, vector<8x256xf32> -> vector<8x256xf32>
    %402 = vector.extract_strided_slice %355 {offsets = [8, 0], sizes = [8, 128], strides = [1, 1]} : vector<64x256xf32> to vector<8x128xf32>
    %403 = vector.extract_strided_slice %401 {offsets = [0, 0], sizes = [8, 128], strides = [1, 1]} : vector<8x256xf32> to vector<8x128xf32>
    %404 = arith.addf %402, %403 : vector<8x128xf32>
    %405 = arith.negf %404 : vector<8x128xf32>
    %406 = math.exp %405 : vector<8x128xf32>
    %cst_54 = arith.constant 1.000000e+00 : f32
    %407 = vector.broadcast %cst_54 : f32 to vector<8x128xf32>
    %408 = arith.addf %407, %406 : vector<8x128xf32>
    %409 = arith.divf %407, %408 : vector<8x128xf32>
    %410 = math.tanh %404 : vector<8x128xf32>
    %411 = vector.extract_strided_slice %409 {offsets = [0, 32], sizes = [8, 32], strides = [1, 1]} : vector<8x128xf32> to vector<8x32xf32>
    %412 = arith.mulf %411, %377 : vector<8x32xf32>
    %413 = vector.extract_strided_slice %409 {offsets = [0, 0], sizes = [8, 32], strides = [1, 1]} : vector<8x128xf32> to vector<8x32xf32>
    %414 = vector.extract_strided_slice %410 {offsets = [0, 64], sizes = [8, 32], strides = [1, 1]} : vector<8x128xf32> to vector<8x32xf32>
    %415 = arith.mulf %413, %414 : vector<8x32xf32>
    %416 = arith.addf %412, %415 : vector<8x32xf32>
    %417 = vector.extract_strided_slice %409 {offsets = [0, 96], sizes = [8, 32], strides = [1, 1]} : vector<8x128xf32> to vector<8x32xf32>
    %418 = math.tanh %416 : vector<8x32xf32>
    %419 = arith.mulf %417, %418 : vector<8x32xf32>
    %420 = vector.extract_strided_slice %355 {offsets = [48, 128], sizes = [8, 128], strides = [1, 1]} : vector<64x256xf32> to vector<8x128xf32>
    %421 = vector.extract_strided_slice %401 {offsets = [0, 128], sizes = [8, 128], strides = [1, 1]} : vector<8x256xf32> to vector<8x128xf32>
    %422 = arith.addf %420, %421 : vector<8x128xf32>
    %423 = arith.negf %422 : vector<8x128xf32>
    %424 = math.exp %423 : vector<8x128xf32>
    %cst_55 = arith.constant 1.000000e+00 : f32
    %425 = vector.broadcast %cst_55 : f32 to vector<8x128xf32>
    %426 = arith.addf %425, %424 : vector<8x128xf32>
    %427 = arith.divf %425, %426 : vector<8x128xf32>
    %428 = math.tanh %422 : vector<8x128xf32>
    %429 = vector.extract_strided_slice %427 {offsets = [0, 32], sizes = [8, 32], strides = [1, 1]} : vector<8x128xf32> to vector<8x32xf32>
    %430 = arith.mulf %429, %395 : vector<8x32xf32>
    %431 = vector.extract_strided_slice %427 {offsets = [0, 0], sizes = [8, 32], strides = [1, 1]} : vector<8x128xf32> to vector<8x32xf32>
    %432 = vector.extract_strided_slice %428 {offsets = [0, 64], sizes = [8, 32], strides = [1, 1]} : vector<8x128xf32> to vector<8x32xf32>
    %433 = arith.mulf %431, %432 : vector<8x32xf32>
    %434 = arith.addf %430, %433 : vector<8x32xf32>
    %435 = vector.extract_strided_slice %427 {offsets = [0, 96], sizes = [8, 32], strides = [1, 1]} : vector<8x128xf32> to vector<8x32xf32>
    %436 = math.tanh %434 : vector<8x32xf32>
    %437 = arith.mulf %435, %436 : vector<8x32xf32>
    %438 = tpu.concatenate %419, %437 in 1 : vector<8x32xf32>, vector<8x32xf32> -> vector<8x64xf32>
    %439 = arith.truncf %438 : vector<8x64xf32> to vector<8x64xbf16>
    %cst_56 = arith.constant dense<0.000000e+00> : vector<8x256xf32>
    %440 = tpu.matmul %439, %352, %cst_56 {dimension_numbers = #tpu.dot_dimension_numbers<[1], [0], [0], [1], [0, 0, 1, 1], [], []>} : vector<8x64xbf16>, vector<64x256xbf16>, vector<8x256xf32> -> vector<8x256xf32>
    %441 = vector.extract_strided_slice %355 {offsets = [16, 0], sizes = [8, 128], strides = [1, 1]} : vector<64x256xf32> to vector<8x128xf32>
    %442 = vector.extract_strided_slice %440 {offsets = [0, 0], sizes = [8, 128], strides = [1, 1]} : vector<8x256xf32> to vector<8x128xf32>
    %443 = arith.addf %441, %442 : vector<8x128xf32>
    %444 = arith.negf %443 : vector<8x128xf32>
    %445 = math.exp %444 : vector<8x128xf32>
    %cst_57 = arith.constant 1.000000e+00 : f32
    %446 = vector.broadcast %cst_57 : f32 to vector<8x128xf32>
    %447 = arith.addf %446, %445 : vector<8x128xf32>
    %448 = arith.divf %446, %447 : vector<8x128xf32>
    %449 = math.tanh %443 : vector<8x128xf32>
    %450 = vector.extract_strided_slice %448 {offsets = [0, 32], sizes = [8, 32], strides = [1, 1]} : vector<8x128xf32> to vector<8x32xf32>
    %451 = arith.mulf %450, %416 : vector<8x32xf32>
    %452 = vector.extract_strided_slice %448 {offsets = [0, 0], sizes = [8, 32], strides = [1, 1]} : vector<8x128xf32> to vector<8x32xf32>
    %453 = vector.extract_strided_slice %449 {offsets = [0, 64], sizes = [8, 32], strides = [1, 1]} : vector<8x128xf32> to vector<8x32xf32>
    %454 = arith.mulf %452, %453 : vector<8x32xf32>
    %455 = arith.addf %451, %454 : vector<8x32xf32>
    %456 = vector.extract_strided_slice %448 {offsets = [0, 96], sizes = [8, 32], strides = [1, 1]} : vector<8x128xf32> to vector<8x32xf32>
    %457 = math.tanh %455 : vector<8x32xf32>
    %458 = arith.mulf %456, %457 : vector<8x32xf32>
    %459 = vector.extract_strided_slice %355 {offsets = [40, 128], sizes = [8, 128], strides = [1, 1]} : vector<64x256xf32> to vector<8x128xf32>
    %460 = vector.extract_strided_slice %440 {offsets = [0, 128], sizes = [8, 128], strides = [1, 1]} : vector<8x256xf32> to vector<8x128xf32>
    %461 = arith.addf %459, %460 : vector<8x128xf32>
    %462 = arith.negf %461 : vector<8x128xf32>
    %463 = math.exp %462 : vector<8x128xf32>
    %cst_58 = arith.constant 1.000000e+00 : f32
    %464 = vector.broadcast %cst_58 : f32 to vector<8x128xf32>
    %465 = arith.addf %464, %463 : vector<8x128xf32>
    %466 = arith.divf %464, %465 : vector<8x128xf32>
    %467 = math.tanh %461 : vector<8x128xf32>
    %468 = vector.extract_strided_slice %466 {offsets = [0, 32], sizes = [8, 32], strides = [1, 1]} : vector<8x128xf32> to vector<8x32xf32>
    %469 = arith.mulf %468, %434 : vector<8x32xf32>
    %470 = vector.extract_strided_slice %466 {offsets = [0, 0], sizes = [8, 32], strides = [1, 1]} : vector<8x128xf32> to vector<8x32xf32>
    %471 = vector.extract_strided_slice %467 {offsets = [0, 64], sizes = [8, 32], strides = [1, 1]} : vector<8x128xf32> to vector<8x32xf32>
    %472 = arith.mulf %470, %471 : vector<8x32xf32>
    %473 = arith.addf %469, %472 : vector<8x32xf32>
    %474 = vector.extract_strided_slice %466 {offsets = [0, 96], sizes = [8, 32], strides = [1, 1]} : vector<8x128xf32> to vector<8x32xf32>
    %475 = math.tanh %473 : vector<8x32xf32>
    %476 = arith.mulf %474, %475 : vector<8x32xf32>
    %477 = tpu.concatenate %458, %476 in 1 : vector<8x32xf32>, vector<8x32xf32> -> vector<8x64xf32>
    %478 = arith.truncf %477 : vector<8x64xf32> to vector<8x64xbf16>
    %cst_59 = arith.constant dense<0.000000e+00> : vector<8x256xf32>
    %479 = tpu.matmul %478, %352, %cst_59 {dimension_numbers = #tpu.dot_dimension_numbers<[1], [0], [0], [1], [0, 0, 1, 1], [], []>} : vector<8x64xbf16>, vector<64x256xbf16>, vector<8x256xf32> -> vector<8x256xf32>
    %480 = vector.extract_strided_slice %355 {offsets = [24, 0], sizes = [8, 128], strides = [1, 1]} : vector<64x256xf32> to vector<8x128xf32>
    %481 = vector.extract_strided_slice %479 {offsets = [0, 0], sizes = [8, 128], strides = [1, 1]} : vector<8x256xf32> to vector<8x128xf32>
    %482 = arith.addf %480, %481 : vector<8x128xf32>
    %483 = arith.negf %482 : vector<8x128xf32>
    %484 = math.exp %483 : vector<8x128xf32>
    %cst_60 = arith.constant 1.000000e+00 : f32
    %485 = vector.broadcast %cst_60 : f32 to vector<8x128xf32>
    %486 = arith.addf %485, %484 : vector<8x128xf32>
    %487 = arith.divf %485, %486 : vector<8x128xf32>
    %488 = math.tanh %482 : vector<8x128xf32>
    %489 = vector.extract_strided_slice %487 {offsets = [0, 32], sizes = [8, 32], strides = [1, 1]} : vector<8x128xf32> to vector<8x32xf32>
    %490 = arith.mulf %489, %455 : vector<8x32xf32>
    %491 = vector.extract_strided_slice %487 {offsets = [0, 0], sizes = [8, 32], strides = [1, 1]} : vector<8x128xf32> to vector<8x32xf32>
    %492 = vector.extract_strided_slice %488 {offsets = [0, 64], sizes = [8, 32], strides = [1, 1]} : vector<8x128xf32> to vector<8x32xf32>
    %493 = arith.mulf %491, %492 : vector<8x32xf32>
    %494 = arith.addf %490, %493 : vector<8x32xf32>
    %495 = vector.extract_strided_slice %487 {offsets = [0, 96], sizes = [8, 32], strides = [1, 1]} : vector<8x128xf32> to vector<8x32xf32>
    %496 = math.tanh %494 : vector<8x32xf32>
    %497 = arith.mulf %495, %496 : vector<8x32xf32>
    %498 = vector.extract_strided_slice %355 {offsets = [32, 128], sizes = [8, 128], strides = [1, 1]} : vector<64x256xf32> to vector<8x128xf32>
    %499 = vector.extract_strided_slice %479 {offsets = [0, 128], sizes = [8, 128], strides = [1, 1]} : vector<8x256xf32> to vector<8x128xf32>
    %500 = arith.addf %498, %499 : vector<8x128xf32>
    %501 = arith.negf %500 : vector<8x128xf32>
    %502 = math.exp %501 : vector<8x128xf32>
    %cst_61 = arith.constant 1.000000e+00 : f32
    %503 = vector.broadcast %cst_61 : f32 to vector<8x128xf32>
    %504 = arith.addf %503, %502 : vector<8x128xf32>
    %505 = arith.divf %503, %504 : vector<8x128xf32>
    %506 = math.tanh %500 : vector<8x128xf32>
    %507 = vector.extract_strided_slice %505 {offsets = [0, 32], sizes = [8, 32], strides = [1, 1]} : vector<8x128xf32> to vector<8x32xf32>
    %508 = arith.mulf %507, %473 : vector<8x32xf32>
    %509 = vector.extract_strided_slice %505 {offsets = [0, 0], sizes = [8, 32], strides = [1, 1]} : vector<8x128xf32> to vector<8x32xf32>
    %510 = vector.extract_strided_slice %506 {offsets = [0, 64], sizes = [8, 32], strides = [1, 1]} : vector<8x128xf32> to vector<8x32xf32>
    %511 = arith.mulf %509, %510 : vector<8x32xf32>
    %512 = arith.addf %508, %511 : vector<8x32xf32>
    %513 = vector.extract_strided_slice %505 {offsets = [0, 96], sizes = [8, 32], strides = [1, 1]} : vector<8x128xf32> to vector<8x32xf32>
    %514 = math.tanh %512 : vector<8x32xf32>
    %515 = arith.mulf %513, %514 : vector<8x32xf32>
    %516 = tpu.concatenate %497, %515 in 1 : vector<8x32xf32>, vector<8x32xf32> -> vector<8x64xf32>
    %517 = arith.truncf %516 : vector<8x64xf32> to vector<8x64xbf16>
    %cst_62 = arith.constant dense<0.000000e+00> : vector<8x256xf32>
    %518 = tpu.matmul %517, %352, %cst_62 {dimension_numbers = #tpu.dot_dimension_numbers<[1], [0], [0], [1], [0, 0, 1, 1], [], []>} : vector<8x64xbf16>, vector<64x256xbf16>, vector<8x256xf32> -> vector<8x256xf32>
    %519 = vector.extract_strided_slice %355 {offsets = [32, 0], sizes = [8, 128], strides = [1, 1]} : vector<64x256xf32> to vector<8x128xf32>
    %520 = vector.extract_strided_slice %518 {offsets = [0, 0], sizes = [8, 128], strides = [1, 1]} : vector<8x256xf32> to vector<8x128xf32>
    %521 = arith.addf %519, %520 : vector<8x128xf32>
    %522 = arith.negf %521 : vector<8x128xf32>
    %523 = math.exp %522 : vector<8x128xf32>
    %cst_63 = arith.constant 1.000000e+00 : f32
    %524 = vector.broadcast %cst_63 : f32 to vector<8x128xf32>
    %525 = arith.addf %524, %523 : vector<8x128xf32>
    %526 = arith.divf %524, %525 : vector<8x128xf32>
    %527 = math.tanh %521 : vector<8x128xf32>
    %528 = vector.extract_strided_slice %526 {offsets = [0, 32], sizes = [8, 32], strides = [1, 1]} : vector<8x128xf32> to vector<8x32xf32>
    %529 = arith.mulf %528, %494 : vector<8x32xf32>
    %530 = vector.extract_strided_slice %526 {offsets = [0, 0], sizes = [8, 32], strides = [1, 1]} : vector<8x128xf32> to vector<8x32xf32>
    %531 = vector.extract_strided_slice %527 {offsets = [0, 64], sizes = [8, 32], strides = [1, 1]} : vector<8x128xf32> to vector<8x32xf32>
    %532 = arith.mulf %530, %531 : vector<8x32xf32>
    %533 = arith.addf %529, %532 : vector<8x32xf32>
    %534 = vector.extract_strided_slice %526 {offsets = [0, 96], sizes = [8, 32], strides = [1, 1]} : vector<8x128xf32> to vector<8x32xf32>
    %535 = math.tanh %533 : vector<8x32xf32>
    %536 = arith.mulf %534, %535 : vector<8x32xf32>
    %537 = vector.extract_strided_slice %355 {offsets = [24, 128], sizes = [8, 128], strides = [1, 1]} : vector<64x256xf32> to vector<8x128xf32>
    %538 = vector.extract_strided_slice %518 {offsets = [0, 128], sizes = [8, 128], strides = [1, 1]} : vector<8x256xf32> to vector<8x128xf32>
    %539 = arith.addf %537, %538 : vector<8x128xf32>
    %540 = arith.negf %539 : vector<8x128xf32>
    %541 = math.exp %540 : vector<8x128xf32>
    %cst_64 = arith.constant 1.000000e+00 : f32
    %542 = vector.broadcast %cst_64 : f32 to vector<8x128xf32>
    %543 = arith.addf %542, %541 : vector<8x128xf32>
    %544 = arith.divf %542, %543 : vector<8x128xf32>
    %545 = math.tanh %539 : vector<8x128xf32>
    %546 = vector.extract_strided_slice %544 {offsets = [0, 32], sizes = [8, 32], strides = [1, 1]} : vector<8x128xf32> to vector<8x32xf32>
    %547 = arith.mulf %546, %512 : vector<8x32xf32>
    %548 = vector.extract_strided_slice %544 {offsets = [0, 0], sizes = [8, 32], strides = [1, 1]} : vector<8x128xf32> to vector<8x32xf32>
    %549 = vector.extract_strided_slice %545 {offsets = [0, 64], sizes = [8, 32], strides = [1, 1]} : vector<8x128xf32> to vector<8x32xf32>
    %550 = arith.mulf %548, %549 : vector<8x32xf32>
    %551 = arith.addf %547, %550 : vector<8x32xf32>
    %552 = vector.extract_strided_slice %544 {offsets = [0, 96], sizes = [8, 32], strides = [1, 1]} : vector<8x128xf32> to vector<8x32xf32>
    %553 = math.tanh %551 : vector<8x32xf32>
    %554 = arith.mulf %552, %553 : vector<8x32xf32>
    %555 = tpu.concatenate %536, %554 in 1 : vector<8x32xf32>, vector<8x32xf32> -> vector<8x64xf32>
    %556 = arith.truncf %555 : vector<8x64xf32> to vector<8x64xbf16>
    %cst_65 = arith.constant dense<0.000000e+00> : vector<8x256xf32>
    %557 = tpu.matmul %556, %352, %cst_65 {dimension_numbers = #tpu.dot_dimension_numbers<[1], [0], [0], [1], [0, 0, 1, 1], [], []>} : vector<8x64xbf16>, vector<64x256xbf16>, vector<8x256xf32> -> vector<8x256xf32>
    %558 = vector.extract_strided_slice %355 {offsets = [40, 0], sizes = [8, 128], strides = [1, 1]} : vector<64x256xf32> to vector<8x128xf32>
    %559 = vector.extract_strided_slice %557 {offsets = [0, 0], sizes = [8, 128], strides = [1, 1]} : vector<8x256xf32> to vector<8x128xf32>
    %560 = arith.addf %558, %559 : vector<8x128xf32>
    %561 = arith.negf %560 : vector<8x128xf32>
    %562 = math.exp %561 : vector<8x128xf32>
    %cst_66 = arith.constant 1.000000e+00 : f32
    %563 = vector.broadcast %cst_66 : f32 to vector<8x128xf32>
    %564 = arith.addf %563, %562 : vector<8x128xf32>
    %565 = arith.divf %563, %564 : vector<8x128xf32>
    %566 = math.tanh %560 : vector<8x128xf32>
    %567 = vector.extract_strided_slice %565 {offsets = [0, 32], sizes = [8, 32], strides = [1, 1]} : vector<8x128xf32> to vector<8x32xf32>
    %568 = arith.mulf %567, %533 : vector<8x32xf32>
    %569 = vector.extract_strided_slice %565 {offsets = [0, 0], sizes = [8, 32], strides = [1, 1]} : vector<8x128xf32> to vector<8x32xf32>
    %570 = vector.extract_strided_slice %566 {offsets = [0, 64], sizes = [8, 32], strides = [1, 1]} : vector<8x128xf32> to vector<8x32xf32>
    %571 = arith.mulf %569, %570 : vector<8x32xf32>
    %572 = arith.addf %568, %571 : vector<8x32xf32>
    %573 = vector.extract_strided_slice %565 {offsets = [0, 96], sizes = [8, 32], strides = [1, 1]} : vector<8x128xf32> to vector<8x32xf32>
    %574 = math.tanh %572 : vector<8x32xf32>
    %575 = arith.mulf %573, %574 : vector<8x32xf32>
    %576 = vector.extract_strided_slice %355 {offsets = [16, 128], sizes = [8, 128], strides = [1, 1]} : vector<64x256xf32> to vector<8x128xf32>
    %577 = vector.extract_strided_slice %557 {offsets = [0, 128], sizes = [8, 128], strides = [1, 1]} : vector<8x256xf32> to vector<8x128xf32>
    %578 = arith.addf %576, %577 : vector<8x128xf32>
    %579 = arith.negf %578 : vector<8x128xf32>
    %580 = math.exp %579 : vector<8x128xf32>
    %cst_67 = arith.constant 1.000000e+00 : f32
    %581 = vector.broadcast %cst_67 : f32 to vector<8x128xf32>
    %582 = arith.addf %581, %580 : vector<8x128xf32>
    %583 = arith.divf %581, %582 : vector<8x128xf32>
    %584 = math.tanh %578 : vector<8x128xf32>
    %585 = vector.extract_strided_slice %583 {offsets = [0, 32], sizes = [8, 32], strides = [1, 1]} : vector<8x128xf32> to vector<8x32xf32>
    %586 = arith.mulf %585, %551 : vector<8x32xf32>
    %587 = vector.extract_strided_slice %583 {offsets = [0, 0], sizes = [8, 32], strides = [1, 1]} : vector<8x128xf32> to vector<8x32xf32>
    %588 = vector.extract_strided_slice %584 {offsets = [0, 64], sizes = [8, 32], strides = [1, 1]} : vector<8x128xf32> to vector<8x32xf32>
    %589 = arith.mulf %587, %588 : vector<8x32xf32>
    %590 = arith.addf %586, %589 : vector<8x32xf32>
    %591 = vector.extract_strided_slice %583 {offsets = [0, 96], sizes = [8, 32], strides = [1, 1]} : vector<8x128xf32> to vector<8x32xf32>
    %592 = math.tanh %590 : vector<8x32xf32>
    %593 = arith.mulf %591, %592 : vector<8x32xf32>
    %594 = tpu.concatenate %575, %593 in 1 : vector<8x32xf32>, vector<8x32xf32> -> vector<8x64xf32>
    %595 = arith.truncf %594 : vector<8x64xf32> to vector<8x64xbf16>
    %cst_68 = arith.constant dense<0.000000e+00> : vector<8x256xf32>
    %596 = tpu.matmul %595, %352, %cst_68 {dimension_numbers = #tpu.dot_dimension_numbers<[1], [0], [0], [1], [0, 0, 1, 1], [], []>} : vector<8x64xbf16>, vector<64x256xbf16>, vector<8x256xf32> -> vector<8x256xf32>
    %597 = vector.extract_strided_slice %355 {offsets = [48, 0], sizes = [8, 128], strides = [1, 1]} : vector<64x256xf32> to vector<8x128xf32>
    %598 = vector.extract_strided_slice %596 {offsets = [0, 0], sizes = [8, 128], strides = [1, 1]} : vector<8x256xf32> to vector<8x128xf32>
    %599 = arith.addf %597, %598 : vector<8x128xf32>
    %600 = arith.negf %599 : vector<8x128xf32>
    %601 = math.exp %600 : vector<8x128xf32>
    %cst_69 = arith.constant 1.000000e+00 : f32
    %602 = vector.broadcast %cst_69 : f32 to vector<8x128xf32>
    %603 = arith.addf %602, %601 : vector<8x128xf32>
    %604 = arith.divf %602, %603 : vector<8x128xf32>
    %605 = math.tanh %599 : vector<8x128xf32>
    %606 = vector.extract_strided_slice %604 {offsets = [0, 32], sizes = [8, 32], strides = [1, 1]} : vector<8x128xf32> to vector<8x32xf32>
    %607 = arith.mulf %606, %572 : vector<8x32xf32>
    %608 = vector.extract_strided_slice %604 {offsets = [0, 0], sizes = [8, 32], strides = [1, 1]} : vector<8x128xf32> to vector<8x32xf32>
    %609 = vector.extract_strided_slice %605 {offsets = [0, 64], sizes = [8, 32], strides = [1, 1]} : vector<8x128xf32> to vector<8x32xf32>
    %610 = arith.mulf %608, %609 : vector<8x32xf32>
    %611 = arith.addf %607, %610 : vector<8x32xf32>
    %612 = vector.extract_strided_slice %604 {offsets = [0, 96], sizes = [8, 32], strides = [1, 1]} : vector<8x128xf32> to vector<8x32xf32>
    %613 = math.tanh %611 : vector<8x32xf32>
    %614 = arith.mulf %612, %613 : vector<8x32xf32>
    %615 = vector.extract_strided_slice %355 {offsets = [8, 128], sizes = [8, 128], strides = [1, 1]} : vector<64x256xf32> to vector<8x128xf32>
    %616 = vector.extract_strided_slice %596 {offsets = [0, 128], sizes = [8, 128], strides = [1, 1]} : vector<8x256xf32> to vector<8x128xf32>
    %617 = arith.addf %615, %616 : vector<8x128xf32>
    %618 = arith.negf %617 : vector<8x128xf32>
    %619 = math.exp %618 : vector<8x128xf32>
    %cst_70 = arith.constant 1.000000e+00 : f32
    %620 = vector.broadcast %cst_70 : f32 to vector<8x128xf32>
    %621 = arith.addf %620, %619 : vector<8x128xf32>
    %622 = arith.divf %620, %621 : vector<8x128xf32>
    %623 = math.tanh %617 : vector<8x128xf32>
    %624 = vector.extract_strided_slice %622 {offsets = [0, 32], sizes = [8, 32], strides = [1, 1]} : vector<8x128xf32> to vector<8x32xf32>
    %625 = arith.mulf %624, %590 : vector<8x32xf32>
    %626 = vector.extract_strided_slice %622 {offsets = [0, 0], sizes = [8, 32], strides = [1, 1]} : vector<8x128xf32> to vector<8x32xf32>
    %627 = vector.extract_strided_slice %623 {offsets = [0, 64], sizes = [8, 32], strides = [1, 1]} : vector<8x128xf32> to vector<8x32xf32>
    %628 = arith.mulf %626, %627 : vector<8x32xf32>
    %629 = arith.addf %625, %628 : vector<8x32xf32>
    %630 = vector.extract_strided_slice %622 {offsets = [0, 96], sizes = [8, 32], strides = [1, 1]} : vector<8x128xf32> to vector<8x32xf32>
    %631 = math.tanh %629 : vector<8x32xf32>
    %632 = arith.mulf %630, %631 : vector<8x32xf32>
    %633 = tpu.concatenate %614, %632 in 1 : vector<8x32xf32>, vector<8x32xf32> -> vector<8x64xf32>
    %634 = arith.truncf %633 : vector<8x64xf32> to vector<8x64xbf16>
    %cst_71 = arith.constant dense<0.000000e+00> : vector<8x256xf32>
    %635 = tpu.matmul %634, %352, %cst_71 {dimension_numbers = #tpu.dot_dimension_numbers<[1], [0], [0], [1], [0, 0, 1, 1], [], []>} : vector<8x64xbf16>, vector<64x256xbf16>, vector<8x256xf32> -> vector<8x256xf32>
    %636 = vector.extract_strided_slice %355 {offsets = [56, 0], sizes = [8, 128], strides = [1, 1]} : vector<64x256xf32> to vector<8x128xf32>
    %637 = vector.extract_strided_slice %635 {offsets = [0, 0], sizes = [8, 128], strides = [1, 1]} : vector<8x256xf32> to vector<8x128xf32>
    %638 = arith.addf %636, %637 : vector<8x128xf32>
    %639 = arith.negf %638 : vector<8x128xf32>
    %640 = math.exp %639 : vector<8x128xf32>
    %cst_72 = arith.constant 1.000000e+00 : f32
    %641 = vector.broadcast %cst_72 : f32 to vector<8x128xf32>
    %642 = arith.addf %641, %640 : vector<8x128xf32>
    %643 = arith.divf %641, %642 : vector<8x128xf32>
    %644 = math.tanh %638 : vector<8x128xf32>
    %645 = vector.extract_strided_slice %643 {offsets = [0, 32], sizes = [8, 32], strides = [1, 1]} : vector<8x128xf32> to vector<8x32xf32>
    %646 = arith.mulf %645, %611 : vector<8x32xf32>
    %647 = vector.extract_strided_slice %643 {offsets = [0, 0], sizes = [8, 32], strides = [1, 1]} : vector<8x128xf32> to vector<8x32xf32>
    %648 = vector.extract_strided_slice %644 {offsets = [0, 64], sizes = [8, 32], strides = [1, 1]} : vector<8x128xf32> to vector<8x32xf32>
    %649 = arith.mulf %647, %648 : vector<8x32xf32>
    %650 = arith.addf %646, %649 : vector<8x32xf32>
    %651 = vector.extract_strided_slice %643 {offsets = [0, 96], sizes = [8, 32], strides = [1, 1]} : vector<8x128xf32> to vector<8x32xf32>
    %652 = math.tanh %650 : vector<8x32xf32>
    %653 = arith.mulf %651, %652 : vector<8x32xf32>
    %654 = vector.extract_strided_slice %355 {offsets = [0, 128], sizes = [8, 128], strides = [1, 1]} : vector<64x256xf32> to vector<8x128xf32>
    %655 = vector.extract_strided_slice %635 {offsets = [0, 128], sizes = [8, 128], strides = [1, 1]} : vector<8x256xf32> to vector<8x128xf32>
    %656 = arith.addf %654, %655 : vector<8x128xf32>
    %657 = arith.negf %656 : vector<8x128xf32>
    %658 = math.exp %657 : vector<8x128xf32>
    %cst_73 = arith.constant 1.000000e+00 : f32
    %659 = vector.broadcast %cst_73 : f32 to vector<8x128xf32>
    %660 = arith.addf %659, %658 : vector<8x128xf32>
    %661 = arith.divf %659, %660 : vector<8x128xf32>
    %662 = math.tanh %656 : vector<8x128xf32>
    %663 = vector.extract_strided_slice %661 {offsets = [0, 32], sizes = [8, 32], strides = [1, 1]} : vector<8x128xf32> to vector<8x32xf32>
    %664 = arith.mulf %663, %629 : vector<8x32xf32>
    %665 = vector.extract_strided_slice %661 {offsets = [0, 0], sizes = [8, 32], strides = [1, 1]} : vector<8x128xf32> to vector<8x32xf32>
    %666 = vector.extract_strided_slice %662 {offsets = [0, 64], sizes = [8, 32], strides = [1, 1]} : vector<8x128xf32> to vector<8x32xf32>
    %667 = arith.mulf %665, %666 : vector<8x32xf32>
    %668 = arith.addf %664, %667 : vector<8x32xf32>
    %669 = vector.extract_strided_slice %661 {offsets = [0, 96], sizes = [8, 32], strides = [1, 1]} : vector<8x128xf32> to vector<8x32xf32>
    %670 = math.tanh %668 : vector<8x32xf32>
    %671 = arith.mulf %669, %670 : vector<8x32xf32>
    %672 = vector.shape_cast %380 : vector<8x32xf32> to vector<1x8x32xf32>
    %673 = vector.shape_cast %419 : vector<8x32xf32> to vector<1x8x32xf32>
    %674 = vector.shape_cast %458 : vector<8x32xf32> to vector<1x8x32xf32>
    %675 = vector.shape_cast %497 : vector<8x32xf32> to vector<1x8x32xf32>
    %676 = vector.shape_cast %536 : vector<8x32xf32> to vector<1x8x32xf32>
    %677 = vector.shape_cast %575 : vector<8x32xf32> to vector<1x8x32xf32>
    %678 = vector.shape_cast %614 : vector<8x32xf32> to vector<1x8x32xf32>
    %679 = vector.shape_cast %653 : vector<8x32xf32> to vector<1x8x32xf32>
    %680 = tpu.concatenate %672, %673, %674, %675, %676, %677, %678, %679 in 0 : vector<1x8x32xf32>, vector<1x8x32xf32>, vector<1x8x32xf32>, vector<1x8x32xf32>, vector<1x8x32xf32>, vector<1x8x32xf32>, vector<1x8x32xf32>, vector<1x8x32xf32> -> vector<8x8x32xf32>
    %681 = vector.shape_cast %671 : vector<8x32xf32> to vector<1x8x32xf32>
    %682 = vector.shape_cast %632 : vector<8x32xf32> to vector<1x8x32xf32>
    %683 = vector.shape_cast %593 : vector<8x32xf32> to vector<1x8x32xf32>
    %684 = vector.shape_cast %554 : vector<8x32xf32> to vector<1x8x32xf32>
    %685 = vector.shape_cast %515 : vector<8x32xf32> to vector<1x8x32xf32>
    %686 = vector.shape_cast %476 : vector<8x32xf32> to vector<1x8x32xf32>
    %687 = vector.shape_cast %437 : vector<8x32xf32> to vector<1x8x32xf32>
    %688 = vector.shape_cast %398 : vector<8x32xf32> to vector<1x8x32xf32>
    %689 = tpu.concatenate %681, %682, %683, %684, %685, %686, %687, %688 in 0 : vector<1x8x32xf32>, vector<1x8x32xf32>, vector<1x8x32xf32>, vector<1x8x32xf32>, vector<1x8x32xf32>, vector<1x8x32xf32>, vector<1x8x32xf32>, vector<1x8x32xf32> -> vector<8x8x32xf32>
    %690 = tpu.concatenate %680, %689 in 2 : vector<8x8x32xf32>, vector<8x8x32xf32> -> vector<8x8x64xf32>
    %c0_74 = arith.constant 0 : index
    %c0_75 = arith.constant 0 : index
    %c0_76 = arith.constant 0 : index
    %691 = vector.load %arg8[%c0_74, %c0_75, %c0_76] : memref<8x8x64xf32, #tpu.memory_space<vmem>>, vector<8x8x64xf32>
    tpu.vector_store %arg8[%c0_74, %c0_75, %c0_76], %690 {strides = array<i32>} : memref<8x8x64xf32, #tpu.memory_space<vmem>>, vector<8x8x64xf32>,
    return
  }
}

</mosaic_0001>

<llo_original>
// kernel: a_call__.1
$region0: #{a_call__.1}
  #allocation0 [shape = 'u32[]', space=smem, size = 0x4, offset = 0x4, fixed_abs, tag = 'smem constant byte address 0x4 - core index']
  #allocation1 [shape = 'u32[144,128]{1,0:T(1,128)}', space=vmem, size = 0x12000, scoped, tag = 'internal scratch']
  %s0 = inlined_call_operand.vmem [shape: f32[8,8,32], index: 0, kind: input, shape index: {}]
  %s1 = inlined_call_operand.vmem [shape: bf16[32,256], index: 1, kind: input, shape index: {}]
  %s2 = inlined_call_operand.vmem [shape: bf16[64,256], index: 2, kind: input, shape index: {}]
  %s3 = inlined_call_operand.vmem [shape: f32[1,256], index: 3, kind: input, shape index: {}]
  %s4 = inlined_call_operand.vmem [shape: bf16[32,256], index: 4, kind: input, shape index: {}]
  %s5 = inlined_call_operand.vmem [shape: bf16[32,256], index: 5, kind: input, shape index: {}]
  %s6 = inlined_call_operand.vmem [shape: bf16[64,256], index: 6, kind: input, shape index: {}]
  %s7 = inlined_call_operand.vmem [shape: f32[1,256], index: 7, kind: input, shape index: {}]
  %s8 = inlined_call_operand.vmem [shape: f32[8,8,64], index: 8, kind: output, shape index: {}]
  %s9 = sld [smem:[#allocation0]]
  $region42: #{a_call__.1} parent=0
    _
  %s11 = ssub.s32 1, %s9
  %s12 = scalar_select 0, %s11, %s9
  // Predicated region
  $region2: #{a_call__.1} parent=0 // pred_check
    _
  $region3: #{a_call__.1} parent=0 // pred_check_branch
    %14 = sbr.rel (0) target = $region5
  $region4: #{a_call__.1} parent=0 // pred_region
    _
  $region5: #{a_call__.1} parent=0 // pred_fallthru
    _
  // Predicated region
  $region6: #{a_call__.1} parent=0 // pred_check
    _
  $region7: #{a_call__.1} parent=0 // pred_check_branch
    %16 = sbr.rel (0) target = $region9
  $region8: #{a_call__.1} parent=0 // pred_region
    _
  $region9: #{a_call__.1} parent=0 // pred_fallthru
    _
  // Predicated region
  $region10: #{a_call__.1} parent=0 // pred_check
    _
  $region11: #{a_call__.1} parent=0 // pred_check_branch
    %18 = sbr.rel (0) target = $region13
  $region12: #{a_call__.1} parent=0 // pred_region
    _
  $region13: #{a_call__.1} parent=0 // pred_fallthru
    _
  // Predicated region
  $region14: #{a_call__.1} parent=0 // pred_check
    _
  $region15: #{a_call__.1} parent=0 // pred_check_branch
    %20 = sbr.rel (0) target = $region17
  $region16: #{a_call__.1} parent=0 // pred_region
    _
  $region17: #{a_call__.1} parent=0 // pred_fallthru
    _
  // Predicated region
  $region18: #{a_call__.1} parent=0 // pred_check
    _
  $region19: #{a_call__.1} parent=0 // pred_check_branch
    %22 = sbr.rel (0) target = $region21
  $region20: #{a_call__.1} parent=0 // pred_region
    _
  $region21: #{a_call__.1} parent=0 // pred_fallthru
    _
  // Predicated region
  $region22: #{a_call__.1} parent=0 // pred_check
    _
  $region23: #{a_call__.1} parent=0 // pred_check_branch
    %24 = sbr.rel (0) target = $region25
  $region24: #{a_call__.1} parent=0 // pred_region
    _
  $region25: #{a_call__.1} parent=0 // pred_fallthru
    _
  // Predicated region
  $region26: #{a_call__.1} parent=0 // pred_check
    _
  $region27: #{a_call__.1} parent=0 // pred_check_branch
    %26 = sbr.rel (0) target = $region29
  $region28: #{a_call__.1} parent=0 // pred_region
    _
  $region29: #{a_call__.1} parent=0 // pred_fallthru
    _
  // Predicated region
  $region30: #{a_call__.1} parent=0 // pred_check
    _
  $region31: #{a_call__.1} parent=0 // pred_check_branch
    %28 = sbr.rel (0) target = $region33
  $region32: #{a_call__.1} parent=0 // pred_region
    _
  $region33: #{a_call__.1} parent=0 // pred_fallthru
    _
  %v30 = vld [vmem:[%s0] sm:$0xff]
  %v31 = vld [vmem:[%s0 + $0x8] sm:$0xff]
  %v32 = vld [vmem:[%s0 + $0x10] sm:$0xff]
  %v33 = vld [vmem:[%s0 + $0x18] sm:$0xff]
  %v34 = vld [vmem:[%s0 + $0x20] sm:$0xff]
  %v35 = vld [vmem:[%s0 + $0x28] sm:$0xff]
  %v36 = vld [vmem:[%s0 + $0x30] sm:$0xff]
  %v37 = vld [vmem:[%s0 + $0x38] sm:$0xff]
  %v38 = vld [vmem:[%s1] sm:$0xff]
  %v39 = vld [vmem:[%s1 + $0x8] sm:$0xff]
  %v40 = vld [vmem:[%s1 + $0x10] sm:$0xff]
  %v41 = vld [vmem:[%s1 + $0x18] sm:$0xff]
  %v42 = vpack.c.bf16 %v31, %v30
  %v43 = vpack.c.bf16 %v33, %v32
  %v44 = vpack.c.bf16 %v35, %v34
  %v45 = vpack.c.bf16 %v37, %v36
  %v46 = vld [vmem:[%s2] sm:$0xff]
  %v47 = vld [vmem:[%s2 + $0x8] sm:$0xff]
  %v48 = vld [vmem:[%s2 + $0x10] sm:$0xff]
  %v49 = vld [vmem:[%s2 + $0x18] sm:$0xff]
  %v50 = vld [vmem:[%s2 + $0x20] sm:$0xff]
  %v51 = vld [vmem:[%s2 + $0x28] sm:$0xff]
  %v52 = vld [vmem:[%s2 + $0x30] sm:$0xff]
  %v53 = vld [vmem:[%s2 + $0x38] sm:$0xff]
  %v54 = vld [vmem:[%s3] sm:$0x3]
  %v56 = vlaneseq
  %v57 = vshrl.u32 %v56, 7
  %v58 = vsub.s32 0, %v57
  %v59 = vrot.slane %v54, %v58
  %v60 = vlaneseq
  %v61 = vshrl.u32 %v60, 7
  %v62 = vsub.s32 1, %v61
  %v63 = vrot.slane %v54, %v62
  %v70 = vunpack.c.l.b16 %v38
  %v71 = vunpack.c.h.b16 %v38
  %v72 = vunpack.c.l.b16 %v39
  %v73 = vunpack.c.h.b16 %v39
  %v74 = vunpack.c.l.b16 %v40
  %v75 = vunpack.c.h.b16 %v40
  %v76 = vunpack.c.l.b16 %v41
  %v77 = vunpack.c.h.b16 %v41
  %v78 = vpack.c.b16 %v72, %v70
  %v79 = vpack.c.b16 %v73, %v71
  %v80 = vpack.c.b16 %v76, %v74
  %v81 = vpack.c.b16 %v77, %v75
  %vm86 = vcmask 261120
  %v88 = vsel %vm86, %v42, 0
  %v91 = vsel %vm86, %v43, 0
  %v94 = vsel %vm86, %v44, 0
  %v97 = vsel %vm86, %v45, 0
  %99 = vmatprep.subr.bf16.mxu0 %v79
  %100 = vmatpush1.bf16.msra.mxu0 %v78
  %101 = vmatprep.subr.bf16.mxu0 %v81
  %102 = vmatpush1.bf16.msra.mxu0 %v80
  %103 = vmatprep.subr.bf16.mxu0 0
  %104 = vmatpush1.bf16.msra.mxu0 0
  %105 = vmatprep.subr.bf16.mxu0 0
  %106 = vmatpush1.bf16.msra.mxu0 0
  %107 = vmatprep.subr.bf16.mxu0 0
  %108 = vmatpush1.bf16.msra.mxu0 0
  %109 = vmatprep.subr.bf16.mxu0 0
  %110 = vmatpush1.bf16.msra.mxu0 0
  %111 = vmatprep.subr.bf16.mxu0 0
  %112 = vmatpush1.bf16.msra.mxu0 0
  %113 = vmatprep.subr.bf16.mxu0 0
  %114 = vmatpush1.bf16.msra.mxu0 0
  %115 = vmatprep.subr.bf16.mxu0 0
  %116 = vmatpush1.bf16.msra.mxu0 0
  %117 = vmatprep.subr.bf16.mxu0 0
  %118 = vmatpush1.bf16.msra.mxu0 0
  %119 = vmatprep.subr.bf16.mxu0 0
  %120 = vmatpush1.bf16.msra.mxu0 0
  %121 = vmatprep.subr.bf16.mxu0 0
  %122 = vmatpush1.bf16.msra.mxu0 0
  %123 = vmatprep.subr.bf16.mxu0 0
  %124 = vmatpush1.bf16.msra.mxu0 0
  %125 = vmatprep.subr.bf16.mxu0 0
  %126 = vmatpush1.bf16.msra.mxu0 0
  %127 = vmatprep.subr.bf16.mxu0 0
  %128 = vmatpush1.bf16.msra.mxu0 0
  %129 = vmatprep.subr.bf16.mxu0 0
  %130 = vmatpush1.bf16.msra.mxu0 0
  %131 = vmatprep.mubr.bf16.mxu0 0
  %132 = vmatmul.mubr.bf16.gmra.mrb[0].mxu0 %v88
  %v133 = vpop.f32.mrb[0].mxu0
  %v134 = vadd.f32 %v59, %v133
  %v135 = vpop.f32.mrb[0].mxu0
  %v136 = vadd.f32 %v63, %v135
  %v137 = vpop.f32.mrb[0].mxu0
  %v138 = vadd.f32 %v59, %v137
  %v139 = vpop.f32.mrb[0].mxu0
  %v140 = vadd.f32 %v63, %v139
  %141 = vmatprep.mubr.bf16.mxu0 0
  %142 = vmatmul.mubr.bf16.gmra.mrb[0].mxu0 %v91
  %v143 = vpop.f32.mrb[0].mxu0
  %v144 = vadd.f32 %v59, %v143
  %v145 = vpop.f32.mrb[0].mxu0
  %v146 = vadd.f32 %v63, %v145
  %v147 = vpop.f32.mrb[0].mxu0
  %v148 = vadd.f32 %v59, %v147
  %v149 = vpop.f32.mrb[0].mxu0
  %v150 = vadd.f32 %v63, %v149
  %151 = vmatprep.mubr.bf16.mxu0 0
  %152 = vmatmul.mubr.bf16.gmra.mrb[0].mxu0 %v94
  %v153 = vpop.f32.mrb[0].mxu0
  %v154 = vadd.f32 %v59, %v153
  %v155 = vpop.f32.mrb[0].mxu0
  %v156 = vadd.f32 %v63, %v155
  %v157 = vpop.f32.mrb[0].mxu0
  %v158 = vadd.f32 %v59, %v157
  %v159 = vpop.f32.mrb[0].mxu0
  %v160 = vadd.f32 %v63, %v159
  %161 = vmatprep.mubr.bf16.mxu0 0
  %162 = vmatmul.mubr.bf16.gmra.mrb[0].mxu0 %v97
  %v163 = vpop.f32.mrb[0].mxu0
  %v164 = vadd.f32 %v59, %v163
  %v165 = vpop.f32.mrb[0].mxu0
  %v166 = vadd.f32 %v63, %v165
  %v167 = vpop.f32.mrb[0].mxu0
  %v168 = vadd.f32 %v59, %v167
  %v169 = vpop.f32.mrb[0].mxu0
  %v170 = vadd.f32 %v63, %v169
  %171 = vdwg.mxu0
  %v172 = vpack.c.bf16 0.0, 0.0
  %v181 = vunpack.c.l.b16 %v46
  %v182 = vunpack.c.h.b16 %v46
  %v183 = vunpack.c.l.b16 %v47
  %v184 = vunpack.c.h.b16 %v47
  %v185 = vunpack.c.l.b16 %v48
  %v186 = vunpack.c.h.b16 %v48
  %v187 = vunpack.c.l.b16 %v49
  %v188 = vunpack.c.h.b16 %v49
  %v189 = vunpack.c.l.b16 %v50
  %v190 = vunpack.c.h.b16 %v50
  %v191 = vunpack.c.l.b16 %v51
  %v192 = vunpack.c.h.b16 %v51
  %v193 = vunpack.c.l.b16 %v52
  %v194 = vunpack.c.h.b16 %v52
  %v195 = vunpack.c.l.b16 %v53
  %v196 = vunpack.c.h.b16 %v53
  %v197 = vpack.c.b16 %v183, %v181
  %v198 = vpack.c.b16 %v184, %v182
  %v199 = vpack.c.b16 %v187, %v185
  %v200 = vpack.c.b16 %v188, %v186
  %v201 = vpack.c.b16 %v191, %v189
  %v202 = vpack.c.b16 %v192, %v190
  %v203 = vpack.c.b16 %v195, %v193
  %v204 = vpack.c.b16 %v196, %v194
  %vm213 = vcmask 523264
  %v215 = vsel %vm213, %v172, 0
  %217 = vmatprep.subr.bf16.mxu0 %v198
  %218 = vmatpush1.bf16.msra.mxu0 %v197
  %219 = vmatprep.subr.bf16.mxu0 %v200
  %220 = vmatpush1.bf16.msra.mxu0 %v199
  %221 = vmatprep.subr.bf16.mxu0 %v202
  %222 = vmatpush1.bf16.msra.mxu0 %v201
  %223 = vmatprep.subr.bf16.mxu0 %v204
  %224 = vmatpush1.bf16.msra.mxu0 %v203
  %225 = vmatprep.subr.bf16.mxu0 0
  %226 = vmatpush1.bf16.msra.mxu0 0
  %227 = vmatprep.subr.bf16.mxu0 0
  %228 = vmatpush1.bf16.msra.mxu0 0
  %229 = vmatprep.subr.bf16.mxu0 0
  %230 = vmatpush1.bf16.msra.mxu0 0
  %231 = vmatprep.subr.bf16.mxu0 0
  %232 = vmatpush1.bf16.msra.mxu0 0
  %233 = vmatprep.subr.bf16.mxu0 0
  %234 = vmatpush1.bf16.msra.mxu0 0
  %235 = vmatprep.subr.bf16.mxu0 0
  %236 = vmatpush1.bf16.msra.mxu0 0
  %237 = vmatprep.subr.bf16.mxu0 0
  %238 = vmatpush1.bf16.msra.mxu0 0
  %239 = vmatprep.subr.bf16.mxu0 0
  %240 = vmatpush1.bf16.msra.mxu0 0
  %241 = vmatprep.subr.bf16.mxu0 0
  %242 = vmatpush1.bf16.msra.mxu0 0
  %243 = vmatprep.subr.bf16.mxu0 0
  %244 = vmatpush1.bf16.msra.mxu0 0
  %245 = vmatprep.subr.bf16.mxu0 0
  %246 = vmatpush1.bf16.msra.mxu0 0
  %247 = vmatprep.subr.bf16.mxu0 0
  %248 = vmatpush1.bf16.msra.mxu0 0
  %249 = vmatprep.mubr.bf16.mxu0 0
  %250 = vmatmul.mubr.bf16.gmra.mrb[0].mxu0 %v215
  %v251 = vpop.f32.mrb[0].mxu0
  %v252 = vadd.f32 0.0, %v251
  %v253 = vpop.f32.mrb[0].mxu0
  %v254 = vadd.f32 0.0, %v253
  %v255 = vpop.f32.mrb[0].mxu0
  %v256 = vpop.f32.mrb[0].mxu0
  %257 = vdwg.mxu0
  %v258 = vadd.f32 %v134, %v252
  %v259 = vxor.u32 %v258, 2147483648
  %v260 = vmul.f32 %v259, 1.442695
  %v261 = vpow.pop %v260
  %v262 = vadd.f32 %v261, 1.0
  %v263 = vrcp.pop %v262
  %v264 = vmul.f32 1.0, %v263
  %v265 = vtanh.pop %v258
  %v266 = vmul.f32 %v264, 0.0
  %268 = vrot.lane.b32.xlu0 %v265, 64
  %v269 = vpop.permute.xlu0 %268
  %v271 = vmul.f32 %v264, %v269
  %273 = vrot.lane.b32.xlu0 %v271, 32
  %v274 = vpop.permute.xlu0 %273
  %v276 = vadd.f32 %v266, %v274
  %v277 = vtanh.pop %v276
  %279 = vrot.lane.b32.xlu0 %v277, 64
  %v280 = vpop.permute.xlu0 %279
  %v282 = vmul.f32 %v264, %v280
  %v283 = vadd.f32 %v170, %v254
  %v284 = vxor.u32 %v283, 2147483648
  %v285 = vmul.f32 %v284, 1.442695
  %v286 = vpow.pop %v285
  %v287 = vadd.f32 %v286, 1.0
  %v288 = vrcp.pop %v287
  %v289 = vmul.f32 1.0, %v288
  %v290 = vtanh.pop %v283
  %v291 = vmul.f32 %v289, 0.0
  %293 = vrot.lane.b32.xlu0 %v290, 64
  %v294 = vpop.permute.xlu0 %293
  %v296 = vmul.f32 %v289, %v294
  %298 = vrot.lane.b32.xlu0 %v296, 32
  %v299 = vpop.permute.xlu0 %298
  %v301 = vadd.f32 %v291, %v299
  %v302 = vtanh.pop %v301
  %304 = vrot.lane.b32.xlu0 %v302, 64
  %v305 = vpop.permute.xlu0 %304
  %v307 = vmul.f32 %v289, %v305
  %309 = vrot.lane.b32.xlu0 %v282, 32
  %v310 = vpop.permute.xlu0 %309
  %313 = vrot.lane.b32.xlu0 %v307, 64
  %v314 = vpop.permute.xlu0 %313
  %v316 = vsel %vm86, %v310, %v314
  %v317 = vpack.c.bf16 %v316, %v316
  %v319 = vsel %vm213, %v317, 0
  %321 = vmatprep.subr.bf16.mxu0 %v198
  %322 = vmatpush1.bf16.msra.mxu0 %v197
  %323 = vmatprep.subr.bf16.mxu0 %v200
  %324 = vmatpush1.bf16.msra.mxu0 %v199
  %325 = vmatprep.subr.bf16.mxu0 %v202
  %326 = vmatpush1.bf16.msra.mxu0 %v201
  %327 = vmatprep.subr.bf16.mxu0 %v204
  %328 = vmatpush1.bf16.msra.mxu0 %v203
  %329 = vmatprep.subr.bf16.mxu0 0
  %330 = vmatpush1.bf16.msra.mxu0 0
  %331 = vmatprep.subr.bf16.mxu0 0
  %332 = vmatpush1.bf16.msra.mxu0 0
  %333 = vmatprep.subr.bf16.mxu0 0
  %334 = vmatpush1.bf16.msra.mxu0 0
  %335 = vmatprep.subr.bf16.mxu0 0
  %336 = vmatpush1.bf16.msra.mxu0 0
  %337 = vmatprep.subr.bf16.mxu0 0
  %338 = vmatpush1.bf16.msra.mxu0 0
  %339 = vmatprep.subr.bf16.mxu0 0
  %340 = vmatpush1.bf16.msra.mxu0 0
  %341 = vmatprep.subr.bf16.mxu0 0
  %342 = vmatpush1.bf16.msra.mxu0 0
  %343 = vmatprep.subr.bf16.mxu0 0
  %344 = vmatpush1.bf16.msra.mxu0 0
  %345 = vmatprep.subr.bf16.mxu0 0
  %346 = vmatpush1.bf16.msra.mxu0 0
  %347 = vmatprep.subr.bf16.mxu0 0
  %348 = vmatpush1.bf16.msra.mxu0 0
  %349 = vmatprep.subr.bf16.mxu0 0
  %350 = vmatpush1.bf16.msra.mxu0 0
  %351 = vmatprep.subr.bf16.mxu0 0
  %352 = vmatpush1.bf16.msra.mxu0 0
  %353 = vmatprep.mubr.bf16.mxu0 0
  %354 = vmatmul.mubr.bf16.gmra.mrb[0].mxu0 %v319
  %v355 = vpop.f32.mrb[0].mxu0
  %v356 = vadd.f32 0.0, %v355
  %v357 = vpop.f32.mrb[0].mxu0
  %v358 = vadd.f32 0.0, %v357
  %v359 = vpop.f32.mrb[0].mxu0
  %v360 = vpop.f32.mrb[0].mxu0
  %361 = vdwg.mxu0
  %v362 = vadd.f32 %v138, %v356
  %v363 = vxor.u32 %v362, 2147483648
  %v364 = vmul.f32 %v363, 1.442695
  %v365 = vpow.pop %v364
  %v366 = vadd.f32 %v365, 1.0
  %v367 = vrcp.pop %v366
  %v368 = vmul.f32 1.0, %v367
  %v369 = vtanh.pop %v362
  %v370 = vmul.f32 %v368, %v276
  %372 = vrot.lane.b32.xlu0 %v369, 64
  %v373 = vpop.permute.xlu0 %372
  %v375 = vmul.f32 %v368, %v373
  %377 = vrot.lane.b32.xlu0 %v375, 32
  %v378 = vpop.permute.xlu0 %377
  %v380 = vadd.f32 %v370, %v378
  %v381 = vtanh.pop %v380
  %383 = vrot.lane.b32.xlu0 %v381, 64
  %v384 = vpop.permute.xlu0 %383
  %v386 = vmul.f32 %v368, %v384
  %v387 = vadd.f32 %v166, %v358
  %v388 = vxor.u32 %v387, 2147483648
  %v389 = vmul.f32 %v388, 1.442695
  %v390 = vpow.pop %v389
  %v391 = vadd.f32 %v390, 1.0
  %v392 = vrcp.pop %v391
  %v393 = vmul.f32 1.0, %v392
  %v394 = vtanh.pop %v387
  %v395 = vmul.f32 %v393, %v301
  %397 = vrot.lane.b32.xlu0 %v394, 64
  %v398 = vpop.permute.xlu0 %397
  %v400 = vmul.f32 %v393, %v398
  %402 = vrot.lane.b32.xlu0 %v400, 32
  %v403 = vpop.permute.xlu0 %402
  %v405 = vadd.f32 %v395, %v403
  %v406 = vtanh.pop %v405
  %408 = vrot.lane.b32.xlu0 %v406, 64
  %v409 = vpop.permute.xlu0 %408
  %v411 = vmul.f32 %v393, %v409
  %413 = vrot.lane.b32.xlu0 %v386, 32
  %v414 = vpop.permute.xlu0 %413
  %417 = vrot.lane.b32.xlu0 %v411, 64
  %v418 = vpop.permute.xlu0 %417
  %v420 = vsel %vm86, %v414, %v418
  %v421 = vpack.c.bf16 %v420, %v420
  %v423 = vsel %vm213, %v421, 0
  %425 = vmatprep.subr.bf16.mxu0 %v198
  %426 = vmatpush1.bf16.msra.mxu0 %v197
  %427 = vmatprep.subr.bf16.mxu0 %v200
  %428 = vmatpush1.bf16.msra.mxu0 %v199
  %429 = vmatprep.subr.bf16.mxu0 %v202
  %430 = vmatpush1.bf16.msra.mxu0 %v201
  %431 = vmatprep.subr.bf16.mxu0 %v204
  %432 = vmatpush1.bf16.msra.mxu0 %v203
  %433 = vmatprep.subr.bf16.mxu0 0
  %434 = vmatpush1.bf16.msra.mxu0 0
  %435 = vmatprep.subr.bf16.mxu0 0
  %436 = vmatpush1.bf16.msra.mxu0 0
  %437 = vmatprep.subr.bf16.mxu0 0
  %438 = vmatpush1.bf16.msra.mxu0 0
  %439 = vmatprep.subr.bf16.mxu0 0
  %440 = vmatpush1.bf16.msra.mxu0 0
  %441 = vmatprep.subr.bf16.mxu0 0
  %442 = vmatpush1.bf16.msra.mxu0 0
  %443 = vmatprep.subr.bf16.mxu0 0
  %444 = vmatpush1.bf16.msra.mxu0 0
  %445 = vmatprep.subr.bf16.mxu0 0
  %446 = vmatpush1.bf16.msra.mxu0 0
  %447 = vmatprep.subr.bf16.mxu0 0
  %448 = vmatpush1.bf16.msra.mxu0 0
  %449 = vmatprep.subr.bf16.mxu0 0
  %450 = vmatpush1.bf16.msra.mxu0 0
  %451 = vmatprep.subr.bf16.mxu0 0
  %452 = vmatpush1.bf16.msra.mxu0 0
  %453 = vmatprep.subr.bf16.mxu0 0
  %454 = vmatpush1.bf16.msra.mxu0 0
  %455 = vmatprep.subr.bf16.mxu0 0
  %456 = vmatpush1.bf16.msra.mxu0 0
  %457 = vmatprep.mubr.bf16.mxu0 0
  %458 = vmatmul.mubr.bf16.gmra.mrb[0].mxu0 %v423
  %v459 = vpop.f32.mrb[0].mxu0
  %v460 = vadd.f32 0.0, %v459
  %v461 = vpop.f32.mrb[0].mxu0
  %v462 = vadd.f32 0.0, %v461
  %v463 = vpop.f32.mrb[0].mxu0
  %v464 = vpop.f32.mrb[0].mxu0
  %465 = vdwg.mxu0
  %v466 = vadd.f32 %v144, %v460
  %v467 = vxor.u32 %v466, 2147483648
  %v468 = vmul.f32 %v467, 1.442695
  %v469 = vpow.pop %v468
  %v470 = vadd.f32 %v469, 1.0
  %v471 = vrcp.pop %v470
  %v472 = vmul.f32 1.0, %v471
  %v473 = vtanh.pop %v466
  %v474 = vmul.f32 %v472, %v380
  %476 = vrot.lane.b32.xlu0 %v473, 64
  %v477 = vpop.permute.xlu0 %476
  %v479 = vmul.f32 %v472, %v477
  %481 = vrot.lane.b32.xlu0 %v479, 32
  %v482 = vpop.permute.xlu0 %481
  %v484 = vadd.f32 %v474, %v482
  %v485 = vtanh.pop %v484
  %487 = vrot.lane.b32.xlu0 %v485, 64
  %v488 = vpop.permute.xlu0 %487
  %v490 = vmul.f32 %v472, %v488
  %v491 = vadd.f32 %v160, %v462
  %v492 = vxor.u32 %v491, 2147483648
  %v493 = vmul.f32 %v492, 1.442695
  %v494 = vpow.pop %v493
  %v495 = vadd.f32 %v494, 1.0
  %v496 = vrcp.pop %v495
  %v497 = vmul.f32 1.0, %v496
  %v498 = vtanh.pop %v491
  %v499 = vmul.f32 %v497, %v405
  %501 = vrot.lane.b32.xlu0 %v498, 64
  %v502 = vpop.permute.xlu0 %501
  %v504 = vmul.f32 %v497, %v502
  %506 = vrot.lane.b32.xlu0 %v504, 32
  %v507 = vpop.permute.xlu0 %506
  %v509 = vadd.f32 %v499, %v507
  %v510 = vtanh.pop %v509
  %512 = vrot.lane.b32.xlu0 %v510, 64
  %v513 = vpop.permute.xlu0 %512
  %v515 = vmul.f32 %v497, %v513
  %517 = vrot.lane.b32.xlu0 %v490, 32
  %v518 = vpop.permute.xlu0 %517
  %521 = vrot.lane.b32.xlu0 %v515, 64
  %v522 = vpop.permute.xlu0 %521
  %v524 = vsel %vm86, %v518, %v522
  %v525 = vpack.c.bf16 %v524, %v524
  %v527 = vsel %vm213, %v525, 0
  %529 = vmatprep.subr.bf16.mxu0 %v198
  %530 = vmatpush1.bf16.msra.mxu0 %v197
  %531 = vmatprep.subr.bf16.mxu0 %v200
  %532 = vmatpush1.bf16.msra.mxu0 %v199
  %533 = vmatprep.subr.bf16.mxu0 %v202
  %534 = vmatpush1.bf16.msra.mxu0 %v201
  %535 = vmatprep.subr.bf16.mxu0 %v204
  %536 = vmatpush1.bf16.msra.mxu0 %v203
  %537 = vmatprep.subr.bf16.mxu0 0
  %538 = vmatpush1.bf16.msra.mxu0 0
  %539 = vmatprep.subr.bf16.mxu0 0
  %540 = vmatpush1.bf16.msra.mxu0 0
  %541 = vmatprep.subr.bf16.mxu0 0
  %542 = vmatpush1.bf16.msra.mxu0 0
  %543 = vmatprep.subr.bf16.mxu0 0
  %544 = vmatpush1.bf16.msra.mxu0 0
  %545 = vmatprep.subr.bf16.mxu0 0
  %546 = vmatpush1.bf16.msra.mxu0 0
  %547 = vmatprep.subr.bf16.mxu0 0
  %548 = vmatpush1.bf16.msra.mxu0 0
  %549 = vmatprep.subr.bf16.mxu0 0
  %550 = vmatpush1.bf16.msra.mxu0 0
  %551 = vmatprep.subr.bf16.mxu0 0
  %552 = vmatpush1.bf16.msra.mxu0 0
  %553 = vmatprep.subr.bf16.mxu0 0
  %554 = vmatpush1.bf16.msra.mxu0 0
  %555 = vmatprep.subr.bf16.mxu0 0
  %556 = vmatpush1.bf16.msra.mxu0 0
  %557 = vmatprep.subr.bf16.mxu0 0
  %558 = vmatpush1.bf16.msra.mxu0 0
  %559 = vmatprep.subr.bf16.mxu0 0
  %560 = vmatpush1.bf16.msra.mxu0 0
  %561 = vmatprep.mubr.bf16.mxu0 0
  %562 = vmatmul.mubr.bf16.gmra.mrb[0].mxu0 %v527
  %v563 = vpop.f32.mrb[0].mxu0
  %v564 = vadd.f32 0.0, %v563
  %v565 = vpop.f32.mrb[0].mxu0
  %v566 = vadd.f32 0.0, %v565
  %v567 = vpop.f32.mrb[0].mxu0
  %v568 = vpop.f32.mrb[0].mxu0
  %569 = vdwg.mxu0
  %v570 = vadd.f32 %v148, %v564
  %v571 = vxor.u32 %v570, 2147483648
  %v572 = vmul.f32 %v571, 1.442695
  %v573 = vpow.pop %v572
  %v574 = vadd.f32 %v573, 1.0
  %v575 = vrcp.pop %v574
  %v576 = vmul.f32 1.0, %v575
  %v577 = vtanh.pop %v570
  %v578 = vmul.f32 %v576, %v484
  %580 = vrot.lane.b32.xlu0 %v577, 64
  %v581 = vpop.permute.xlu0 %580
  %v583 = vmul.f32 %v576, %v581
  %585 = vrot.lane.b32.xlu0 %v583, 32
  %v586 = vpop.permute.xlu0 %585
  %v588 = vadd.f32 %v578, %v586
  %v589 = vtanh.pop %v588
  %591 = vrot.lane.b32.xlu0 %v589, 64
  %v592 = vpop.permute.xlu0 %591
  %v594 = vmul.f32 %v576, %v592
  %v595 = vadd.f32 %v156, %v566
  %v596 = vxor.u32 %v595, 2147483648
  %v597 = vmul.f32 %v596, 1.442695
  %v598 = vpow.pop %v597
  %v599 = vadd.f32 %v598, 1.0
  %v600 = vrcp.pop %v599
  %v601 = vmul.f32 1.0, %v600
  %v602 = vtanh.pop %v595
  %v603 = vmul.f32 %v601, %v509
  %605 = vrot.lane.b32.xlu0 %v602, 64
  %v606 = vpop.permute.xlu0 %605
  %v608 = vmul.f32 %v601, %v606
  %610 = vrot.lane.b32.xlu0 %v608, 32
  %v611 = vpop.permute.xlu0 %610
  %v613 = vadd.f32 %v603, %v611
  %v614 = vtanh.pop %v613
  %616 = vrot.lane.b32.xlu0 %v614, 64
  %v617 = vpop.permute.xlu0 %616
  %v619 = vmul.f32 %v601, %v617
  %621 = vrot.lane.b32.xlu0 %v594, 32
  %v622 = vpop.permute.xlu0 %621
  %625 = vrot.lane.b32.xlu0 %v619, 64
  %v626 = vpop.permute.xlu0 %625
  %v628 = vsel %vm86, %v622, %v626
  %v629 = vpack.c.bf16 %v628, %v628
  %v631 = vsel %vm213, %v629, 0
  %633 = vmatprep.subr.bf16.mxu0 %v198
  %634 = vmatpush1.bf16.msra.mxu0 %v197
  %635 = vmatprep.subr.bf16.mxu0 %v200
  %636 = vmatpush1.bf16.msra.mxu0 %v199
  %637 = vmatprep.subr.bf16.mxu0 %v202
  %638 = vmatpush1.bf16.msra.mxu0 %v201
  %639 = vmatprep.subr.bf16.mxu0 %v204
  %640 = vmatpush1.bf16.msra.mxu0 %v203
  %641 = vmatprep.subr.bf16.mxu0 0
  %642 = vmatpush1.bf16.msra.mxu0 0
  %643 = vmatprep.subr.bf16.mxu0 0
  %644 = vmatpush1.bf16.msra.mxu0 0
  %645 = vmatprep.subr.bf16.mxu0 0
  %646 = vmatpush1.bf16.msra.mxu0 0
  %647 = vmatprep.subr.bf16.mxu0 0
  %648 = vmatpush1.bf16.msra.mxu0 0
  %649 = vmatprep.subr.bf16.mxu0 0
  %650 = vmatpush1.bf16.msra.mxu0 0
  %651 = vmatprep.subr.bf16.mxu0 0
  %652 = vmatpush1.bf16.msra.mxu0 0
  %653 = vmatprep.subr.bf16.mxu0 0
  %654 = vmatpush1.bf16.msra.mxu0 0
  %655 = vmatprep.subr.bf16.mxu0 0
  %656 = vmatpush1.bf16.msra.mxu0 0
  %657 = vmatprep.subr.bf16.mxu0 0
  %658 = vmatpush1.bf16.msra.mxu0 0
  %659 = vmatprep.subr.bf16.mxu0 0
  %660 = vmatpush1.bf16.msra.mxu0 0
  %661 = vmatprep.subr.bf16.mxu0 0
  %662 = vmatpush1.bf16.msra.mxu0 0
  %663 = vmatprep.subr.bf16.mxu0 0
  %664 = vmatpush1.bf16.msra.mxu0 0
  %665 = vmatprep.mubr.bf16.mxu0 0
  %666 = vmatmul.mubr.bf16.gmra.mrb[0].mxu0 %v631
  %v667 = vpop.f32.mrb[0].mxu0
  %v668 = vadd.f32 0.0, %v667
  %v669 = vpop.f32.mrb[0].mxu0
  %v670 = vadd.f32 0.0, %v669
  %v671 = vpop.f32.mrb[0].mxu0
  %v672 = vpop.f32.mrb[0].mxu0
  %673 = vdwg.mxu0
  %v674 = vadd.f32 %v154, %v668
  %v675 = vxor.u32 %v674, 2147483648
  %v676 = vmul.f32 %v675, 1.442695
  %v677 = vpow.pop %v676
  %v678 = vadd.f32 %v677, 1.0
  %v679 = vrcp.pop %v678
  %v680 = vmul.f32 1.0, %v679
  %v681 = vtanh.pop %v674
  %v682 = vmul.f32 %v680, %v588
  %684 = vrot.lane.b32.xlu0 %v681, 64
  %v685 = vpop.permute.xlu0 %684
  %v687 = vmul.f32 %v680, %v685
  %689 = vrot.lane.b32.xlu0 %v687, 32
  %v690 = vpop.permute.xlu0 %689
  %v692 = vadd.f32 %v682, %v690
  %v693 = vtanh.pop %v692
  %695 = vrot.lane.b32.xlu0 %v693, 64
  %v696 = vpop.permute.xlu0 %695
  %v698 = vmul.f32 %v680, %v696
  %v699 = vadd.f32 %v150, %v670
  %v700 = vxor.u32 %v699, 2147483648
  %v701 = vmul.f32 %v700, 1.442695
  %v702 = vpow.pop %v701
  %v703 = vadd.f32 %v702, 1.0
  %v704 = vrcp.pop %v703
  %v705 = vmul.f32 1.0, %v704
  %v706 = vtanh.pop %v699
  %v707 = vmul.f32 %v705, %v613
  %709 = vrot.lane.b32.xlu0 %v706, 64
  %v710 = vpop.permute.xlu0 %709
  %v712 = vmul.f32 %v705, %v710
  %714 = vrot.lane.b32.xlu0 %v712, 32
  %v715 = vpop.permute.xlu0 %714
  %v717 = vadd.f32 %v707, %v715
  %v718 = vtanh.pop %v717
  %720 = vrot.lane.b32.xlu0 %v718, 64
  %v721 = vpop.permute.xlu0 %720
  %v723 = vmul.f32 %v705, %v721
  %725 = vrot.lane.b32.xlu0 %v698, 32
  %v726 = vpop.permute.xlu0 %725
  %729 = vrot.lane.b32.xlu0 %v723, 64
  %v730 = vpop.permute.xlu0 %729
  %v732 = vsel %vm86, %v726, %v730
  %v733 = vpack.c.bf16 %v732, %v732
  %v735 = vsel %vm213, %v733, 0
  %737 = vmatprep.subr.bf16.mxu0 %v198
  %738 = vmatpush1.bf16.msra.mxu0 %v197
  %739 = vmatprep.subr.bf16.mxu0 %v200
  %740 = vmatpush1.bf16.msra.mxu0 %v199
  %741 = vmatprep.subr.bf16.mxu0 %v202
  %742 = vmatpush1.bf16.msra.mxu0 %v201
  %743 = vmatprep.subr.bf16.mxu0 %v204
  %744 = vmatpush1.bf16.msra.mxu0 %v203
  %745 = vmatprep.subr.bf16.mxu0 0
  %746 = vmatpush1.bf16.msra.mxu0 0
  %747 = vmatprep.subr.bf16.mxu0 0
  %748 = vmatpush1.bf16.msra.mxu0 0
  %749 = vmatprep.subr.bf16.mxu0 0
  %750 = vmatpush1.bf16.msra.mxu0 0
  %751 = vmatprep.subr.bf16.mxu0 0
  %752 = vmatpush1.bf16.msra.mxu0 0
  %753 = vmatprep.subr.bf16.mxu0 0
  %754 = vmatpush1.bf16.msra.mxu0 0
  %755 = vmatprep.subr.bf16.mxu0 0
  %756 = vmatpush1.bf16.msra.mxu0 0
  %757 = vmatprep.subr.bf16.mxu0 0
  %758 = vmatpush1.bf16.msra.mxu0 0
  %759 = vmatprep.subr.bf16.mxu0 0
  %760 = vmatpush1.bf16.msra.mxu0 0
  %761 = vmatprep.subr.bf16.mxu0 0
  %762 = vmatpush1.bf16.msra.mxu0 0
  %763 = vmatprep.subr.bf16.mxu0 0
  %764 = vmatpush1.bf16.msra.mxu0 0
  %765 = vmatprep.subr.bf16.mxu0 0
  %766 = vmatpush1.bf16.msra.mxu0 0
  %767 = vmatprep.subr.bf16.mxu0 0
  %768 = vmatpush1.bf16.msra.mxu0 0
  %769 = vmatprep.mubr.bf16.mxu0 0
  %770 = vmatmul.mubr.bf16.gmra.mrb[0].mxu0 %v735
  %v771 = vpop.f32.mrb[0].mxu0
  %v772 = vadd.f32 0.0, %v771
  %v773 = vpop.f32.mrb[0].mxu0
  %v774 = vadd.f32 0.0, %v773
  %v775 = vpop.f32.mrb[0].mxu0
  %v776 = vpop.f32.mrb[0].mxu0
  %777 = vdwg.mxu0
  %v778 = vadd.f32 %v158, %v772
  %v779 = vxor.u32 %v778, 2147483648
  %v780 = vmul.f32 %v779, 1.442695
  %v781 = vpow.pop %v780
  %v782 = vadd.f32 %v781, 1.0
  %v783 = vrcp.pop %v782
  %v784 = vmul.f32 1.0, %v783
  %v785 = vtanh.pop %v778
  %v786 = vmul.f32 %v784, %v692
  %788 = vrot.lane.b32.xlu0 %v785, 64
  %v789 = vpop.permute.xlu0 %788
  %v791 = vmul.f32 %v784, %v789
  %793 = vrot.lane.b32.xlu0 %v791, 32
  %v794 = vpop.permute.xlu0 %793
  %v796 = vadd.f32 %v786, %v794
  %v797 = vtanh.pop %v796
  %799 = vrot.lane.b32.xlu0 %v797, 64
  %v800 = vpop.permute.xlu0 %799
  %v802 = vmul.f32 %v784, %v800
  %v803 = vadd.f32 %v146, %v774
  %v804 = vxor.u32 %v803, 2147483648
  %v805 = vmul.f32 %v804, 1.442695
  %v806 = vpow.pop %v805
  %v807 = vadd.f32 %v806, 1.0
  %v808 = vrcp.pop %v807
  %v809 = vmul.f32 1.0, %v808
  %v810 = vtanh.pop %v803
  %v811 = vmul.f32 %v809, %v717
  %813 = vrot.lane.b32.xlu0 %v810, 64
  %v814 = vpop.permute.xlu0 %813
  %v816 = vmul.f32 %v809, %v814
  %818 = vrot.lane.b32.xlu0 %v816, 32
  %v819 = vpop.permute.xlu0 %818
  %v821 = vadd.f32 %v811, %v819
  %v822 = vtanh.pop %v821
  %824 = vrot.lane.b32.xlu0 %v822, 64
  %v825 = vpop.permute.xlu0 %824
  %v827 = vmul.f32 %v809, %v825
  %829 = vrot.lane.b32.xlu0 %v802, 32
  %v830 = vpop.permute.xlu0 %829
  %833 = vrot.lane.b32.xlu0 %v827, 64
  %v834 = vpop.permute.xlu0 %833
  %v836 = vsel %vm86, %v830, %v834
  %v837 = vpack.c.bf16 %v836, %v836
  %v839 = vsel %vm213, %v837, 0
  %841 = vmatprep.subr.bf16.mxu0 %v198
  %842 = vmatpush1.bf16.msra.mxu0 %v197
  %843 = vmatprep.subr.bf16.mxu0 %v200
  %844 = vmatpush1.bf16.msra.mxu0 %v199
  %845 = vmatprep.subr.bf16.mxu0 %v202
  %846 = vmatpush1.bf16.msra.mxu0 %v201
  %847 = vmatprep.subr.bf16.mxu0 %v204
  %848 = vmatpush1.bf16.msra.mxu0 %v203
  %849 = vmatprep.subr.bf16.mxu0 0
  %850 = vmatpush1.bf16.msra.mxu0 0
  %851 = vmatprep.subr.bf16.mxu0 0
  %852 = vmatpush1.bf16.msra.mxu0 0
  %853 = vmatprep.subr.bf16.mxu0 0
  %854 = vmatpush1.bf16.msra.mxu0 0
  %855 = vmatprep.subr.bf16.mxu0 0
  %856 = vmatpush1.bf16.msra.mxu0 0
  %857 = vmatprep.subr.bf16.mxu0 0
  %858 = vmatpush1.bf16.msra.mxu0 0
  %859 = vmatprep.subr.bf16.mxu0 0
  %860 = vmatpush1.bf16.msra.mxu0 0
  %861 = vmatprep.subr.bf16.mxu0 0
  %862 = vmatpush1.bf16.msra.mxu0 0
  %863 = vmatprep.subr.bf16.mxu0 0
  %864 = vmatpush1.bf16.msra.mxu0 0
  %865 = vmatprep.subr.bf16.mxu0 0
  %866 = vmatpush1.bf16.msra.mxu0 0
  %867 = vmatprep.subr.bf16.mxu0 0
  %868 = vmatpush1.bf16.msra.mxu0 0
  %869 = vmatprep.subr.bf16.mxu0 0
  %870 = vmatpush1.bf16.msra.mxu0 0
  %871 = vmatprep.subr.bf16.mxu0 0
  %872 = vmatpush1.bf16.msra.mxu0 0
  %873 = vmatprep.mubr.bf16.mxu0 0
  %874 = vmatmul.mubr.bf16.gmra.mrb[0].mxu0 %v839
  %v875 = vpop.f32.mrb[0].mxu0
  %v876 = vadd.f32 0.0, %v875
  %v877 = vpop.f32.mrb[0].mxu0
  %v878 = vadd.f32 0.0, %v877
  %v879 = vpop.f32.mrb[0].mxu0
  %v880 = vpop.f32.mrb[0].mxu0
  %881 = vdwg.mxu0
  %v882 = vadd.f32 %v164, %v876
  %v883 = vxor.u32 %v882, 2147483648
  %v884 = vmul.f32 %v883, 1.442695
  %v885 = vpow.pop %v884
  %v886 = vadd.f32 %v885, 1.0
  %v887 = vrcp.pop %v886
  %v888 = vmul.f32 1.0, %v887
  %v889 = vtanh.pop %v882
  %v890 = vmul.f32 %v888, %v796
  %892 = vrot.lane.b32.xlu0 %v889, 64
  %v893 = vpop.permute.xlu0 %892
  %v895 = vmul.f32 %v888, %v893
  %897 = vrot.lane.b32.xlu0 %v895, 32
  %v898 = vpop.permute.xlu0 %897
  %v900 = vadd.f32 %v890, %v898
  %v901 = vtanh.pop %v900
  %903 = vrot.lane.b32.xlu0 %v901, 64
  %v904 = vpop.permute.xlu0 %903
  %v906 = vmul.f32 %v888, %v904
  %v907 = vadd.f32 %v140, %v878
  %v908 = vxor.u32 %v907, 2147483648
  %v909 = vmul.f32 %v908, 1.442695
  %v910 = vpow.pop %v909
  %v911 = vadd.f32 %v910, 1.0
  %v912 = vrcp.pop %v911
  %v913 = vmul.f32 1.0, %v912
  %v914 = vtanh.pop %v907
  %v915 = vmul.f32 %v913, %v821
  %917 = vrot.lane.b32.xlu0 %v914, 64
  %v918 = vpop.permute.xlu0 %917
  %v920 = vmul.f32 %v913, %v918
  %922 = vrot.lane.b32.xlu0 %v920, 32
  %v923 = vpop.permute.xlu0 %922
  %v925 = vadd.f32 %v915, %v923
  %v926 = vtanh.pop %v925
  %928 = vrot.lane.b32.xlu0 %v926, 64
  %v929 = vpop.permute.xlu0 %928
  %v931 = vmul.f32 %v913, %v929
  %933 = vrot.lane.b32.xlu0 %v906, 32
  %v934 = vpop.permute.xlu0 %933
  %937 = vrot.lane.b32.xlu0 %v931, 64
  %v938 = vpop.permute.xlu0 %937
  %v940 = vsel %vm86, %v934, %v938
  %v941 = vpack.c.bf16 %v940, %v940
  %v943 = vsel %vm213, %v941, 0
  %945 = vmatprep.subr.bf16.mxu0 %v198
  %946 = vmatpush1.bf16.msra.mxu0 %v197
  %947 = vmatprep.subr.bf16.mxu0 %v200
  %948 = vmatpush1.bf16.msra.mxu0 %v199
  %949 = vmatprep.subr.bf16.mxu0 %v202
  %950 = vmatpush1.bf16.msra.mxu0 %v201
  %951 = vmatprep.subr.bf16.mxu0 %v204
  %952 = vmatpush1.bf16.msra.mxu0 %v203
  %953 = vmatprep.subr.bf16.mxu0 0
  %954 = vmatpush1.bf16.msra.mxu0 0
  %955 = vmatprep.subr.bf16.mxu0 0
  %956 = vmatpush1.bf16.msra.mxu0 0
  %957 = vmatprep.subr.bf16.mxu0 0
  %958 = vmatpush1.bf16.msra.mxu0 0
  %959 = vmatprep.subr.bf16.mxu0 0
  %960 = vmatpush1.bf16.msra.mxu0 0
  %961 = vmatprep.subr.bf16.mxu0 0
  %962 = vmatpush1.bf16.msra.mxu0 0
  %963 = vmatprep.subr.bf16.mxu0 0
  %964 = vmatpush1.bf16.msra.mxu0 0
  %965 = vmatprep.subr.bf16.mxu0 0
  %966 = vmatpush1.bf16.msra.mxu0 0
  %967 = vmatprep.subr.bf16.mxu0 0
  %968 = vmatpush1.bf16.msra.mxu0 0
  %969 = vmatprep.subr.bf16.mxu0 0
  %970 = vmatpush1.bf16.msra.mxu0 0
  %971 = vmatprep.subr.bf16.mxu0 0
  %972 = vmatpush1.bf16.msra.mxu0 0
  %973 = vmatprep.subr.bf16.mxu0 0
  %974 = vmatpush1.bf16.msra.mxu0 0
  %975 = vmatprep.subr.bf16.mxu0 0
  %976 = vmatpush1.bf16.msra.mxu0 0
  %977 = vmatprep.mubr.bf16.mxu0 0
  %978 = vmatmul.mubr.bf16.gmra.mrb[0].mxu0 %v943
  %v979 = vpop.f32.mrb[0].mxu0
  %v980 = vadd.f32 0.0, %v979
  %v981 = vpop.f32.mrb[0].mxu0
  %v982 = vadd.f32 0.0, %v981
  %v983 = vpop.f32.mrb[0].mxu0
  %v984 = vpop.f32.mrb[0].mxu0
  %985 = vdwg.mxu0
  %v986 = vadd.f32 %v168, %v980
  %v987 = vxor.u32 %v986, 2147483648
  %v988 = vmul.f32 %v987, 1.442695
  %v989 = vpow.pop %v988
  %v990 = vadd.f32 %v989, 1.0
  %v991 = vrcp.pop %v990
  %v992 = vmul.f32 1.0, %v991
  %v993 = vtanh.pop %v986
  %v994 = vmul.f32 %v992, %v900
  %996 = vrot.lane.b32.xlu0 %v993, 64
  %v997 = vpop.permute.xlu0 %996
  %v999 = vmul.f32 %v992, %v997
  %1001 = vrot.lane.b32.xlu0 %v999, 32
  %v1002 = vpop.permute.xlu0 %1001
  %v1004 = vadd.f32 %v994, %v1002
  %v1005 = vtanh.pop %v1004
  %1007 = vrot.lane.b32.xlu0 %v1005, 64
  %v1008 = vpop.permute.xlu0 %1007
  %v1010 = vmul.f32 %v992, %v1008
  %v1011 = vadd.f32 %v136, %v982
  %v1012 = vxor.u32 %v1011, 2147483648
  %v1013 = vmul.f32 %v1012, 1.442695
  %v1014 = vpow.pop %v1013
  %v1015 = vadd.f32 %v1014, 1.0
  %v1016 = vrcp.pop %v1015
  %v1017 = vmul.f32 1.0, %v1016
  %v1018 = vtanh.pop %v1011
  %v1019 = vmul.f32 %v1017, %v925
  %1021 = vrot.lane.b32.xlu0 %v1018, 64
  %v1022 = vpop.permute.xlu0 %1021
  %v1024 = vmul.f32 %v1017, %v1022
  %1026 = vrot.lane.b32.xlu0 %v1024, 32
  %v1027 = vpop.permute.xlu0 %1026
  %v1029 = vadd.f32 %v1019, %v1027
  %v1030 = vtanh.pop %v1029
  %1032 = vrot.lane.b32.xlu0 %v1030, 64
  %v1033 = vpop.permute.xlu0 %1032
  %v1035 = vmul.f32 %v1017, %v1033
  %v1036 = vld [vmem:[%s4] sm:$0xff]
  %v1037 = vld [vmem:[%s4 + $0x8] sm:$0xff]
  %v1038 = vld [vmem:[%s4 + $0x10] sm:$0xff]
  %v1039 = vld [vmem:[%s4 + $0x18] sm:$0xff]
  %v1040 = vld [vmem:[%s5] sm:$0xff]
  %v1041 = vld [vmem:[%s5 + $0x8] sm:$0xff]
  %v1042 = vld [vmem:[%s5 + $0x10] sm:$0xff]
  %v1043 = vld [vmem:[%s5 + $0x18] sm:$0xff]
  %v1044 = vpack.c.bf16 %v386, %v282
  %v1045 = vpack.c.bf16 %v594, %v490
  %v1046 = vpack.c.bf16 %v802, %v698
  %v1047 = vpack.c.bf16 %v1010, %v906
  %v1048 = vpack.c.bf16 %v931, %v1035
  %v1049 = vpack.c.bf16 %v723, %v827
  %v1050 = vpack.c.bf16 %v515, %v619
  %v1051 = vpack.c.bf16 %v307, %v411
  %1056 = vrot.lane.b32.xlu0 %v1048, 32
  %v1057 = vpop.permute.xlu0 %1056
  %1058 = vrot.lane.b32.xlu0 %v1049, 32
  %v1059 = vpop.permute.xlu0 %1058
  %1060 = vrot.lane.b32.xlu0 %v1050, 32
  %v1061 = vpop.permute.xlu0 %1060
  %1062 = vrot.lane.b32.xlu0 %v1051, 32
  %v1063 = vpop.permute.xlu0 %1062
  %v1068 = vunpack.c.l.b16 %v1040
  %v1069 = vunpack.c.h.b16 %v1040
  %v1070 = vunpack.c.l.b16 %v1041
  %v1071 = vunpack.c.h.b16 %v1041
  %v1072 = vunpack.c.l.b16 %v1042
  %v1073 = vunpack.c.h.b16 %v1042
  %v1074 = vunpack.c.l.b16 %v1043
  %v1075 = vunpack.c.h.b16 %v1043
  %v1076 = vpack.c.b16 %v1070, %v1068
  %v1077 = vpack.c.b16 %v1071, %v1069
  %v1078 = vpack.c.b16 %v1074, %v1072
  %v1079 = vpack.c.b16 %v1075, %v1073
  %v1085 = vsel %vm86, %v1057, 0
  %v1088 = vsel %vm86, %v1059, 0
  %v1091 = vsel %vm86, %v1061, 0
  %v1094 = vsel %vm86, %v1063, 0
  %1096 = vmatprep.subr.bf16.mxu0 %v1077
  %1097 = vmatpush1.bf16.msra.mxu0 %v1076
  %1098 = vmatprep.subr.bf16.mxu0 %v1079
  %1099 = vmatpush1.bf16.msra.mxu0 %v1078
  %1100 = vmatprep.subr.bf16.mxu0 0
  %1101 = vmatpush1.bf16.msra.mxu0 0
  %1102 = vmatprep.subr.bf16.mxu0 0
  %1103 = vmatpush1.bf16.msra.mxu0 0
  %1104 = vmatprep.subr.bf16.mxu0 0
  %1105 = vmatpush1.bf16.msra.mxu0 0
  %1106 = vmatprep.subr.bf16.mxu0 0
  %1107 = vmatpush1.bf16.msra.mxu0 0
  %1108 = vmatprep.subr.bf16.mxu0 0
  %1109 = vmatpush1.bf16.msra.mxu0 0
  %1110 = vmatprep.subr.bf16.mxu0 0
  %1111 = vmatpush1.bf16.msra.mxu0 0
  %1112 = vmatprep.subr.bf16.mxu0 0
  %1113 = vmatpush1.bf16.msra.mxu0 0
  %1114 = vmatprep.subr.bf16.mxu0 0
  %1115 = vmatpush1.bf16.msra.mxu0 0
  %1116 = vmatprep.subr.bf16.mxu0 0
  %1117 = vmatpush1.bf16.msra.mxu0 0
  %1118 = vmatprep.subr.bf16.mxu0 0
  %1119 = vmatpush1.bf16.msra.mxu0 0
  %1120 = vmatprep.subr.bf16.mxu0 0
  %1121 = vmatpush1.bf16.msra.mxu0 0
  %1122 = vmatprep.subr.bf16.mxu0 0
  %1123 = vmatpush1.bf16.msra.mxu0 0
  %1124 = vmatprep.subr.bf16.mxu0 0
  %1125 = vmatpush1.bf16.msra.mxu0 0
  %1126 = vmatprep.subr.bf16.mxu0 0
  %1127 = vmatpush1.bf16.msra.mxu0 0
  %1128 = vmatprep.mubr.bf16.mxu0 0
  %1129 = vmatmul.mubr.bf16.gmra.mrb[0].mxu0 %v1085
  %v1130 = vpop.f32.mrb[0].mxu0
  %v1131 = vadd.f32 0.0, %v1130
  %v1132 = vpop.f32.mrb[0].mxu0
  %v1133 = vadd.f32 0.0, %v1132
  %v1134 = vpop.f32.mrb[0].mxu0
  %v1135 = vadd.f32 0.0, %v1134
  %v1136 = vpop.f32.mrb[0].mxu0
  %v1137 = vadd.f32 0.0, %v1136
  %1138 = vmatprep.mubr.bf16.mxu0 0
  %1139 = vmatmul.mubr.bf16.gmra.mrb[0].mxu0 %v1088
  %v1140 = vpop.f32.mrb[0].mxu0
  %v1141 = vadd.f32 0.0, %v1140
  %v1142 = vpop.f32.mrb[0].mxu0
  %v1143 = vadd.f32 0.0, %v1142
  %v1144 = vpop.f32.mrb[0].mxu0
  %v1145 = vadd.f32 0.0, %v1144
  %v1146 = vpop.f32.mrb[0].mxu0
  %v1147 = vadd.f32 0.0, %v1146
  %1148 = vmatprep.mubr.bf16.mxu0 0
  %1149 = vmatmul.mubr.bf16.gmra.mrb[0].mxu0 %v1091
  %v1150 = vpop.f32.mrb[0].mxu0
  %v1151 = vadd.f32 0.0, %v1150
  %v1152 = vpop.f32.mrb[0].mxu0
  %v1153 = vadd.f32 0.0, %v1152
  %v1154 = vpop.f32.mrb[0].mxu0
  %v1155 = vadd.f32 0.0, %v1154
  %v1156 = vpop.f32.mrb[0].mxu0
  %v1157 = vadd.f32 0.0, %v1156
  %1158 = vmatprep.mubr.bf16.mxu0 0
  %1159 = vmatmul.mubr.bf16.gmra.mrb[0].mxu0 %v1094
  %v1160 = vpop.f32.mrb[0].mxu0
  %v1161 = vadd.f32 0.0, %v1160
  %v1162 = vpop.f32.mrb[0].mxu0
  %v1163 = vadd.f32 0.0, %v1162
  %v1164 = vpop.f32.mrb[0].mxu0
  %v1165 = vadd.f32 0.0, %v1164
  %v1166 = vpop.f32.mrb[0].mxu0
  %v1167 = vadd.f32 0.0, %v1166
  %1168 = vdwg.mxu0
  %1173 = vrot.lane.b32.xlu0 %v1044, 32
  %v1174 = vpop.permute.xlu0 %1173
  %1175 = vrot.lane.b32.xlu0 %v1045, 32
  %v1176 = vpop.permute.xlu0 %1175
  %1177 = vrot.lane.b32.xlu0 %v1046, 32
  %v1178 = vpop.permute.xlu0 %1177
  %1179 = vrot.lane.b32.xlu0 %v1047, 32
  %v1180 = vpop.permute.xlu0 %1179
  %v1185 = vunpack.c.l.b16 %v1036
  %v1186 = vunpack.c.h.b16 %v1036
  %v1187 = vunpack.c.l.b16 %v1037
  %v1188 = vunpack.c.h.b16 %v1037
  %v1189 = vunpack.c.l.b16 %v1038
  %v1190 = vunpack.c.h.b16 %v1038
  %v1191 = vunpack.c.l.b16 %v1039
  %v1192 = vunpack.c.h.b16 %v1039
  %v1193 = vpack.c.b16 %v1187, %v1185
  %v1194 = vpack.c.b16 %v1188, %v1186
  %v1195 = vpack.c.b16 %v1191, %v1189
  %v1196 = vpack.c.b16 %v1192, %v1190
  %v1202 = vsel %vm86, %v1174, 0
  %v1205 = vsel %vm86, %v1176, 0
  %v1208 = vsel %vm86, %v1178, 0
  %v1211 = vsel %vm86, %v1180, 0
  %1213 = vmatprep.subr.bf16.mxu0 %v1194
  %1214 = vmatpush1.bf16.msra.mxu0 %v1193
  %1215 = vmatprep.subr.bf16.mxu0 %v1196
  %1216 = vmatpush1.bf16.msra.mxu0 %v1195
  %1217 = vmatprep.subr.bf16.mxu0 0
  %1218 = vmatpush1.bf16.msra.mxu0 0
  %1219 = vmatprep.subr.bf16.mxu0 0
  %1220 = vmatpush1.bf16.msra.mxu0 0
  %1221 = vmatprep.subr.bf16.mxu0 0
  %1222 = vmatpush1.bf16.msra.mxu0 0
  %1223 = vmatprep.subr.bf16.mxu0 0
  %1224 = vmatpush1.bf16.msra.mxu0 0
  %1225 = vmatprep.subr.bf16.mxu0 0
  %1226 = vmatpush1.bf16.msra.mxu0 0
  %1227 = vmatprep.subr.bf16.mxu0 0
  %1228 = vmatpush1.bf16.msra.mxu0 0
  %1229 = vmatprep.subr.bf16.mxu0 0
  %1230 = vmatpush1.bf16.msra.mxu0 0
  %1231 = vmatprep.subr.bf16.mxu0 0
  %1232 = vmatpush1.bf16.msra.mxu0 0
  %1233 = vmatprep.subr.bf16.mxu0 0
  %1234 = vmatpush1.bf16.msra.mxu0 0
  %1235 = vmatprep.subr.bf16.mxu0 0
  %1236 = vmatpush1.bf16.msra.mxu0 0
  %1237 = vmatprep.subr.bf16.mxu0 0
  %1238 = vmatpush1.bf16.msra.mxu0 0
  %1239 = vmatprep.subr.bf16.mxu0 0
  %1240 = vmatpush1.bf16.msra.mxu0 0
  %1241 = vmatprep.subr.bf16.mxu0 0
  %1242 = vmatpush1.bf16.msra.mxu0 0
  %1243 = vmatprep.subr.bf16.mxu0 0
  %1244 = vmatpush1.bf16.msra.mxu0 0
  %1245 = vmatprep.mubr.bf16.mxu0 0
  %1246 = vmatmul.mubr.bf16.gmra.mrb[0].mxu0 %v1202
  %v1247 = vpop.f32.mrb[0].mxu0
  %v1248 = vadd.f32 %v1131, %v1247
  %v1249 = vpop.f32.mrb[0].mxu0
  %v1250 = vadd.f32 %v1133, %v1249
  %v1251 = vpop.f32.mrb[0].mxu0
  %v1252 = vadd.f32 %v1135, %v1251
  %v1253 = vpop.f32.mrb[0].mxu0
  %v1254 = vadd.f32 %v1137, %v1253
  %1255 = vmatprep.mubr.bf16.mxu0 0
  %1256 = vmatmul.mubr.bf16.gmra.mrb[0].mxu0 %v1205
  %v1257 = vpop.f32.mrb[0].mxu0
  %v1258 = vadd.f32 %v1141, %v1257
  %v1259 = vpop.f32.mrb[0].mxu0
  %v1260 = vadd.f32 %v1143, %v1259
  %v1261 = vpop.f32.mrb[0].mxu0
  %v1262 = vadd.f32 %v1145, %v1261
  %v1263 = vpop.f32.mrb[0].mxu0
  %v1264 = vadd.f32 %v1147, %v1263
  %1265 = vmatprep.mubr.bf16.mxu0 0
  %1266 = vmatmul.mubr.bf16.gmra.mrb[0].mxu0 %v1208
  %v1267 = vpop.f32.mrb[0].mxu0
  %v1268 = vadd.f32 %v1151, %v1267
  %v1269 = vpop.f32.mrb[0].mxu0
  %v1270 = vadd.f32 %v1153, %v1269
  %v1271 = vpop.f32.mrb[0].mxu0
  %v1272 = vadd.f32 %v1155, %v1271
  %v1273 = vpop.f32.mrb[0].mxu0
  %v1274 = vadd.f32 %v1157, %v1273
  %1275 = vmatprep.mubr.bf16.mxu0 0
  %1276 = vmatmul.mubr.bf16.gmra.mrb[0].mxu0 %v1211
  %v1277 = vpop.f32.mrb[0].mxu0
  %v1278 = vadd.f32 %v1161, %v1277
  %v1279 = vpop.f32.mrb[0].mxu0
  %v1280 = vadd.f32 %v1163, %v1279
  %v1281 = vpop.f32.mrb[0].mxu0
  %v1282 = vadd.f32 %v1165, %v1281
  %v1283 = vpop.f32.mrb[0].mxu0
  %v1284 = vadd.f32 %v1167, %v1283
  %1285 = vdwg.mxu0
  %v1286 = vld [vmem:[%s6] sm:$0xff]
  %v1287 = vld [vmem:[%s6 + $0x8] sm:$0xff]
  %v1288 = vld [vmem:[%s6 + $0x10] sm:$0xff]
  %v1289 = vld [vmem:[%s6 + $0x18] sm:$0xff]
  %v1290 = vld [vmem:[%s6 + $0x20] sm:$0xff]
  %v1291 = vld [vmem:[%s6 + $0x28] sm:$0xff]
  %v1292 = vld [vmem:[%s6 + $0x30] sm:$0xff]
  %v1293 = vld [vmem:[%s6 + $0x38] sm:$0xff]
  %v1294 = vld [vmem:[%s7] sm:$0x3]
  %v1296 = vlaneseq
  %v1297 = vshrl.u32 %v1296, 7
  %v1298 = vsub.s32 0, %v1297
  %v1299 = vrot.slane %v1294, %v1298
  %v1300 = vlaneseq
  %v1301 = vshrl.u32 %v1300, 7
  %v1302 = vsub.s32 1, %v1301
  %v1303 = vrot.slane %v1294, %v1302
  %v1306 = vadd.f32 %v1248, %v1299
  %v1307 = vadd.f32 %v1250, %v1303
  %v1308 = vadd.f32 %v1252, %v1299
  %v1309 = vadd.f32 %v1254, %v1303
  %v1310 = vadd.f32 %v1258, %v1299
  %v1311 = vadd.f32 %v1260, %v1303
  %v1312 = vadd.f32 %v1262, %v1299
  %v1313 = vadd.f32 %v1264, %v1303
  %v1314 = vadd.f32 %v1268, %v1299
  %v1315 = vadd.f32 %v1270, %v1303
  %v1316 = vadd.f32 %v1272, %v1299
  %v1317 = vadd.f32 %v1274, %v1303
  %v1318 = vadd.f32 %v1278, %v1299
  %v1319 = vadd.f32 %v1280, %v1303
  %v1320 = vadd.f32 %v1282, %v1299
  %v1321 = vadd.f32 %v1284, %v1303
  %v1330 = vunpack.c.l.b16 %v1286
  %v1331 = vunpack.c.h.b16 %v1286
  %v1332 = vunpack.c.l.b16 %v1287
  %v1333 = vunpack.c.h.b16 %v1287
  %v1334 = vunpack.c.l.b16 %v1288
  %v1335 = vunpack.c.h.b16 %v1288
  %v1336 = vunpack.c.l.b16 %v1289
  %v1337 = vunpack.c.h.b16 %v1289
  %v1338 = vunpack.c.l.b16 %v1290
  %v1339 = vunpack.c.h.b16 %v1290
  %v1340 = vunpack.c.l.b16 %v1291
  %v1341 = vunpack.c.h.b16 %v1291
  %v1342 = vunpack.c.l.b16 %v1292
  %v1343 = vunpack.c.h.b16 %v1292
  %v1344 = vunpack.c.l.b16 %v1293
  %v1345 = vunpack.c.h.b16 %v1293
  %v1346 = vpack.c.b16 %v1332, %v1330
  %v1347 = vpack.c.b16 %v1333, %v1331
  %v1348 = vpack.c.b16 %v1336, %v1334
  %v1349 = vpack.c.b16 %v1337, %v1335
  %v1350 = vpack.c.b16 %v1340, %v1338
  %v1351 = vpack.c.b16 %v1341, %v1339
  %v1352 = vpack.c.b16 %v1344, %v1342
  %v1353 = vpack.c.b16 %v1345, %v1343
  %1362 = vmatprep.subr.bf16.mxu0 %v1347
  %1363 = vmatpush1.bf16.msra.mxu0 %v1346
  %1364 = vmatprep.subr.bf16.mxu0 %v1349
  %1365 = vmatpush1.bf16.msra.mxu0 %v1348
  %1366 = vmatprep.subr.bf16.mxu0 %v1351
  %1367 = vmatpush1.bf16.msra.mxu0 %v1350
  %1368 = vmatprep.subr.bf16.mxu0 %v1353
  %1369 = vmatpush1.bf16.msra.mxu0 %v1352
  %1370 = vmatprep.subr.bf16.mxu0 0
  %1371 = vmatpush1.bf16.msra.mxu0 0
  %1372 = vmatprep.subr.bf16.mxu0 0
  %1373 = vmatpush1.bf16.msra.mxu0 0
  %1374 = vmatprep.subr.bf16.mxu0 0
  %1375 = vmatpush1.bf16.msra.mxu0 0
  %1376 = vmatprep.subr.bf16.mxu0 0
  %1377 = vmatpush1.bf16.msra.mxu0 0
  %1378 = vmatprep.subr.bf16.mxu0 0
  %1379 = vmatpush1.bf16.msra.mxu0 0
  %1380 = vmatprep.subr.bf16.mxu0 0
  %1381 = vmatpush1.bf16.msra.mxu0 0
  %1382 = vmatprep.subr.bf16.mxu0 0
  %1383 = vmatpush1.bf16.msra.mxu0 0
  %1384 = vmatprep.subr.bf16.mxu0 0
  %1385 = vmatpush1.bf16.msra.mxu0 0
  %1386 = vmatprep.subr.bf16.mxu0 0
  %1387 = vmatpush1.bf16.msra.mxu0 0
  %1388 = vmatprep.subr.bf16.mxu0 0
  %1389 = vmatpush1.bf16.msra.mxu0 0
  %1390 = vmatprep.subr.bf16.mxu0 0
  %1391 = vmatpush1.bf16.msra.mxu0 0
  %1392 = vmatprep.subr.bf16.mxu0 0
  %1393 = vmatpush1.bf16.msra.mxu0 0
  %1394 = vmatprep.mubr.bf16.mxu0 0
  %1395 = vmatmul.mubr.bf16.gmra.mrb[0].mxu0 %v215
  %v1396 = vpop.f32.mrb[0].mxu0
  %v1397 = vadd.f32 0.0, %v1396
  %v1398 = vpop.f32.mrb[0].mxu0
  %v1399 = vadd.f32 0.0, %v1398
  %v1400 = vpop.f32.mrb[0].mxu0
  %v1401 = vpop.f32.mrb[0].mxu0
  %1402 = vdwg.mxu0
  %v1403 = vadd.f32 %v1306, %v1397
  %v1404 = vxor.u32 %v1403, 2147483648
  %v1405 = vmul.f32 %v1404, 1.442695
  %v1406 = vpow.pop %v1405
  %v1407 = vadd.f32 %v1406, 1.0
  %v1408 = vrcp.pop %v1407
  %v1409 = vmul.f32 1.0, %v1408
  %v1410 = vtanh.pop %v1403
  %v1411 = vmul.f32 %v1409, 0.0
  %1413 = vrot.lane.b32.xlu0 %v1410, 64
  %v1414 = vpop.permute.xlu0 %1413
  %v1416 = vmul.f32 %v1409, %v1414
  %1418 = vrot.lane.b32.xlu0 %v1416, 32
  %v1419 = vpop.permute.xlu0 %1418
  %v1421 = vadd.f32 %v1411, %v1419
  %v1422 = vtanh.pop %v1421
  %1424 = vrot.lane.b32.xlu0 %v1422, 64
  %v1425 = vpop.permute.xlu0 %1424
  %v1427 = vmul.f32 %v1409, %v1425
  %v1428 = vadd.f32 %v1321, %v1399
  %v1429 = vxor.u32 %v1428, 2147483648
  %v1430 = vmul.f32 %v1429, 1.442695
  %v1431 = vpow.pop %v1430
  %v1432 = vadd.f32 %v1431, 1.0
  %v1433 = vrcp.pop %v1432
  %v1434 = vmul.f32 1.0, %v1433
  %v1435 = vtanh.pop %v1428
  %v1436 = vmul.f32 %v1434, 0.0
  %1438 = vrot.lane.b32.xlu0 %v1435, 64
  %v1439 = vpop.permute.xlu0 %1438
  %v1441 = vmul.f32 %v1434, %v1439
  %1443 = vrot.lane.b32.xlu0 %v1441, 32
  %v1444 = vpop.permute.xlu0 %1443
  %v1446 = vadd.f32 %v1436, %v1444
  %v1447 = vtanh.pop %v1446
  %1449 = vrot.lane.b32.xlu0 %v1447, 64
  %v1450 = vpop.permute.xlu0 %1449
  %v1452 = vmul.f32 %v1434, %v1450
  %1454 = vrot.lane.b32.xlu0 %v1427, 32
  %v1455 = vpop.permute.xlu0 %1454
  %1458 = vrot.lane.b32.xlu0 %v1452, 64
  %v1459 = vpop.permute.xlu0 %1458
  %v1461 = vsel %vm86, %v1455, %v1459
  %v1462 = vpack.c.bf16 %v1461, %v1461
  %v1464 = vsel %vm213, %v1462, 0
  %1466 = vmatprep.subr.bf16.mxu0 %v1347
  %1467 = vmatpush1.bf16.msra.mxu0 %v1346
  %1468 = vmatprep.subr.bf16.mxu0 %v1349
  %1469 = vmatpush1.bf16.msra.mxu0 %v1348
  %1470 = vmatprep.subr.bf16.mxu0 %v1351
  %1471 = vmatpush1.bf16.msra.mxu0 %v1350
  %1472 = vmatprep.subr.bf16.mxu0 %v1353
  %1473 = vmatpush1.bf16.msra.mxu0 %v1352
  %1474 = vmatprep.subr.bf16.mxu0 0
  %1475 = vmatpush1.bf16.msra.mxu0 0
  %1476 = vmatprep.subr.bf16.mxu0 0
  %1477 = vmatpush1.bf16.msra.mxu0 0
  %1478 = vmatprep.subr.bf16.mxu0 0
  %1479 = vmatpush1.bf16.msra.mxu0 0
  %1480 = vmatprep.subr.bf16.mxu0 0
  %1481 = vmatpush1.bf16.msra.mxu0 0
  %1482 = vmatprep.subr.bf16.mxu0 0
  %1483 = vmatpush1.bf16.msra.mxu0 0
  %1484 = vmatprep.subr.bf16.mxu0 0
  %1485 = vmatpush1.bf16.msra.mxu0 0
  %1486 = vmatprep.subr.bf16.mxu0 0
  %1487 = vmatpush1.bf16.msra.mxu0 0
  %1488 = vmatprep.subr.bf16.mxu0 0
  %1489 = vmatpush1.bf16.msra.mxu0 0
  %1490 = vmatprep.subr.bf16.mxu0 0
  %1491 = vmatpush1.bf16.msra.mxu0 0
  %1492 = vmatprep.subr.bf16.mxu0 0
  %1493 = vmatpush1.bf16.msra.mxu0 0
  %1494 = vmatprep.subr.bf16.mxu0 0
  %1495 = vmatpush1.bf16.msra.mxu0 0
  %1496 = vmatprep.subr.bf16.mxu0 0
  %1497 = vmatpush1.bf16.msra.mxu0 0
  %1498 = vmatprep.mubr.bf16.mxu0 0
  %1499 = vmatmul.mubr.bf16.gmra.mrb[0].mxu0 %v1464
  %v1500 = vpop.f32.mrb[0].mxu0
  %v1501 = vadd.f32 0.0, %v1500
  %v1502 = vpop.f32.mrb[0].mxu0
  %v1503 = vadd.f32 0.0, %v1502
  %v1504 = vpop.f32.mrb[0].mxu0
  %v1505 = vpop.f32.mrb[0].mxu0
  %1506 = vdwg.mxu0
  %v1507 = vadd.f32 %v1308, %v1501
  %v1508 = vxor.u32 %v1507, 2147483648
  %v1509 = vmul.f32 %v1508, 1.442695
  %v1510 = vpow.pop %v1509
  %v1511 = vadd.f32 %v1510, 1.0
  %v1512 = vrcp.pop %v1511
  %v1513 = vmul.f32 1.0, %v1512
  %v1514 = vtanh.pop %v1507
  %v1515 = vmul.f32 %v1513, %v1421
  %1517 = vrot.lane.b32.xlu0 %v1514, 64
  %v1518 = vpop.permute.xlu0 %1517
  %v1520 = vmul.f32 %v1513, %v1518
  %1522 = vrot.lane.b32.xlu0 %v1520, 32
  %v1523 = vpop.permute.xlu0 %1522
  %v1525 = vadd.f32 %v1515, %v1523
  %v1526 = vtanh.pop %v1525
  %1528 = vrot.lane.b32.xlu0 %v1526, 64
  %v1529 = vpop.permute.xlu0 %1528
  %v1531 = vmul.f32 %v1513, %v1529
  %v1532 = vadd.f32 %v1319, %v1503
  %v1533 = vxor.u32 %v1532, 2147483648
  %v1534 = vmul.f32 %v1533, 1.442695
  %v1535 = vpow.pop %v1534
  %v1536 = vadd.f32 %v1535, 1.0
  %v1537 = vrcp.pop %v1536
  %v1538 = vmul.f32 1.0, %v1537
  %v1539 = vtanh.pop %v1532
  %v1540 = vmul.f32 %v1538, %v1446
  %1542 = vrot.lane.b32.xlu0 %v1539, 64
  %v1543 = vpop.permute.xlu0 %1542
  %v1545 = vmul.f32 %v1538, %v1543
  %1547 = vrot.lane.b32.xlu0 %v1545, 32
  %v1548 = vpop.permute.xlu0 %1547
  %v1550 = vadd.f32 %v1540, %v1548
  %v1551 = vtanh.pop %v1550
  %1553 = vrot.lane.b32.xlu0 %v1551, 64
  %v1554 = vpop.permute.xlu0 %1553
  %v1556 = vmul.f32 %v1538, %v1554
  %1558 = vrot.lane.b32.xlu0 %v1531, 32
  %v1559 = vpop.permute.xlu0 %1558
  %1562 = vrot.lane.b32.xlu0 %v1556, 64
  %v1563 = vpop.permute.xlu0 %1562
  %v1565 = vsel %vm86, %v1559, %v1563
  %v1566 = vpack.c.bf16 %v1565, %v1565
  %v1568 = vsel %vm213, %v1566, 0
  %1570 = vmatprep.subr.bf16.mxu0 %v1347
  %1571 = vmatpush1.bf16.msra.mxu0 %v1346
  %1572 = vmatprep.subr.bf16.mxu0 %v1349
  %1573 = vmatpush1.bf16.msra.mxu0 %v1348
  %1574 = vmatprep.subr.bf16.mxu0 %v1351
  %1575 = vmatpush1.bf16.msra.mxu0 %v1350
  %1576 = vmatprep.subr.bf16.mxu0 %v1353
  %1577 = vmatpush1.bf16.msra.mxu0 %v1352
  %1578 = vmatprep.subr.bf16.mxu0 0
  %1579 = vmatpush1.bf16.msra.mxu0 0
  %1580 = vmatprep.subr.bf16.mxu0 0
  %1581 = vmatpush1.bf16.msra.mxu0 0
  %1582 = vmatprep.subr.bf16.mxu0 0
  %1583 = vmatpush1.bf16.msra.mxu0 0
  %1584 = vmatprep.subr.bf16.mxu0 0
  %1585 = vmatpush1.bf16.msra.mxu0 0
  %1586 = vmatprep.subr.bf16.mxu0 0
  %1587 = vmatpush1.bf16.msra.mxu0 0
  %1588 = vmatprep.subr.bf16.mxu0 0
  %1589 = vmatpush1.bf16.msra.mxu0 0
  %1590 = vmatprep.subr.bf16.mxu0 0
  %1591 = vmatpush1.bf16.msra.mxu0 0
  %1592 = vmatprep.subr.bf16.mxu0 0
  %1593 = vmatpush1.bf16.msra.mxu0 0
  %1594 = vmatprep.subr.bf16.mxu0 0
  %1595 = vmatpush1.bf16.msra.mxu0 0
  %1596 = vmatprep.subr.bf16.mxu0 0
  %1597 = vmatpush1.bf16.msra.mxu0 0
  %1598 = vmatprep.subr.bf16.mxu0 0
  %1599 = vmatpush1.bf16.msra.mxu0 0
  %1600 = vmatprep.subr.bf16.mxu0 0
  %1601 = vmatpush1.bf16.msra.mxu0 0
  %1602 = vmatprep.mubr.bf16.mxu0 0
  %1603 = vmatmul.mubr.bf16.gmra.mrb[0].mxu0 %v1568
  %v1604 = vpop.f32.mrb[0].mxu0
  %v1605 = vadd.f32 0.0, %v1604
  %v1606 = vpop.f32.mrb[0].mxu0
  %v1607 = vadd.f32 0.0, %v1606
  %v1608 = vpop.f32.mrb[0].mxu0
  %v1609 = vpop.f32.mrb[0].mxu0
  %1610 = vdwg.mxu0
  %v1611 = vadd.f32 %v1310, %v1605
  %v1612 = vxor.u32 %v1611, 2147483648
  %v1613 = vmul.f32 %v1612, 1.442695
  %v1614 = vpow.pop %v1613
  %v1615 = vadd.f32 %v1614, 1.0
  %v1616 = vrcp.pop %v1615
  %v1617 = vmul.f32 1.0, %v1616
  %v1618 = vtanh.pop %v1611
  %v1619 = vmul.f32 %v1617, %v1525
  %1621 = vrot.lane.b32.xlu0 %v1618, 64
  %v1622 = vpop.permute.xlu0 %1621
  %v1624 = vmul.f32 %v1617, %v1622
  %1626 = vrot.lane.b32.xlu0 %v1624, 32
  %v1627 = vpop.permute.xlu0 %1626
  %v1629 = vadd.f32 %v1619, %v1627
  %v1630 = vtanh.pop %v1629
  %1632 = vrot.lane.b32.xlu0 %v1630, 64
  %v1633 = vpop.permute.xlu0 %1632
  %v1635 = vmul.f32 %v1617, %v1633
  %v1636 = vadd.f32 %v1317, %v1607
  %v1637 = vxor.u32 %v1636, 2147483648
  %v1638 = vmul.f32 %v1637, 1.442695
  %v1639 = vpow.pop %v1638
  %v1640 = vadd.f32 %v1639, 1.0
  %v1641 = vrcp.pop %v1640
  %v1642 = vmul.f32 1.0, %v1641
  %v1643 = vtanh.pop %v1636
  %v1644 = vmul.f32 %v1642, %v1550
  %1646 = vrot.lane.b32.xlu0 %v1643, 64
  %v1647 = vpop.permute.xlu0 %1646
  %v1649 = vmul.f32 %v1642, %v1647
  %1651 = vrot.lane.b32.xlu0 %v1649, 32
  %v1652 = vpop.permute.xlu0 %1651
  %v1654 = vadd.f32 %v1644, %v1652
  %v1655 = vtanh.pop %v1654
  %1657 = vrot.lane.b32.xlu0 %v1655, 64
  %v1658 = vpop.permute.xlu0 %1657
  %v1660 = vmul.f32 %v1642, %v1658
  %1662 = vrot.lane.b32.xlu0 %v1635, 32
  %v1663 = vpop.permute.xlu0 %1662
  %1666 = vrot.lane.b32.xlu0 %v1660, 64
  %v1667 = vpop.permute.xlu0 %1666
  %v1669 = vsel %vm86, %v1663, %v1667
  %v1670 = vpack.c.bf16 %v1669, %v1669
  %v1672 = vsel %vm213, %v1670, 0
  %1674 = vmatprep.subr.bf16.mxu0 %v1347
  %1675 = vmatpush1.bf16.msra.mxu0 %v1346
  %1676 = vmatprep.subr.bf16.mxu0 %v1349
  %1677 = vmatpush1.bf16.msra.mxu0 %v1348
  %1678 = vmatprep.subr.bf16.mxu0 %v1351
  %1679 = vmatpush1.bf16.msra.mxu0 %v1350
  %1680 = vmatprep.subr.bf16.mxu0 %v1353
  %1681 = vmatpush1.bf16.msra.mxu0 %v1352
  %1682 = vmatprep.subr.bf16.mxu0 0
  %1683 = vmatpush1.bf16.msra.mxu0 0
  %1684 = vmatprep.subr.bf16.mxu0 0
  %1685 = vmatpush1.bf16.msra.mxu0 0
  %1686 = vmatprep.subr.bf16.mxu0 0
  %1687 = vmatpush1.bf16.msra.mxu0 0
  %1688 = vmatprep.subr.bf16.mxu0 0
  %1689 = vmatpush1.bf16.msra.mxu0 0
  %1690 = vmatprep.subr.bf16.mxu0 0
  %1691 = vmatpush1.bf16.msra.mxu0 0
  %1692 = vmatprep.subr.bf16.mxu0 0
  %1693 = vmatpush1.bf16.msra.mxu0 0
  %1694 = vmatprep.subr.bf16.mxu0 0
  %1695 = vmatpush1.bf16.msra.mxu0 0
  %1696 = vmatprep.subr.bf16.mxu0 0
  %1697 = vmatpush1.bf16.msra.mxu0 0
  %1698 = vmatprep.subr.bf16.mxu0 0
  %1699 = vmatpush1.bf16.msra.mxu0 0
  %1700 = vmatprep.subr.bf16.mxu0 0
  %1701 = vmatpush1.bf16.msra.mxu0 0
  %1702 = vmatprep.subr.bf16.mxu0 0
  %1703 = vmatpush1.bf16.msra.mxu0 0
  %1704 = vmatprep.subr.bf16.mxu0 0
  %1705 = vmatpush1.bf16.msra.mxu0 0
  %1706 = vmatprep.mubr.bf16.mxu0 0
  %1707 = vmatmul.mubr.bf16.gmra.mrb[0].mxu0 %v1672
  %v1708 = vpop.f32.mrb[0].mxu0
  %v1709 = vadd.f32 0.0, %v1708
  %v1710 = vpop.f32.mrb[0].mxu0
  %v1711 = vadd.f32 0.0, %v1710
  %v1712 = vpop.f32.mrb[0].mxu0
  %v1713 = vpop.f32.mrb[0].mxu0
  %1714 = vdwg.mxu0
  %v1715 = vadd.f32 %v1312, %v1709
  %v1716 = vxor.u32 %v1715, 2147483648
  %v1717 = vmul.f32 %v1716, 1.442695
  %v1718 = vpow.pop %v1717
  %v1719 = vadd.f32 %v1718, 1.0
  %v1720 = vrcp.pop %v1719
  %v1721 = vmul.f32 1.0, %v1720
  %v1722 = vtanh.pop %v1715
  %v1723 = vmul.f32 %v1721, %v1629
  %1725 = vrot.lane.b32.xlu0 %v1722, 64
  %v1726 = vpop.permute.xlu0 %1725
  %v1728 = vmul.f32 %v1721, %v1726
  %1730 = vrot.lane.b32.xlu0 %v1728, 32
  %v1731 = vpop.permute.xlu0 %1730
  %v1733 = vadd.f32 %v1723, %v1731
  %v1734 = vtanh.pop %v1733
  %1736 = vrot.lane.b32.xlu0 %v1734, 64
  %v1737 = vpop.permute.xlu0 %1736
  %v1739 = vmul.f32 %v1721, %v1737
  %v1740 = vadd.f32 %v1315, %v1711
  %v1741 = vxor.u32 %v1740, 2147483648
  %v1742 = vmul.f32 %v1741, 1.442695
  %v1743 = vpow.pop %v1742
  %v1744 = vadd.f32 %v1743, 1.0
  %v1745 = vrcp.pop %v1744
  %v1746 = vmul.f32 1.0, %v1745
  %v1747 = vtanh.pop %v1740
  %v1748 = vmul.f32 %v1746, %v1654
  %1750 = vrot.lane.b32.xlu0 %v1747, 64
  %v1751 = vpop.permute.xlu0 %1750
  %v1753 = vmul.f32 %v1746, %v1751
  %1755 = vrot.lane.b32.xlu0 %v1753, 32
  %v1756 = vpop.permute.xlu0 %1755
  %v1758 = vadd.f32 %v1748, %v1756
  %v1759 = vtanh.pop %v1758
  %1761 = vrot.lane.b32.xlu0 %v1759, 64
  %v1762 = vpop.permute.xlu0 %1761
  %v1764 = vmul.f32 %v1746, %v1762
  %1766 = vrot.lane.b32.xlu0 %v1739, 32
  %v1767 = vpop.permute.xlu0 %1766
  %1770 = vrot.lane.b32.xlu0 %v1764, 64
  %v1771 = vpop.permute.xlu0 %1770
  %v1773 = vsel %vm86, %v1767, %v1771
  %v1774 = vpack.c.bf16 %v1773, %v1773
  %v1776 = vsel %vm213, %v1774, 0
  %1778 = vmatprep.subr.bf16.mxu0 %v1347
  %1779 = vmatpush1.bf16.msra.mxu0 %v1346
  %1780 = vmatprep.subr.bf16.mxu0 %v1349
  %1781 = vmatpush1.bf16.msra.mxu0 %v1348
  %1782 = vmatprep.subr.bf16.mxu0 %v1351
  %1783 = vmatpush1.bf16.msra.mxu0 %v1350
  %1784 = vmatprep.subr.bf16.mxu0 %v1353
  %1785 = vmatpush1.bf16.msra.mxu0 %v1352
  %1786 = vmatprep.subr.bf16.mxu0 0
  %1787 = vmatpush1.bf16.msra.mxu0 0
  %1788 = vmatprep.subr.bf16.mxu0 0
  %1789 = vmatpush1.bf16.msra.mxu0 0
  %1790 = vmatprep.subr.bf16.mxu0 0
  %1791 = vmatpush1.bf16.msra.mxu0 0
  %1792 = vmatprep.subr.bf16.mxu0 0
  %1793 = vmatpush1.bf16.msra.mxu0 0
  %1794 = vmatprep.subr.bf16.mxu0 0
  %1795 = vmatpush1.bf16.msra.mxu0 0
  %1796 = vmatprep.subr.bf16.mxu0 0
  %1797 = vmatpush1.bf16.msra.mxu0 0
  %1798 = vmatprep.subr.bf16.mxu0 0
  %1799 = vmatpush1.bf16.msra.mxu0 0
  %1800 = vmatprep.subr.bf16.mxu0 0
  %1801 = vmatpush1.bf16.msra.mxu0 0
  %1802 = vmatprep.subr.bf16.mxu0 0
  %1803 = vmatpush1.bf16.msra.mxu0 0
  %1804 = vmatprep.subr.bf16.mxu0 0
  %1805 = vmatpush1.bf16.msra.mxu0 0
  %1806 = vmatprep.subr.bf16.mxu0 0
  %1807 = vmatpush1.bf16.msra.mxu0 0
  %1808 = vmatprep.subr.bf16.mxu0 0
  %1809 = vmatpush1.bf16.msra.mxu0 0
  %1810 = vmatprep.mubr.bf16.mxu0 0
  %1811 = vmatmul.mubr.bf16.gmra.mrb[0].mxu0 %v1776
  %v1812 = vpop.f32.mrb[0].mxu0
  %v1813 = vadd.f32 0.0, %v1812
  %v1814 = vpop.f32.mrb[0].mxu0
  %v1815 = vadd.f32 0.0, %v1814
  %v1816 = vpop.f32.mrb[0].mxu0
  %v1817 = vpop.f32.mrb[0].mxu0
  %1818 = vdwg.mxu0
  %v1819 = vadd.f32 %v1314, %v1813
  %v1820 = vxor.u32 %v1819, 2147483648
  %v1821 = vmul.f32 %v1820, 1.442695
  %v1822 = vpow.pop %v1821
  %v1823 = vadd.f32 %v1822, 1.0
  %v1824 = vrcp.pop %v1823
  %v1825 = vmul.f32 1.0, %v1824
  %v1826 = vtanh.pop %v1819
  %v1827 = vmul.f32 %v1825, %v1733
  %1829 = vrot.lane.b32.xlu0 %v1826, 64
  %v1830 = vpop.permute.xlu0 %1829
  %v1832 = vmul.f32 %v1825, %v1830
  %1834 = vrot.lane.b32.xlu0 %v1832, 32
  %v1835 = vpop.permute.xlu0 %1834
  %v1837 = vadd.f32 %v1827, %v1835
  %v1838 = vtanh.pop %v1837
  %1840 = vrot.lane.b32.xlu0 %v1838, 64
  %v1841 = vpop.permute.xlu0 %1840
  %v1843 = vmul.f32 %v1825, %v1841
  %v1844 = vadd.f32 %v1313, %v1815
  %v1845 = vxor.u32 %v1844, 2147483648
  %v1846 = vmul.f32 %v1845, 1.442695
  %v1847 = vpow.pop %v1846
  %v1848 = vadd.f32 %v1847, 1.0
  %v1849 = vrcp.pop %v1848
  %v1850 = vmul.f32 1.0, %v1849
  %v1851 = vtanh.pop %v1844
  %v1852 = vmul.f32 %v1850, %v1758
  %1854 = vrot.lane.b32.xlu0 %v1851, 64
  %v1855 = vpop.permute.xlu0 %1854
  %v1857 = vmul.f32 %v1850, %v1855
  %1859 = vrot.lane.b32.xlu0 %v1857, 32
  %v1860 = vpop.permute.xlu0 %1859
  %v1862 = vadd.f32 %v1852, %v1860
  %v1863 = vtanh.pop %v1862
  %1865 = vrot.lane.b32.xlu0 %v1863, 64
  %v1866 = vpop.permute.xlu0 %1865
  %v1868 = vmul.f32 %v1850, %v1866
  %1870 = vrot.lane.b32.xlu0 %v1843, 32
  %v1871 = vpop.permute.xlu0 %1870
  %1874 = vrot.lane.b32.xlu0 %v1868, 64
  %v1875 = vpop.permute.xlu0 %1874
  %v1877 = vsel %vm86, %v1871, %v1875
  %v1878 = vpack.c.bf16 %v1877, %v1877
  %v1880 = vsel %vm213, %v1878, 0
  %1882 = vmatprep.subr.bf16.mxu0 %v1347
  %1883 = vmatpush1.bf16.msra.mxu0 %v1346
  %1884 = vmatprep.subr.bf16.mxu0 %v1349
  %1885 = vmatpush1.bf16.msra.mxu0 %v1348
  %1886 = vmatprep.subr.bf16.mxu0 %v1351
  %1887 = vmatpush1.bf16.msra.mxu0 %v1350
  %1888 = vmatprep.subr.bf16.mxu0 %v1353
  %1889 = vmatpush1.bf16.msra.mxu0 %v1352
  %1890 = vmatprep.subr.bf16.mxu0 0
  %1891 = vmatpush1.bf16.msra.mxu0 0
  %1892 = vmatprep.subr.bf16.mxu0 0
  %1893 = vmatpush1.bf16.msra.mxu0 0
  %1894 = vmatprep.subr.bf16.mxu0 0
  %1895 = vmatpush1.bf16.msra.mxu0 0
  %1896 = vmatprep.subr.bf16.mxu0 0
  %1897 = vmatpush1.bf16.msra.mxu0 0
  %1898 = vmatprep.subr.bf16.mxu0 0
  %1899 = vmatpush1.bf16.msra.mxu0 0
  %1900 = vmatprep.subr.bf16.mxu0 0
  %1901 = vmatpush1.bf16.msra.mxu0 0
  %1902 = vmatprep.subr.bf16.mxu0 0
  %1903 = vmatpush1.bf16.msra.mxu0 0
  %1904 = vmatprep.subr.bf16.mxu0 0
  %1905 = vmatpush1.bf16.msra.mxu0 0
  %1906 = vmatprep.subr.bf16.mxu0 0
  %1907 = vmatpush1.bf16.msra.mxu0 0
  %1908 = vmatprep.subr.bf16.mxu0 0
  %1909 = vmatpush1.bf16.msra.mxu0 0
  %1910 = vmatprep.subr.bf16.mxu0 0
  %1911 = vmatpush1.bf16.msra.mxu0 0
  %1912 = vmatprep.subr.bf16.mxu0 0
  %1913 = vmatpush1.bf16.msra.mxu0 0
  %1914 = vmatprep.mubr.bf16.mxu0 0
  %1915 = vmatmul.mubr.bf16.gmra.mrb[0].mxu0 %v1880
  %v1916 = vpop.f32.mrb[0].mxu0
  %v1917 = vadd.f32 0.0, %v1916
  %v1918 = vpop.f32.mrb[0].mxu0
  %v1919 = vadd.f32 0.0, %v1918
  %v1920 = vpop.f32.mrb[0].mxu0
  %v1921 = vpop.f32.mrb[0].mxu0
  %1922 = vdwg.mxu0
  %v1923 = vadd.f32 %v1316, %v1917
  %v1924 = vxor.u32 %v1923, 2147483648
  %v1925 = vmul.f32 %v1924, 1.442695
  %v1926 = vpow.pop %v1925
  %v1927 = vadd.f32 %v1926, 1.0
  %v1928 = vrcp.pop %v1927
  %v1929 = vmul.f32 1.0, %v1928
  %v1930 = vtanh.pop %v1923
  %v1931 = vmul.f32 %v1929, %v1837
  %1933 = vrot.lane.b32.xlu0 %v1930, 64
  %v1934 = vpop.permute.xlu0 %1933
  %v1936 = vmul.f32 %v1929, %v1934
  %1938 = vrot.lane.b32.xlu0 %v1936, 32
  %v1939 = vpop.permute.xlu0 %1938
  %v1941 = vadd.f32 %v1931, %v1939
  %v1942 = vtanh.pop %v1941
  %1944 = vrot.lane.b32.xlu0 %v1942, 64
  %v1945 = vpop.permute.xlu0 %1944
  %v1947 = vmul.f32 %v1929, %v1945
  %v1948 = vadd.f32 %v1311, %v1919
  %v1949 = vxor.u32 %v1948, 2147483648
  %v1950 = vmul.f32 %v1949, 1.442695
  %v1951 = vpow.pop %v1950
  %v1952 = vadd.f32 %v1951, 1.0
  %v1953 = vrcp.pop %v1952
  %v1954 = vmul.f32 1.0, %v1953
  %v1955 = vtanh.pop %v1948
  %v1956 = vmul.f32 %v1954, %v1862
  %1958 = vrot.lane.b32.xlu0 %v1955, 64
  %v1959 = vpop.permute.xlu0 %1958
  %v1961 = vmul.f32 %v1954, %v1959
  %1963 = vrot.lane.b32.xlu0 %v1961, 32
  %v1964 = vpop.permute.xlu0 %1963
  %v1966 = vadd.f32 %v1956, %v1964
  %v1967 = vtanh.pop %v1966
  %1969 = vrot.lane.b32.xlu0 %v1967, 64
  %v1970 = vpop.permute.xlu0 %1969
  %v1972 = vmul.f32 %v1954, %v1970
  %1974 = vrot.lane.b32.xlu0 %v1947, 32
  %v1975 = vpop.permute.xlu0 %1974
  %1978 = vrot.lane.b32.xlu0 %v1972, 64
  %v1979 = vpop.permute.xlu0 %1978
  %v1981 = vsel %vm86, %v1975, %v1979
  %v1982 = vpack.c.bf16 %v1981, %v1981
  %v1984 = vsel %vm213, %v1982, 0
  %1986 = vmatprep.subr.bf16.mxu0 %v1347
  %1987 = vmatpush1.bf16.msra.mxu0 %v1346
  %1988 = vmatprep.subr.bf16.mxu0 %v1349
  %1989 = vmatpush1.bf16.msra.mxu0 %v1348
  %1990 = vmatprep.subr.bf16.mxu0 %v1351
  %1991 = vmatpush1.bf16.msra.mxu0 %v1350
  %1992 = vmatprep.subr.bf16.mxu0 %v1353
  %1993 = vmatpush1.bf16.msra.mxu0 %v1352
  %1994 = vmatprep.subr.bf16.mxu0 0
  %1995 = vmatpush1.bf16.msra.mxu0 0
  %1996 = vmatprep.subr.bf16.mxu0 0
  %1997 = vmatpush1.bf16.msra.mxu0 0
  %1998 = vmatprep.subr.bf16.mxu0 0
  %1999 = vmatpush1.bf16.msra.mxu0 0
  %2000 = vmatprep.subr.bf16.mxu0 0
  %2001 = vmatpush1.bf16.msra.mxu0 0
  %2002 = vmatprep.subr.bf16.mxu0 0
  %2003 = vmatpush1.bf16.msra.mxu0 0
  %2004 = vmatprep.subr.bf16.mxu0 0
  %2005 = vmatpush1.bf16.msra.mxu0 0
  %2006 = vmatprep.subr.bf16.mxu0 0
  %2007 = vmatpush1.bf16.msra.mxu0 0
  %2008 = vmatprep.subr.bf16.mxu0 0
  %2009 = vmatpush1.bf16.msra.mxu0 0
  %2010 = vmatprep.subr.bf16.mxu0 0
  %2011 = vmatpush1.bf16.msra.mxu0 0
  %2012 = vmatprep.subr.bf16.mxu0 0
  %2013 = vmatpush1.bf16.msra.mxu0 0
  %2014 = vmatprep.subr.bf16.mxu0 0
  %2015 = vmatpush1.bf16.msra.mxu0 0
  %2016 = vmatprep.subr.bf16.mxu0 0
  %2017 = vmatpush1.bf16.msra.mxu0 0
  %2018 = vmatprep.mubr.bf16.mxu0 0
  %2019 = vmatmul.mubr.bf16.gmra.mrb[0].mxu0 %v1984
  %v2020 = vpop.f32.mrb[0].mxu0
  %v2021 = vadd.f32 0.0, %v2020
  %v2022 = vpop.f32.mrb[0].mxu0
  %v2023 = vadd.f32 0.0, %v2022
  %v2024 = vpop.f32.mrb[0].mxu0
  %v2025 = vpop.f32.mrb[0].mxu0
  %2026 = vdwg.mxu0
  %v2027 = vadd.f32 %v1318, %v2021
  %v2028 = vxor.u32 %v2027, 2147483648
  %v2029 = vmul.f32 %v2028, 1.442695
  %v2030 = vpow.pop %v2029
  %v2031 = vadd.f32 %v2030, 1.0
  %v2032 = vrcp.pop %v2031
  %v2033 = vmul.f32 1.0, %v2032
  %v2034 = vtanh.pop %v2027
  %v2035 = vmul.f32 %v2033, %v1941
  %2037 = vrot.lane.b32.xlu0 %v2034, 64
  %v2038 = vpop.permute.xlu0 %2037
  %v2040 = vmul.f32 %v2033, %v2038
  %2042 = vrot.lane.b32.xlu0 %v2040, 32
  %v2043 = vpop.permute.xlu0 %2042
  %v2045 = vadd.f32 %v2035, %v2043
  %v2046 = vtanh.pop %v2045
  %2048 = vrot.lane.b32.xlu0 %v2046, 64
  %v2049 = vpop.permute.xlu0 %2048
  %v2051 = vmul.f32 %v2033, %v2049
  %v2052 = vadd.f32 %v1309, %v2023
  %v2053 = vxor.u32 %v2052, 2147483648
  %v2054 = vmul.f32 %v2053, 1.442695
  %v2055 = vpow.pop %v2054
  %v2056 = vadd.f32 %v2055, 1.0
  %v2057 = vrcp.pop %v2056
  %v2058 = vmul.f32 1.0, %v2057
  %v2059 = vtanh.pop %v2052
  %v2060 = vmul.f32 %v2058, %v1966
  %2062 = vrot.lane.b32.xlu0 %v2059, 64
  %v2063 = vpop.permute.xlu0 %2062
  %v2065 = vmul.f32 %v2058, %v2063
  %2067 = vrot.lane.b32.xlu0 %v2065, 32
  %v2068 = vpop.permute.xlu0 %2067
  %v2070 = vadd.f32 %v2060, %v2068
  %v2071 = vtanh.pop %v2070
  %2073 = vrot.lane.b32.xlu0 %v2071, 64
  %v2074 = vpop.permute.xlu0 %2073
  %v2076 = vmul.f32 %v2058, %v2074
  %2078 = vrot.lane.b32.xlu0 %v2051, 32
  %v2079 = vpop.permute.xlu0 %2078
  %2082 = vrot.lane.b32.xlu0 %v2076, 64
  %v2083 = vpop.permute.xlu0 %2082
  %v2085 = vsel %vm86, %v2079, %v2083
  %v2086 = vpack.c.bf16 %v2085, %v2085
  %v2088 = vsel %vm213, %v2086, 0
  %2090 = vmatprep.subr.bf16.mxu0 %v1347
  %2091 = vmatpush1.bf16.msra.mxu0 %v1346
  %2092 = vmatprep.subr.bf16.mxu0 %v1349
  %2093 = vmatpush1.bf16.msra.mxu0 %v1348
  %2094 = vmatprep.subr.bf16.mxu0 %v1351
  %2095 = vmatpush1.bf16.msra.mxu0 %v1350
  %2096 = vmatprep.subr.bf16.mxu0 %v1353
  %2097 = vmatpush1.bf16.msra.mxu0 %v1352
  %2098 = vmatprep.subr.bf16.mxu0 0
  %2099 = vmatpush1.bf16.msra.mxu0 0
  %2100 = vmatprep.subr.bf16.mxu0 0
  %2101 = vmatpush1.bf16.msra.mxu0 0
  %2102 = vmatprep.subr.bf16.mxu0 0
  %2103 = vmatpush1.bf16.msra.mxu0 0
  %2104 = vmatprep.subr.bf16.mxu0 0
  %2105 = vmatpush1.bf16.msra.mxu0 0
  %2106 = vmatprep.subr.bf16.mxu0 0
  %2107 = vmatpush1.bf16.msra.mxu0 0
  %2108 = vmatprep.subr.bf16.mxu0 0
  %2109 = vmatpush1.bf16.msra.mxu0 0
  %2110 = vmatprep.subr.bf16.mxu0 0
  %2111 = vmatpush1.bf16.msra.mxu0 0
  %2112 = vmatprep.subr.bf16.mxu0 0
  %2113 = vmatpush1.bf16.msra.mxu0 0
  %2114 = vmatprep.subr.bf16.mxu0 0
  %2115 = vmatpush1.bf16.msra.mxu0 0
  %2116 = vmatprep.subr.bf16.mxu0 0
  %2117 = vmatpush1.bf16.msra.mxu0 0
  %2118 = vmatprep.subr.bf16.mxu0 0
  %2119 = vmatpush1.bf16.msra.mxu0 0
  %2120 = vmatprep.subr.bf16.mxu0 0
  %2121 = vmatpush1.bf16.msra.mxu0 0
  %2122 = vmatprep.mubr.bf16.mxu0 0
  %2123 = vmatmul.mubr.bf16.gmra.mrb[0].mxu0 %v2088
  %v2124 = vpop.f32.mrb[0].mxu0
  %v2125 = vadd.f32 0.0, %v2124
  %v2126 = vpop.f32.mrb[0].mxu0
  %v2127 = vadd.f32 0.0, %v2126
  %v2128 = vpop.f32.mrb[0].mxu0
  %v2129 = vpop.f32.mrb[0].mxu0
  %2130 = vdwg.mxu0
  %v2131 = vadd.f32 %v1320, %v2125
  %v2132 = vxor.u32 %v2131, 2147483648
  %v2133 = vmul.f32 %v2132, 1.442695
  %v2134 = vpow.pop %v2133
  %v2135 = vadd.f32 %v2134, 1.0
  %v2136 = vrcp.pop %v2135
  %v2137 = vmul.f32 1.0, %v2136
  %v2138 = vtanh.pop %v2131
  %v2139 = vmul.f32 %v2137, %v2045
  %2141 = vrot.lane.b32.xlu0 %v2138, 64
  %v2142 = vpop.permute.xlu0 %2141
  %v2144 = vmul.f32 %v2137, %v2142
  %2146 = vrot.lane.b32.xlu0 %v2144, 32
  %v2147 = vpop.permute.xlu0 %2146
  %v2149 = vadd.f32 %v2139, %v2147
  %v2150 = vtanh.pop %v2149
  %2152 = vrot.lane.b32.xlu0 %v2150, 64
  %v2153 = vpop.permute.xlu0 %2152
  %v2155 = vmul.f32 %v2137, %v2153
  %v2156 = vadd.f32 %v1307, %v2127
  %v2157 = vxor.u32 %v2156, 2147483648
  %v2158 = vmul.f32 %v2157, 1.442695
  %v2159 = vpow.pop %v2158
  %v2160 = vadd.f32 %v2159, 1.0
  %v2161 = vrcp.pop %v2160
  %v2162 = vmul.f32 1.0, %v2161
  %v2163 = vtanh.pop %v2156
  %v2164 = vmul.f32 %v2162, %v2070
  %2166 = vrot.lane.b32.xlu0 %v2163, 64
  %v2167 = vpop.permute.xlu0 %2166
  %v2169 = vmul.f32 %v2162, %v2167
  %2171 = vrot.lane.b32.xlu0 %v2169, 32
  %v2172 = vpop.permute.xlu0 %2171
  %v2174 = vadd.f32 %v2164, %v2172
  %v2175 = vtanh.pop %v2174
  %2177 = vrot.lane.b32.xlu0 %v2175, 64
  %v2178 = vpop.permute.xlu0 %2177
  %v2180 = vmul.f32 %v2162, %v2178
  %2182 = vrot.lane.b32.xlu0 %v2155, 32
  %v2183 = vpop.permute.xlu0 %2182
  %2186 = vrot.lane.b32.xlu0 %v2180, 64
  %v2187 = vpop.permute.xlu0 %2186
  %v2189 = vsel %vm86, %v1455, %v2187
  %v2190 = vsel %vm86, %v1559, %v2083
  %v2191 = vsel %vm86, %v1663, %v1979
  %v2192 = vsel %vm86, %v1767, %v1875
  %v2193 = vsel %vm86, %v1871, %v1771
  %v2194 = vsel %vm86, %v1975, %v1667
  %v2195 = vsel %vm86, %v2079, %v1563
  %v2196 = vsel %vm86, %v2183, %v1459
  %2197 = vst.msk [vmem:[%s8] sm:$0xff] %vm213, %v2189
  %2198 = vst.msk [vmem:[%s8 + $0x8] sm:$0xff] %vm213, %v2190
  %2199 = vst.msk [vmem:[%s8 + $0x10] sm:$0xff] %vm213, %v2191
  %2200 = vst.msk [vmem:[%s8 + $0x18] sm:$0xff] %vm213, %v2192
  %2201 = vst.msk [vmem:[%s8 + $0x20] sm:$0xff] %vm213, %v2193
  %2202 = vst.msk [vmem:[%s8 + $0x28] sm:$0xff] %vm213, %v2194
  %2203 = vst.msk [vmem:[%s8 + $0x30] sm:$0xff] %vm213, %v2195
  %2204 = vst.msk [vmem:[%s8 + $0x38] sm:$0xff] %vm213, %v2196
  // Predicated region
  $region34: #{a_call__.1} parent=0 // pred_check
    _
  $region35: #{a_call__.1} parent=0 // pred_check_branch
    %2206 = sbr.rel (0) target = $region37
  $region36: #{a_call__.1} parent=0 // pred_region
    _
  $region37: #{a_call__.1} parent=0 // pred_fallthru
    _
  // Predicated region
  $region38: #{a_call__.1} parent=0 // pred_check
    _
  $region39: #{a_call__.1} parent=0 // pred_check_branch
    %2208 = sbr.rel (0) target = $region41
  $region40: #{a_call__.1} parent=0 // pred_region
    _
  $region41: #{a_call__.1} parent=0 // pred_fallthru
    _

</llo_original>
